<compile_context>
chip_gen: v7x
topology: tpu7x:2x2x1
jax: 0.10.0
libtpu: 0.0.40
codegen_flags: <defaults>
</compile_context>

<pallas_src>
import functools

import jax
import jax.numpy as jnp
from jax.experimental import pallas as pl
from jax.experimental.pallas import tpu as pltpu

EPS = 1e-5    # nn.BatchNorm2d default eps
LANE = 128    # TPU lane width


def _round_up(x, m):
    return (x + m - 1) // m * m


# ---------------------------------------------------------------------------
# in-kernel helpers
# ---------------------------------------------------------------------------
def _im2col_3x3(h, k_pad):
    """(H, W, C) -> (H*W, k_pad) packed im2col patch for a 3x3 'same' conv.

    The spatial halo is an explicit zero border (two concats), so every tap is
    a static slice -- no roll, no iota masks.  The 9 taps are packed
    contiguously along K over the REAL channel count and zero-padded once to
    k_pad (a lane multiple).  Column order is (ky, kx, c), matching a
    (3, 3, C, Cout) weight reshaped to (9*C, Cout) and row-padded to k_pad.
    """
    H, W, C = h.shape
    dt = h.dtype
    zr = jnp.zeros((1, W, C), dt)
    hp = jnp.concatenate([zr, h, zr], axis=0)            # (H+2, W,   C)
    zc = jnp.zeros((H + 2, 1, C), dt)
    hp = jnp.concatenate([zc, hp, zc], axis=1)           # (H+2, W+2, C)

    slabs = [hp[ky:ky + H, kx:kx + W, :].reshape(H * W, C)
             for ky in (0, 1, 2) for kx in (0, 1, 2)]
    if k_pad > 9 * C:
        slabs.append(jnp.zeros((H * W, k_pad - 9 * C), dt))
    return jnp.concatenate(slabs, axis=-1)               # (H*W, k_pad)


def _channel_stats(y):
    """Per-channel BN partials: rows [sum, sum_sq, 0...] -> (8, C), f32."""
    s = jnp.sum(y, axis=0, keepdims=True)
    ss = jnp.sum(y * y, axis=0, keepdims=True)
    pad = jnp.zeros((6, y.shape[-1]), jnp.float32)
    return jnp.concatenate([s, ss, pad], axis=0)


# ---------------------------------------------------------------------------
# kernels (grid over the batch dimension; one sample per grid step)
# ---------------------------------------------------------------------------
def _conv_stats_kernel(x_ref, w_ref, y_ref, stats_ref):
    # x_ref:     (1, H, W, Cin)  bf16  unpadded NHWC image
    # w_ref:     (K1, Cpo)       bf16  packed conv1 weight (K1 = rup(9*Cin,128))
    # y_ref:     (1, H*W, Cpo)   bf16  pre-BN conv1 output (lane-dense)
    # stats_ref: (1, 8, Cpo)     f32   per-sample [sum, sum_sq] partials
    patch = _im2col_3x3(x_ref[0], w_ref.shape[0])        # (H*W, K1) bf16
    y = jnp.dot(patch, w_ref[...], preferred_element_type=jnp.float32)
    y_ref[0] = y.astype(y_ref.dtype)
    stats_ref[0] = _channel_stats(y)


def _bn_relu_conv_stats_kernel(y_in_ref, scale_ref, shift_ref, w_ref,
                               y_ref, stats_ref, *, H, W, C):
    # y_in_ref:  (1, H*W, Cpo) bf16  pre-BN conv1 output
    # scale/shift: (1, Cpo)    f32   folded BN1 (gamma, beta, mean, var)
    # w_ref:     (K2, Cpo)     bf16  packed conv2 weight (K2 = rup(9*C,128))
    # BN1 apply in f32, ReLU, then slice back to the real channel count so
    # conv2's K stays packed (9*C) instead of 9*Cpo.
    h = jnp.maximum(
        y_in_ref[0].astype(jnp.float32) * scale_ref[...] + shift_ref[...], 0.0)
    h = h[:, :C].astype(jnp.bfloat16).reshape(H, W, C)
    patch = _im2col_3x3(h, w_ref.shape[0])               # (H*W, K2) bf16
    y = jnp.dot(patch, w_ref[...], preferred_element_type=jnp.float32)
    y_ref[0] = y.astype(y_ref.dtype)
    stats_ref[0] = _channel_stats(y)


# ---------------------------------------------------------------------------
# wrapper
# ---------------------------------------------------------------------------
def _fold_bn(stats, gamma, beta, count):
    """Reduce per-sample [sum, sum_sq] partials into BN scale/shift vectors."""
    s = jnp.sum(stats[:, 0, :], axis=0)
    ss = jnp.sum(stats[:, 1, :], axis=0)
    mean = s / count
    # E[x^2]-E[x]^2 in f32; fine for fresh-init conv outputs (clamped at 0).
    var = jnp.maximum(ss / count - mean * mean, 0.0)     # biased (training)
    scale = gamma * jax.lax.rsqrt(var + EPS)
    shift = beta - mean * scale
    cp = scale.shape[0]
    return scale.reshape(1, cp), shift.reshape(1, cp)


@jax.jit
def double_conv(x_nchw, w1, g1, b1, w2, g2, b2):
    """x: (N,Cin,H,W); w1: (3,3,Cin,Cout); w2: (3,3,Cout,Cout) -> (N,Cout,H,W)."""
    N, Cin, H, W = x_nchw.shape
    Cout = w1.shape[-1]
    Cpo = _round_up(Cout, LANE)
    K1 = _round_up(9 * Cin, LANE)
    K2 = _round_up(9 * Cout, LANE)
    HW = H * W
    count = N * HW

    # ---- one-time wrapper prep: layout, weight packing (no x channel pad) --
    x = jnp.transpose(x_nchw, (0, 2, 3, 1)).astype(jnp.bfloat16)   # NHWC bf16

    def prep_w(w, ci, kpad):
        wm = jnp.pad(w, ((0, 0), (0, 0), (0, 0), (0, Cpo - Cout)))
        wm = wm.reshape(9 * ci, Cpo)                      # (ky,kx,cin) packed
        wm = jnp.pad(wm, ((0, kpad - 9 * ci), (0, 0)))
        return wm.astype(jnp.bfloat16)

    w1m = prep_w(w1, Cin, K1)
    w2m = prep_w(w2, Cout, K2)
    g1p = jnp.pad(g1.astype(jnp.float32), (0, Cpo - Cout))
    b1p = jnp.pad(b1.astype(jnp.float32), (0, Cpo - Cout))
    g2p = jnp.pad(g2.astype(jnp.float32), (0, Cpo - Cout))
    b2p = jnp.pad(b2.astype(jnp.float32), (0, Cpo - Cout))

    y_spec = pl.BlockSpec((1, HW, Cpo), lambda n: (n, 0, 0))
    stats_spec = pl.BlockSpec((1, 8, Cpo), lambda n: (n, 0, 0))
    vec_spec = pl.BlockSpec((1, Cpo), lambda n: (0, 0))
    cparams = pltpu.CompilerParams(dimension_semantics=("parallel",))

    # ---- pass 1: conv1 (one packed-K MXU matmul) + BN1 partial stats -------
    y1, st1 = pl.pallas_call(
        _conv_stats_kernel,
        grid=(N,),
        in_specs=[pl.BlockSpec((1, H, W, Cin), lambda n: (n, 0, 0, 0)),
                  pl.BlockSpec((K1, Cpo), lambda n: (0, 0))],
        out_specs=[y_spec, stats_spec],
        out_shape=(jax.ShapeDtypeStruct((N, HW, Cpo), jnp.bfloat16),
                   jax.ShapeDtypeStruct((N, 8, Cpo), jnp.float32)),
        compiler_params=cparams,
    )(x, w1m)
    scale1, shift1 = _fold_bn(st1, g1p, b1p, count)

    # ---- pass 2: BN1+ReLU apply, conv2 + BN2 partial stats -----------------
    y2, st2 = pl.pallas_call(
        functools.partial(_bn_relu_conv_stats_kernel, H=H, W=W, C=Cout),
        grid=(N,),
        in_specs=[y_spec, vec_spec, vec_spec,
                  pl.BlockSpec((K2, Cpo), lambda n: (0, 0))],
        out_specs=[y_spec, stats_spec],
        out_shape=(jax.ShapeDtypeStruct((N, HW, Cpo), jnp.bfloat16),
                   jax.ShapeDtypeStruct((N, 8, Cpo), jnp.float32)),
        compiler_params=cparams,
    )(y1, scale1, shift1, w2m)
    scale2, shift2 = _fold_bn(st2, g2p, b2p, count)

    # ---- BN2 apply + ReLU + channel slice + NCHW transpose: plain jnp so ---
    # ---- XLA fuses it into one elementwise pass (no 3rd Pallas round-trip) -
    out = jnp.maximum(y2.astype(jnp.float32) * scale2 + shift2, 0.0)
    out = out.reshape(N, H, W, Cpo)[..., :Cout]
    return jnp.transpose(out, (0, 3, 1, 2))              # back to NCHW


# ---------------------------------------------------------------------------
# plain-JAX reference matching PyTorch DoubleConv.forward (training-mode BN)
# ---------------------------------------------------------------------------
def ref_double_conv(x_nchw, w1, g1, b1, w2, g2, b2):
    def conv(x, w):
        w_oihw = jnp.transpose(w, (3, 2, 0, 1))           # (Cout, Cin, 3, 3)
        return jax.lax.conv_general_dilated(
            x, w_oihw, window_strides=(1, 1), padding=((1, 1), (1, 1)),
            dimension_numbers=("NCHW", "OIHW", "NCHW"),
            precision=jax.lax.Precision.HIGHEST)

    def bn_relu(y, g, b):
        mean = jnp.mean(y, axis=(0, 2, 3), keepdims=True)
        var = jnp.mean((y - mean) ** 2, axis=(0, 2, 3), keepdims=True)
        yhat = (y - mean) * jax.lax.rsqrt(var + EPS)
        return jnp.maximum(
            yhat * g.reshape(1, -1, 1, 1) + b.reshape(1, -1, 1, 1), 0.0)

    h = bn_relu(conv(x_nchw, w1), g1, b1)
    return bn_relu(conv(h, w2), g2, b2)


if __name__ == "__main__":
    N, Cin, Cout, H, W = 2, 4, 8, 16, 16

    key = jax.random.PRNGKey(0)
    kx, kw1, kw2 = jax.random.split(key, 3)

    x = jax.random.normal(kx, (N, Cin, H, W), jnp.float32)

    # Conv2d-like deterministic uniform init, bias=False.
    bound1 = 1.0 / (Cin * 9) ** 0.5
    w1 = jax.random.uniform(kw1, (3, 3, Cin, Cout), jnp.float32, -bound1, bound1)
    bound2 = 1.0 / (Cout * 9) ** 0.5
    w2 = jax.random.uniform(kw2, (3, 3, Cout, Cout), jnp.float32, -bound2, bound2)

    # BatchNorm2d default init: weight=1, bias=0.
    g1 = jnp.ones((Cout,), jnp.float32)
    b1 = jnp.zeros((Cout,), jnp.float32)
    g2 = jnp.ones((Cout,), jnp.float32)
    b2 = jnp.zeros((Cout,), jnp.float32)

    out = jax.block_until_ready(double_conv(x, w1, g1, b1, w2, g2, b2))
    ref = jax.block_until_ready(ref_double_conv(x, w1, g1, b1, w2, g2, b2))

    assert out.shape == (N, Cout, H, W), out.shape
    # bf16 MXU operands / bf16 intermediates (f32 accumulation + f32 BN stats)
    # vs. an f32 HIGHEST-precision reference.
    assert jnp.allclose(out, ref, atol=5e-2, rtol=5e-2), (
        "mismatch vs reference: max abs diff = "
        + str(float(jnp.max(jnp.abs(out - ref)))))
    print("KERNEL_OK")
</pallas_src>

<mosaic_0001>
module attributes {stable_mosaic.version = 11 : i64} {
  func.func @_conv_stats_kernel(%arg0: i32, %arg1: memref<1x16x16x4xbf16, #tpu.memory_space<vmem>>, %arg2: memref<128x128xbf16, #tpu.memory_space<vmem>>, %arg3: memref<1x256x128xbf16, #tpu.memory_space<vmem>>, %arg4: memref<1x8x128xf32, #tpu.memory_space<vmem>>) attributes {dimension_semantics = [#tpu.dimension_semantics<parallel>], iteration_bounds = array<i64: 2>, scalar_prefetch = 0 : i64, scratch_operands = 0 : i64, tpu.core_type = #tpu.core_type<tc>, window_params = [{transform_indices = @transform_0, window_bounds = array<i64: 1, 16, 16, 4>}, {pipeline_mode = #tpu.pipeline_mode<synchronous>, transform_indices = @transform_1, window_bounds = array<i64: 128, 128>}, {transform_indices = @transform_2, window_bounds = array<i64: 1, 256, 128>}, {transform_indices = @transform_3, window_bounds = array<i64: 1, 8, 128>}]} {
    %c0 = arith.constant 0 : index
    %c0_0 = arith.constant 0 : index
    %c0_1 = arith.constant 0 : index
    %c0_2 = arith.constant 0 : index
    %0 = vector.load %arg1[%c0, %c0_0, %c0_1, %c0_2] : memref<1x16x16x4xbf16, #tpu.memory_space<vmem>>, vector<1x16x16x4xbf16>
    %1 = vector.shape_cast %0 : vector<1x16x16x4xbf16> to vector<16x16x4xbf16>
    %cst = arith.constant 0.000000e+00 : bf16
    %2 = vector.broadcast %cst : bf16 to vector<1x16x4xbf16>
    %3 = tpu.concatenate %2, %1, %2 in 0 : vector<1x16x4xbf16>, vector<16x16x4xbf16>, vector<1x16x4xbf16> -> vector<18x16x4xbf16>
    %cst_3 = arith.constant 0.000000e+00 : bf16
    %4 = vector.broadcast %cst_3 : bf16 to vector<18x1x4xbf16>
    %5 = tpu.concatenate %4, %3, %4 in 1 : vector<18x1x4xbf16>, vector<18x16x4xbf16>, vector<18x1x4xbf16> -> vector<18x18x4xbf16>
    %6 = vector.extract_strided_slice %5 {offsets = [0, 0, 0], sizes = [16, 16, 4], strides = [1, 1, 1]} : vector<18x18x4xbf16> to vector<16x16x4xbf16>
    %7 = vector.shape_cast %6 : vector<16x16x4xbf16> to vector<256x4xbf16>
    %8 = vector.extract_strided_slice %5 {offsets = [0, 1, 0], sizes = [16, 16, 4], strides = [1, 1, 1]} : vector<18x18x4xbf16> to vector<16x16x4xbf16>
    %9 = vector.shape_cast %8 : vector<16x16x4xbf16> to vector<256x4xbf16>
    %10 = vector.extract_strided_slice %5 {offsets = [0, 2, 0], sizes = [16, 16, 4], strides = [1, 1, 1]} : vector<18x18x4xbf16> to vector<16x16x4xbf16>
    %11 = vector.shape_cast %10 : vector<16x16x4xbf16> to vector<256x4xbf16>
    %12 = vector.extract_strided_slice %5 {offsets = [1, 0, 0], sizes = [16, 16, 4], strides = [1, 1, 1]} : vector<18x18x4xbf16> to vector<16x16x4xbf16>
    %13 = vector.shape_cast %12 : vector<16x16x4xbf16> to vector<256x4xbf16>
    %14 = vector.extract_strided_slice %5 {offsets = [1, 1, 0], sizes = [16, 16, 4], strides = [1, 1, 1]} : vector<18x18x4xbf16> to vector<16x16x4xbf16>
    %15 = vector.shape_cast %14 : vector<16x16x4xbf16> to vector<256x4xbf16>
    %16 = vector.extract_strided_slice %5 {offsets = [1, 2, 0], sizes = [16, 16, 4], strides = [1, 1, 1]} : vector<18x18x4xbf16> to vector<16x16x4xbf16>
    %17 = vector.shape_cast %16 : vector<16x16x4xbf16> to vector<256x4xbf16>
    %18 = vector.extract_strided_slice %5 {offsets = [2, 0, 0], sizes = [16, 16, 4], strides = [1, 1, 1]} : vector<18x18x4xbf16> to vector<16x16x4xbf16>
    %19 = vector.shape_cast %18 : vector<16x16x4xbf16> to vector<256x4xbf16>
    %20 = vector.extract_strided_slice %5 {offsets = [2, 1, 0], sizes = [16, 16, 4], strides = [1, 1, 1]} : vector<18x18x4xbf16> to vector<16x16x4xbf16>
    %21 = vector.shape_cast %20 : vector<16x16x4xbf16> to vector<256x4xbf16>
    %22 = vector.extract_strided_slice %5 {offsets = [2, 2, 0], sizes = [16, 16, 4], strides = [1, 1, 1]} : vector<18x18x4xbf16> to vector<16x16x4xbf16>
    %23 = vector.shape_cast %22 : vector<16x16x4xbf16> to vector<256x4xbf16>
    %cst_4 = arith.constant 0.000000e+00 : bf16
    %24 = vector.broadcast %cst_4 : bf16 to vector<256x92xbf16>
    %25 = tpu.concatenate %7, %9, %11, %13, %15, %17, %19, %21, %23, %24 in 1 : vector<256x4xbf16>, vector<256x4xbf16>, vector<256x4xbf16>, vector<256x4xbf16>, vector<256x4xbf16>, vector<256x4xbf16>, vector<256x4xbf16>, vector<256x4xbf16>, vector<256x4xbf16>, vector<256x92xbf16> -> vector<256x128xbf16>
    %c0_5 = arith.constant 0 : index
    %c0_6 = arith.constant 0 : index
    %26 = vector.load %arg2[%c0_5, %c0_6] : memref<128x128xbf16, #tpu.memory_space<vmem>>, vector<128x128xbf16>
    %cst_7 = arith.constant dense<0.000000e+00> : vector<256x128xf32>
    %27 = tpu.matmul %25, %26, %cst_7 {dimension_numbers = #tpu.dot_dimension_numbers<[1], [0], [0], [1], [0, 0, 1, 1], [], []>} : vector<256x128xbf16>, vector<128x128xbf16>, vector<256x128xf32> -> vector<256x128xf32>
    %28 = arith.truncf %27 : vector<256x128xf32> to vector<256x128xbf16>
    %c0_8 = arith.constant 0 : index
    %c0_9 = arith.constant 0 : index
    %c0_10 = arith.constant 0 : index
    %29 = vector.load %arg3[%c0_8, %c0_9, %c0_10] : memref<1x256x128xbf16, #tpu.memory_space<vmem>>, vector<1x256x128xbf16>
    %30 = vector.shape_cast %29 : vector<1x256x128xbf16> to vector<256x128xbf16>
    %31 = vector.shape_cast %28 : vector<256x128xbf16> to vector<1x256x128xbf16>
    tpu.vector_store %arg3[%c0_8, %c0_9, %c0_10], %31 {strides = array<i32>} : memref<1x256x128xbf16, #tpu.memory_space<vmem>>, vector<1x256x128xbf16>,
    %cst_11 = arith.constant dense<0.000000e+00> : vector<128xf32>
    %32 = vector.multi_reduction <add>, %27, %cst_11 [0] : vector<256x128xf32> to vector<128xf32>
    %33 = vector.shape_cast %32 : vector<128xf32> to vector<1x128xf32>
    %34 = arith.mulf %27, %27 : vector<256x128xf32>
    %cst_12 = arith.constant dense<0.000000e+00> : vector<128xf32>
    %35 = vector.multi_reduction <add>, %34, %cst_12 [0] : vector<256x128xf32> to vector<128xf32>
    %36 = vector.shape_cast %35 : vector<128xf32> to vector<1x128xf32>
    %cst_13 = arith.constant 0.000000e+00 : f32
    %37 = vector.broadcast %cst_13 : f32 to vector<6x128xf32>
    %38 = tpu.concatenate %33, %36, %37 in 0 : vector<1x128xf32>, vector<1x128xf32>, vector<6x128xf32> -> vector<8x128xf32>
    %c0_14 = arith.constant 0 : index
    %c0_15 = arith.constant 0 : index
    %c0_16 = arith.constant 0 : index
    %39 = vector.load %arg4[%c0_14, %c0_15, %c0_16] : memref<1x8x128xf32, #tpu.memory_space<vmem>>, vector<1x8x128xf32>
    %40 = vector.shape_cast %39 : vector<1x8x128xf32> to vector<8x128xf32>
    %41 = vector.shape_cast %38 : vector<8x128xf32> to vector<1x8x128xf32>
    tpu.vector_store %arg4[%c0_14, %c0_15, %c0_16], %41 {strides = array<i32>} : memref<1x8x128xf32, #tpu.memory_space<vmem>>, vector<1x8x128xf32>,
    return
  }
  func.func @transform_0(%arg0: i32) -> (i32, i32, i32, i32) {
    %c0_i32 = arith.constant 0 : i32
    %c0_i32_0 = arith.constant 0 : i32
    %c0_i32_1 = arith.constant 0 : i32
    %c0_i32_2 = arith.constant 0 : i32
    return %arg0, %c0_i32, %c0_i32_0, %c0_i32_1 : i32, i32, i32, i32
  }
  func.func @transform_1(%arg0: i32) -> (i32, i32) {
    %c0_i32 = arith.constant 0 : i32
    %c0_i32_0 = arith.constant 0 : i32
    %c0_i32_1 = arith.constant 0 : i32
    return %c0_i32, %c0_i32_0 : i32, i32
  }
  func.func @transform_2(%arg0: i32) -> (i32, i32, i32) {
    %c0_i32 = arith.constant 0 : i32
    %c0_i32_0 = arith.constant 0 : i32
    %c0_i32_1 = arith.constant 0 : i32
    return %arg0, %c0_i32, %c0_i32_0 : i32, i32, i32
  }
  func.func @transform_3(%arg0: i32) -> (i32, i32, i32) {
    %c0_i32 = arith.constant 0 : i32
    %c0_i32_0 = arith.constant 0 : i32
    %c0_i32_1 = arith.constant 0 : i32
    return %arg0, %c0_i32, %c0_i32_0 : i32, i32, i32
  }
}

module attributes {stable_mosaic.version = 11 : i64} {
  func.func @_bn_relu_conv_stats_kernel(%arg0: i32, %arg1: memref<1x256x128xbf16, #tpu.memory_space<vmem>>, %arg2: memref<1x128xf32, #tpu.memory_space<vmem>>, %arg3: memref<1x128xf32, #tpu.memory_space<vmem>>, %arg4: memref<128x128xbf16, #tpu.memory_space<vmem>>, %arg5: memref<1x256x128xbf16, #tpu.memory_space<vmem>>, %arg6: memref<1x8x128xf32, #tpu.memory_space<vmem>>) attributes {dimension_semantics = [#tpu.dimension_semantics<parallel>], iteration_bounds = array<i64: 2>, scalar_prefetch = 0 : i64, scratch_operands = 0 : i64, tpu.core_type = #tpu.core_type<tc>, window_params = [{transform_indices = @transform_0, window_bounds = array<i64: 1, 256, 128>}, {pipeline_mode = #tpu.pipeline_mode<synchronous>, transform_indices = @transform_1, window_bounds = array<i64: 1, 128>}, {pipeline_mode = #tpu.pipeline_mode<synchronous>, transform_indices = @transform_2, window_bounds = array<i64: 1, 128>}, {pipeline_mode = #tpu.pipeline_mode<synchronous>, transform_indices = @transform_3, window_bounds = array<i64: 128, 128>}, {transform_indices = @transform_4, window_bounds = array<i64: 1, 256, 128>}, {transform_indices = @transform_5, window_bounds = array<i64: 1, 8, 128>}]} {
    %c0 = arith.constant 0 : index
    %c0_0 = arith.constant 0 : index
    %c0_1 = arith.constant 0 : index
    %0 = vector.load %arg1[%c0, %c0_0, %c0_1] : memref<1x256x128xbf16, #tpu.memory_space<vmem>>, vector<1x256x128xbf16>
    %1 = vector.shape_cast %0 : vector<1x256x128xbf16> to vector<256x128xbf16>
    %2 = arith.extf %1 : vector<256x128xbf16> to vector<256x128xf32>
    %c0_2 = arith.constant 0 : index
    %c0_3 = arith.constant 0 : index
    %3 = vector.load %arg2[%c0_2, %c0_3] : memref<1x128xf32, #tpu.memory_space<vmem>>, vector<1x128xf32>
    %4 = vector.broadcast %3 : vector<1x128xf32> to vector<256x128xf32>
    %5 = arith.mulf %2, %4 : vector<256x128xf32>
    %c0_4 = arith.constant 0 : index
    %c0_5 = arith.constant 0 : index
    %6 = vector.load %arg3[%c0_4, %c0_5] : memref<1x128xf32, #tpu.memory_space<vmem>>, vector<1x128xf32>
    %7 = vector.broadcast %6 : vector<1x128xf32> to vector<256x128xf32>
    %8 = arith.addf %5, %7 : vector<256x128xf32>
    %cst = arith.constant 0.000000e+00 : f32
    %9 = vector.broadcast %cst : f32 to vector<256x128xf32>
    %10 = arith.maximumf %8, %9 : vector<256x128xf32>
    %11 = vector.extract_strided_slice %10 {offsets = [0, 0], sizes = [256, 8], strides = [1, 1]} : vector<256x128xf32> to vector<256x8xf32>
    %12 = arith.truncf %11 : vector<256x8xf32> to vector<256x8xbf16>
    %13 = vector.shape_cast %12 : vector<256x8xbf16> to vector<16x16x8xbf16>
    %cst_6 = arith.constant 0.000000e+00 : bf16
    %14 = vector.broadcast %cst_6 : bf16 to vector<1x16x8xbf16>
    %15 = tpu.concatenate %14, %13, %14 in 0 : vector<1x16x8xbf16>, vector<16x16x8xbf16>, vector<1x16x8xbf16> -> vector<18x16x8xbf16>
    %cst_7 = arith.constant 0.000000e+00 : bf16
    %16 = vector.broadcast %cst_7 : bf16 to vector<18x1x8xbf16>
    %17 = tpu.concatenate %16, %15, %16 in 1 : vector<18x1x8xbf16>, vector<18x16x8xbf16>, vector<18x1x8xbf16> -> vector<18x18x8xbf16>
    %18 = vector.extract_strided_slice %17 {offsets = [0, 0, 0], sizes = [16, 16, 8], strides = [1, 1, 1]} : vector<18x18x8xbf16> to vector<16x16x8xbf16>
    %19 = vector.shape_cast %18 : vector<16x16x8xbf16> to vector<256x8xbf16>
    %20 = vector.extract_strided_slice %17 {offsets = [0, 1, 0], sizes = [16, 16, 8], strides = [1, 1, 1]} : vector<18x18x8xbf16> to vector<16x16x8xbf16>
    %21 = vector.shape_cast %20 : vector<16x16x8xbf16> to vector<256x8xbf16>
    %22 = vector.extract_strided_slice %17 {offsets = [0, 2, 0], sizes = [16, 16, 8], strides = [1, 1, 1]} : vector<18x18x8xbf16> to vector<16x16x8xbf16>
    %23 = vector.shape_cast %22 : vector<16x16x8xbf16> to vector<256x8xbf16>
    %24 = vector.extract_strided_slice %17 {offsets = [1, 0, 0], sizes = [16, 16, 8], strides = [1, 1, 1]} : vector<18x18x8xbf16> to vector<16x16x8xbf16>
    %25 = vector.shape_cast %24 : vector<16x16x8xbf16> to vector<256x8xbf16>
    %26 = vector.extract_strided_slice %17 {offsets = [1, 1, 0], sizes = [16, 16, 8], strides = [1, 1, 1]} : vector<18x18x8xbf16> to vector<16x16x8xbf16>
    %27 = vector.shape_cast %26 : vector<16x16x8xbf16> to vector<256x8xbf16>
    %28 = vector.extract_strided_slice %17 {offsets = [1, 2, 0], sizes = [16, 16, 8], strides = [1, 1, 1]} : vector<18x18x8xbf16> to vector<16x16x8xbf16>
    %29 = vector.shape_cast %28 : vector<16x16x8xbf16> to vector<256x8xbf16>
    %30 = vector.extract_strided_slice %17 {offsets = [2, 0, 0], sizes = [16, 16, 8], strides = [1, 1, 1]} : vector<18x18x8xbf16> to vector<16x16x8xbf16>
    %31 = vector.shape_cast %30 : vector<16x16x8xbf16> to vector<256x8xbf16>
    %32 = vector.extract_strided_slice %17 {offsets = [2, 1, 0], sizes = [16, 16, 8], strides = [1, 1, 1]} : vector<18x18x8xbf16> to vector<16x16x8xbf16>
    %33 = vector.shape_cast %32 : vector<16x16x8xbf16> to vector<256x8xbf16>
    %34 = vector.extract_strided_slice %17 {offsets = [2, 2, 0], sizes = [16, 16, 8], strides = [1, 1, 1]} : vector<18x18x8xbf16> to vector<16x16x8xbf16>
    %35 = vector.shape_cast %34 : vector<16x16x8xbf16> to vector<256x8xbf16>
    %cst_8 = arith.constant 0.000000e+00 : bf16
    %36 = vector.broadcast %cst_8 : bf16 to vector<256x56xbf16>
    %37 = tpu.concatenate %19, %21, %23, %25, %27, %29, %31, %33, %35, %36 in 1 : vector<256x8xbf16>, vector<256x8xbf16>, vector<256x8xbf16>, vector<256x8xbf16>, vector<256x8xbf16>, vector<256x8xbf16>, vector<256x8xbf16>, vector<256x8xbf16>, vector<256x8xbf16>, vector<256x56xbf16> -> vector<256x128xbf16>
    %c0_9 = arith.constant 0 : index
    %c0_10 = arith.constant 0 : index
    %38 = vector.load %arg4[%c0_9, %c0_10] : memref<128x128xbf16, #tpu.memory_space<vmem>>, vector<128x128xbf16>
    %cst_11 = arith.constant dense<0.000000e+00> : vector<256x128xf32>
    %39 = tpu.matmul %37, %38, %cst_11 {dimension_numbers = #tpu.dot_dimension_numbers<[1], [0], [0], [1], [0, 0, 1, 1], [], []>} : vector<256x128xbf16>, vector<128x128xbf16>, vector<256x128xf32> -> vector<256x128xf32>
    %40 = arith.truncf %39 : vector<256x128xf32> to vector<256x128xbf16>
    %c0_12 = arith.constant 0 : index
    %c0_13 = arith.constant 0 : index
    %c0_14 = arith.constant 0 : index
    %41 = vector.load %arg5[%c0_12, %c0_13, %c0_14] : memref<1x256x128xbf16, #tpu.memory_space<vmem>>, vector<1x256x128xbf16>
    %42 = vector.shape_cast %41 : vector<1x256x128xbf16> to vector<256x128xbf16>
    %43 = vector.shape_cast %40 : vector<256x128xbf16> to vector<1x256x128xbf16>
    tpu.vector_store %arg5[%c0_12, %c0_13, %c0_14], %43 {strides = array<i32>} : memref<1x256x128xbf16, #tpu.memory_space<vmem>>, vector<1x256x128xbf16>,
    %cst_15 = arith.constant dense<0.000000e+00> : vector<128xf32>
    %44 = vector.multi_reduction <add>, %39, %cst_15 [0] : vector<256x128xf32> to vector<128xf32>
    %45 = vector.shape_cast %44 : vector<128xf32> to vector<1x128xf32>
    %46 = arith.mulf %39, %39 : vector<256x128xf32>
    %cst_16 = arith.constant dense<0.000000e+00> : vector<128xf32>
    %47 = vector.multi_reduction <add>, %46, %cst_16 [0] : vector<256x128xf32> to vector<128xf32>
    %48 = vector.shape_cast %47 : vector<128xf32> to vector<1x128xf32>
    %cst_17 = arith.constant 0.000000e+00 : f32
    %49 = vector.broadcast %cst_17 : f32 to vector<6x128xf32>
    %50 = tpu.concatenate %45, %48, %49 in 0 : vector<1x128xf32>, vector<1x128xf32>, vector<6x128xf32> -> vector<8x128xf32>
    %c0_18 = arith.constant 0 : index
    %c0_19 = arith.constant 0 : index
    %c0_20 = arith.constant 0 : index
    %51 = vector.load %arg6[%c0_18, %c0_19, %c0_20] : memref<1x8x128xf32, #tpu.memory_space<vmem>>, vector<1x8x128xf32>
    %52 = vector.shape_cast %51 : vector<1x8x128xf32> to vector<8x128xf32>
    %53 = vector.shape_cast %50 : vector<8x128xf32> to vector<1x8x128xf32>
    tpu.vector_store %arg6[%c0_18, %c0_19, %c0_20], %53 {strides = array<i32>} : memref<1x8x128xf32, #tpu.memory_space<vmem>>, vector<1x8x128xf32>,
    return
  }
  func.func @transform_0(%arg0: i32) -> (i32, i32, i32) {
    %c0_i32 = arith.constant 0 : i32
    %c0_i32_0 = arith.constant 0 : i32
    %c0_i32_1 = arith.constant 0 : i32
    return %arg0, %c0_i32, %c0_i32_0 : i32, i32, i32
  }
  func.func @transform_1(%arg0: i32) -> (i32, i32) {
    %c0_i32 = arith.constant 0 : i32
    %c0_i32_0 = arith.constant 0 : i32
    %c0_i32_1 = arith.constant 0 : i32
    return %c0_i32, %c0_i32_0 : i32, i32
  }
  func.func @transform_2(%arg0: i32) -> (i32, i32) {
    %c0_i32 = arith.constant 0 : i32
    %c0_i32_0 = arith.constant 0 : i32
    %c0_i32_1 = arith.constant 0 : i32
    return %c0_i32, %c0_i32_0 : i32, i32
  }
  func.func @transform_3(%arg0: i32) -> (i32, i32) {
    %c0_i32 = arith.constant 0 : i32
    %c0_i32_0 = arith.constant 0 : i32
    %c0_i32_1 = arith.constant 0 : i32
    return %c0_i32, %c0_i32_0 : i32, i32
  }
  func.func @transform_4(%arg0: i32) -> (i32, i32, i32) {
    %c0_i32 = arith.constant 0 : i32
    %c0_i32_0 = arith.constant 0 : i32
    %c0_i32_1 = arith.constant 0 : i32
    return %arg0, %c0_i32, %c0_i32_0 : i32, i32, i32
  }
  func.func @transform_5(%arg0: i32) -> (i32, i32, i32) {
    %c0_i32 = arith.constant 0 : i32
    %c0_i32_0 = arith.constant 0 : i32
    %c0_i32_1 = arith.constant 0 : i32
    return %arg0, %c0_i32, %c0_i32_0 : i32, i32, i32
  }
}

</mosaic_0001>

<llo_original>
// kernel: double_conv.2
$region0: #{double_conv.2}
  #allocation0 [shape = 'u32[]', space=smem, size = 0x4, offset = 0x4, fixed_abs, tag = 'smem constant byte address 0x4 - core index']
  #allocation1 [shape = 'u32[144,128]{1,0:T(1,128)}', space=vmem, size = 0x12000, scoped, tag = 'internal scratch']
  %s0 = inlined_call_operand.vmem [shape: bf16[2,16,16,4], index: 0, kind: input, shape index: {}]
  %s1 = inlined_call_operand.vmem [shape: bf16[128,128], index: 1, kind: input, shape index: {}]
  %s2 = inlined_call_operand.vmem [shape: bf16[2,256,128], index: 2, kind: output, shape index: {0}]
  %s3 = inlined_call_operand.vmem [shape: f32[2,8,128], index: 3, kind: output, shape index: {1}]
  %4 = xla_tuple %s2, %s3
  %s5 = sld [smem:[#allocation0]]
  $region49: #{double_conv.2} parent=0
    _
  %s7 = ssub.s32 1, %s5
  %s8 = scalar_select 0, %s7, %s5
  loop: start=0, step=1, limit=4
  $region2: #{double_conv.2} parent=0 // loop_pre_header
    _
  $region3: #{double_conv.2} parent=0 // loop_header
    %s10 = sphi 0, %s14
    %p11 = scmp.ge.s32.totalorder %s10, 4
    %s20 = sphi 0, %s22
    %s23 = sphi 0, %s20
    %s24 = sphi 0, %s23
    %s40 = sphi 0, %s24
    %s44 = sphi 0, %s44
    %s46 = sphi 0, %s44
    %s47 = sphi 0, %s46
    %s61 = sphi 0, %s47
    %s67 = sphi 0, %s69
    %s70 = sphi 0, %s67
    %s71 = sphi 0, %s70
    %s87 = sphi 0, %s71
    %s93 = sphi 0, %s95
    %s96 = sphi 0, %s93
    %s97 = sphi 0, %s96
    %s113 = sphi 0, %s97
  $region4: #{double_conv.2} parent=0 // loop_header_branch
    %13 = sbr.rel (%p11) target = $region8
  $region5: #{double_conv.2} parent=0 // loop_body
    %s15 = ssub.s32 %s10, 1
    %s16 = ssub.s32 %s10, 2
    %s17 = sadd.s32 %s10, 1
    %s18 = ssub.s32 %s10, %s17
    %p19 = scmp.eq.s32.totalorder %s18, 0
    %s21 = sadd.s32 %s20, 1
    %s22 = scalar_select %p19, %s20, %s21
    %p25 = pneg %p19
    %p26 = scmp.eq.s32.totalorder %s10, 1
    %p27 = por %p25, %p26
    %p28 = scmp.ne.s32.totalorder %s20, %s23
    %p29 = scmp.eq.s32.totalorder %s10, 0
    %p30 = por %p28, %p29
    %p31 = scmp.ne.s32.totalorder %s20, %s23
    %p32 = scmp.eq.s32.totalorder %s15, 1
    %p33 = por %p31, %p32
    %p34 = scmp.ne.s32.totalorder %s23, %s24
    %p35 = scmp.eq.s32.totalorder %s15, 0
    %p36 = por %p34, %p35
    %p37 = scmp.ne.s32.totalorder %s23, %s24
    %p38 = scmp.eq.s32.totalorder %s16, 1
    %p39 = por %p37, %p38
    %p41 = scmp.ne.s32.totalorder %s24, %s40
    %p42 = scmp.eq.s32.totalorder %s16, 0
    %p43 = por %p41, %p42
    %s45 = sadd.s32 %s44, 1
    %p48 = scmp.eq.s32.totalorder %s10, 1
    %p49 = scmp.ne.s32.totalorder %s44, %s46
    %p50 = scmp.eq.s32.totalorder %s10, 0
    %p51 = por %p49, %p50
    %p52 = scmp.ne.s32.totalorder %s44, %s46
    %p53 = scmp.eq.s32.totalorder %s15, 1
    %p54 = por %p52, %p53
    %p55 = scmp.ne.s32.totalorder %s46, %s47
    %p56 = scmp.eq.s32.totalorder %s15, 0
    %p57 = por %p55, %p56
    %p58 = scmp.ne.s32.totalorder %s46, %s47
    %p59 = scmp.eq.s32.totalorder %s16, 1
    %p60 = por %p58, %p59
    %p62 = scmp.ne.s32.totalorder %s47, %s61
    %p63 = scmp.eq.s32.totalorder %s16, 0
    %p64 = por %p62, %p63
    %s65 = ssub.s32 %s10, %s17
    %p66 = scmp.eq.s32.totalorder %s65, 0
    %s68 = sadd.s32 %s67, 1
    %s69 = scalar_select %p66, %s67, %s68
    %p72 = pneg %p66
    %p73 = scmp.eq.s32.totalorder %s10, 1
    %p74 = por %p72, %p73
    %p75 = scmp.ne.s32.totalorder %s67, %s70
    %p76 = scmp.eq.s32.totalorder %s10, 0
    %p77 = por %p75, %p76
    %p78 = scmp.ne.s32.totalorder %s67, %s70
    %p79 = scmp.eq.s32.totalorder %s15, 1
    %p80 = por %p78, %p79
    %p81 = scmp.ne.s32.totalorder %s70, %s71
    %p82 = scmp.eq.s32.totalorder %s15, 0
    %p83 = por %p81, %p82
    %p84 = scmp.ne.s32.totalorder %s70, %s71
    %p85 = scmp.eq.s32.totalorder %s16, 1
    %p86 = por %p84, %p85
    %p88 = scmp.ne.s32.totalorder %s71, %s87
    %p89 = scmp.eq.s32.totalorder %s16, 0
    %p90 = por %p88, %p89
    %s91 = ssub.s32 %s10, %s17
    %p92 = scmp.eq.s32.totalorder %s91, 0
    %s94 = sadd.s32 %s93, 1
    %s95 = scalar_select %p92, %s93, %s94
    %p98 = pneg %p92
    %p99 = scmp.eq.s32.totalorder %s10, 1
    %p100 = por %p98, %p99
    %p101 = scmp.ne.s32.totalorder %s93, %s96
    %p102 = scmp.eq.s32.totalorder %s10, 0
    %p103 = por %p101, %p102
    %p104 = scmp.ne.s32.totalorder %s93, %s96
    %p105 = scmp.eq.s32.totalorder %s15, 1
    %p106 = por %p104, %p105
    %p107 = scmp.ne.s32.totalorder %s96, %s97
    %p108 = scmp.eq.s32.totalorder %s15, 0
    %p109 = por %p107, %p108
    %p110 = scmp.ne.s32.totalorder %s96, %s97
    %p111 = scmp.eq.s32.totalorder %s16, 1
    %p112 = por %p110, %p111
    %p114 = scmp.ne.s32.totalorder %s97, %s113
    %p115 = scmp.eq.s32.totalorder %s16, 0
    %p116 = por %p114, %p115
    %p117 = scmp.le.s32.totalorder 1, %s10
    %p118 = scmp.lt.s32.totalorder %s10, 3
    %p119 = pnand %p117, %p118
    %p120 = pneg %p119
    // Predicated region
    $region9: #{double_conv.2} parent=5 // pred_check
      _
    $region10: #{double_conv.2} parent=5 // pred_check_branch
      %122 = sbr.rel (%p119) target = $region12
    $region11: #{double_conv.2} parent=5 // pred_region
      %s123 = ssub.s32 %s10, 1
      // Predicated region
      $region13: #{double_conv.2} parent=11 // pred_check
        %p124 = pneg %p57
      $region14: #{double_conv.2} parent=11 // pred_check_branch
        %126 = sbr.rel (%p124) target = $region16
      $region15: #{double_conv.2} parent=11 // pred_region
        _
      $region16: #{double_conv.2} parent=11 // pred_fallthru
        _
    $region12: #{double_conv.2} parent=5 // pred_fallthru
      _
    %p127 = scmp.lt.s32.totalorder %s10, 2
    // Predicated region
    $region17: #{double_conv.2} parent=5 // pred_check
      %p128 = pneg %p127
    $region18: #{double_conv.2} parent=5 // pred_check_branch
      %130 = sbr.rel (%p128) target = $region20
    $region19: #{double_conv.2} parent=5 // pred_region
      // Predicated region
      $region21: #{double_conv.2} parent=19 // pred_check
        %p131 = pneg %p30
      $region22: #{double_conv.2} parent=19 // pred_check_branch
        %133 = sbr.rel (%p131) target = $region24
      $region23: #{double_conv.2} parent=19 // pred_region
        %p134 = scmp.lt.s32.totalorder %s10, 1
        %s135 = scalar_select %p134, %s10, 1
        %s136 = smul.addr %s135, 32
        %s137 = smul.addr %s136, 4
        %s138 = scalar_lea.vmem %s0, %s137
      $region24: #{double_conv.2} parent=19 // pred_fallthru
        _
    $region20: #{double_conv.2} parent=5 // pred_fallthru
      _
    %p139 = scmp.le.s32.totalorder 1, %s10
    %p140 = scmp.lt.s32.totalorder %s10, 3
    %p141 = pnand %p139, %p140
    %p142 = pneg %p141
    // Predicated region
    $region25: #{double_conv.2} parent=5 // pred_check
      _
    $region26: #{double_conv.2} parent=5 // pred_check_branch
      %144 = sbr.rel (%p141) target = $region28
    $region27: #{double_conv.2} parent=5 // pred_region
      %s145 = ssub.s32 %s10, 1
      %p146 = scmp.lt.s32.totalorder %s15, 1
      %s147 = scalar_select %p146, %s15, 1
      %s148 = smul.addr %s147, 32
      %s149 = smul.addr %s148, 4
      %s150 = scalar_lea.vmem %s0, %s149
      %p151 = pneg %p36
      %p152 = pneg %p33
      %p153 = pneg %p57
      %p154 = pneg %p54
      %p155 = pneg %p83
      %p156 = pneg %p80
      %p157 = scmp.lt.s32.totalorder %s15, 1
      %s158 = scalar_select %p157, %s15, 1
      %s159 = smul.addr %s158, 32
      %s160 = smul.addr %s159, 4
      %s161 = scalar_lea.vmem %s2, %s160
      %p162 = pneg %p109
      %p163 = pneg %p106
      %p164 = scmp.lt.s32.totalorder %s15, 1
      %s165 = scalar_select %p164, %s15, 1
      %s166 = smul.addr %s165, 8
      %s167 = scalar_lea.vmem %s3, %s166
      %p168 = scmp.lt.s32.totalorder %s15, 1
      %s169 = scalar_select %p168, %s15, 1
      %s170 = smul.addr %s169, 32
      %s171 = smul.addr %s170, 4
      %s172 = scalar_lea.vmem %s0, %s171
      %p173 = scmp.lt.s32.totalorder %s15, 1
      %s174 = scalar_select %p173, %s15, 1
      %s175 = smul.addr %s174, 32
      %s176 = smul.addr %s175, 4
      %s177 = scalar_lea.vmem %s2, %s176
      %p178 = scmp.lt.s32.totalorder %s15, 1
      %s179 = scalar_select %p178, %s15, 1
      %s180 = smul.addr %s179, 8
      %s181 = scalar_lea.vmem %s3, %s180
      %v183 = vld [vmem:[%s172] sm:$0xf]
      %v184 = vld [vmem:[%s172 + $0x4] sm:$0xf]
      %v185 = vld [vmem:[%s172 + $0x8] sm:$0xf]
      %v186 = vld [vmem:[%s172 + $0xc] sm:$0xf]
      %v187 = vld [vmem:[%s172 + $0x10] sm:$0xf]
      %v188 = vld [vmem:[%s172 + $0x14] sm:$0xf]
      %v189 = vld [vmem:[%s172 + $0x18] sm:$0xf]
      %v190 = vld [vmem:[%s172 + $0x1c] sm:$0xf]
      %v191 = vld [vmem:[%s172 + $0x20] sm:$0xf]
      %v192 = vld [vmem:[%s172 + $0x24] sm:$0xf]
      %v193 = vld [vmem:[%s172 + $0x28] sm:$0xf]
      %v194 = vld [vmem:[%s172 + $0x2c] sm:$0xf]
      %v195 = vld [vmem:[%s172 + $0x30] sm:$0xf]
      %v196 = vld [vmem:[%s172 + $0x34] sm:$0xf]
      %v197 = vld [vmem:[%s172 + $0x38] sm:$0xf]
      %v198 = vld [vmem:[%s172 + $0x3c] sm:$0xf]
      %v199 = vld [vmem:[%s172 + $0x40] sm:$0xf]
      %v200 = vld [vmem:[%s172 + $0x44] sm:$0xf]
      %v201 = vld [vmem:[%s172 + $0x48] sm:$0xf]
      %v202 = vld [vmem:[%s172 + $0x4c] sm:$0xf]
      %v203 = vld [vmem:[%s172 + $0x50] sm:$0xf]
      %v204 = vld [vmem:[%s172 + $0x54] sm:$0xf]
      %v205 = vld [vmem:[%s172 + $0x58] sm:$0xf]
      %v206 = vld [vmem:[%s172 + $0x5c] sm:$0xf]
      %v207 = vld [vmem:[%s172 + $0x60] sm:$0xf]
      %v208 = vld [vmem:[%s172 + $0x64] sm:$0xf]
      %v209 = vld [vmem:[%s172 + $0x68] sm:$0xf]
      %v210 = vld [vmem:[%s172 + $0x6c] sm:$0xf]
      %v211 = vld [vmem:[%s172 + $0x70] sm:$0xf]
      %v212 = vld [vmem:[%s172 + $0x74] sm:$0xf]
      %v213 = vld [vmem:[%s172 + $0x78] sm:$0xf]
      %v214 = vld [vmem:[%s172 + $0x7c] sm:$0xf]
      %v247 = vunpack.c.l.b16 %v183
      %v248 = vunpack.c.l.b16 %v184
      %v249 = vunpack.c.l.b16 %v185
      %v250 = vunpack.c.l.b16 %v186
      %v251 = vunpack.c.l.b16 %v187
      %v252 = vunpack.c.l.b16 %v188
      %v253 = vunpack.c.l.b16 %v189
      %v254 = vunpack.c.l.b16 %v190
      %v255 = vunpack.c.l.b16 %v191
      %v256 = vunpack.c.l.b16 %v192
      %v257 = vunpack.c.l.b16 %v193
      %v258 = vunpack.c.l.b16 %v194
      %v259 = vunpack.c.l.b16 %v195
      %v260 = vunpack.c.l.b16 %v196
      %v261 = vunpack.c.l.b16 %v197
      %v262 = vunpack.c.l.b16 %v198
      %v263 = vunpack.c.l.b16 %v199
      %v264 = vunpack.c.l.b16 %v200
      %v265 = vunpack.c.l.b16 %v201
      %v266 = vunpack.c.l.b16 %v202
      %v267 = vunpack.c.l.b16 %v203
      %v268 = vunpack.c.l.b16 %v204
      %v269 = vunpack.c.l.b16 %v205
      %v270 = vunpack.c.l.b16 %v206
      %v271 = vunpack.c.l.b16 %v207
      %v272 = vunpack.c.l.b16 %v208
      %v273 = vunpack.c.l.b16 %v209
      %v274 = vunpack.c.l.b16 %v210
      %v275 = vunpack.c.l.b16 %v211
      %v276 = vunpack.c.l.b16 %v212
      %v277 = vunpack.c.l.b16 %v213
      %v278 = vunpack.c.l.b16 %v214
      %v279 = vpack.c.b16 %v248, %v247
      %v280 = vpack.c.b16 %v250, %v249
      %v281 = vpack.c.b16 %v252, %v251
      %v282 = vpack.c.b16 %v254, %v253
      %v283 = vpack.c.b16 %v256, %v255
      %v284 = vpack.c.b16 %v258, %v257
      %v285 = vpack.c.b16 %v260, %v259
      %v286 = vpack.c.b16 %v262, %v261
      %v287 = vpack.c.b16 %v264, %v263
      %v288 = vpack.c.b16 %v266, %v265
      %v289 = vpack.c.b16 %v268, %v267
      %v290 = vpack.c.b16 %v270, %v269
      %v291 = vpack.c.b16 %v272, %v271
      %v292 = vpack.c.b16 %v274, %v273
      %v293 = vpack.c.b16 %v276, %v275
      %v294 = vpack.c.b16 %v278, %v277
      %v296 = vshrl.u32 0, 16
      %v298 = vrot.slane %v296, 7
      %v299 = vshll.u32 0, 16
      %v301 = vor.u32 %v298, %v299
      %v303 = vshrl.u32 %v279, 16
      %v305 = vrot.slane %v303, 7
      %v306 = vshll.u32 %v279, 16
      %v308 = vor.u32 %v305, %v306
      %v310 = vshrl.u32 %v280, 16
      %v312 = vrot.slane %v310, 7
      %v313 = vshll.u32 %v280, 16
      %v315 = vor.u32 %v312, %v313
      %v317 = vshrl.u32 %v281, 16
      %v319 = vrot.slane %v317, 7
      %v320 = vshll.u32 %v281, 16
      %v322 = vor.u32 %v319, %v320
      %v324 = vshrl.u32 %v282, 16
      %v326 = vrot.slane %v324, 7
      %v327 = vshll.u32 %v282, 16
      %v329 = vor.u32 %v326, %v327
      %v331 = vshrl.u32 %v283, 16
      %v333 = vrot.slane %v331, 7
      %v334 = vshll.u32 %v283, 16
      %v336 = vor.u32 %v333, %v334
      %v338 = vshrl.u32 %v284, 16
      %v340 = vrot.slane %v338, 7
      %v341 = vshll.u32 %v284, 16
      %v343 = vor.u32 %v340, %v341
      %v345 = vshrl.u32 %v285, 16
      %v347 = vrot.slane %v345, 7
      %v348 = vshll.u32 %v285, 16
      %v350 = vor.u32 %v347, %v348
      %v352 = vshrl.u32 %v286, 16
      %v354 = vrot.slane %v352, 7
      %v355 = vshll.u32 %v286, 16
      %v357 = vor.u32 %v354, %v355
      %v359 = vshrl.u32 %v287, 16
      %v361 = vrot.slane %v359, 7
      %v362 = vshll.u32 %v287, 16
      %v364 = vor.u32 %v361, %v362
      %v366 = vshrl.u32 %v288, 16
      %v368 = vrot.slane %v366, 7
      %v369 = vshll.u32 %v288, 16
      %v371 = vor.u32 %v368, %v369
      %v373 = vshrl.u32 %v289, 16
      %v375 = vrot.slane %v373, 7
      %v376 = vshll.u32 %v289, 16
      %v378 = vor.u32 %v375, %v376
      %v380 = vshrl.u32 %v290, 16
      %v382 = vrot.slane %v380, 7
      %v383 = vshll.u32 %v290, 16
      %v385 = vor.u32 %v382, %v383
      %v387 = vshrl.u32 %v291, 16
      %v389 = vrot.slane %v387, 7
      %v390 = vshll.u32 %v291, 16
      %v392 = vor.u32 %v389, %v390
      %v394 = vshrl.u32 %v292, 16
      %v396 = vrot.slane %v394, 7
      %v397 = vshll.u32 %v292, 16
      %v399 = vor.u32 %v396, %v397
      %v401 = vshrl.u32 %v293, 16
      %v403 = vrot.slane %v401, 7
      %v404 = vshll.u32 %v293, 16
      %v406 = vor.u32 %v403, %v404
      %v408 = vshrl.u32 %v294, 16
      %v410 = vrot.slane %v408, 7
      %v411 = vshll.u32 %v294, 16
      %v413 = vor.u32 %v410, %v411
      %vm448 = vcmask 1040384
      %vm449 = vsmask.f32 256
      %vm450 = vmand %vm448, %vm449
      %v451 = vsel %vm450, 0, %v301
      %v452 = vsel %vm450, 0, %v308
      %v453 = vsel %vm450, 0, %v315
      %v454 = vsel %vm450, 0, %v322
      %v455 = vsel %vm450, 0, %v329
      %v456 = vsel %vm450, 0, %v336
      %v457 = vsel %vm450, 0, %v343
      %v458 = vsel %vm450, 0, %v350
      %v459 = vsel %vm450, 0, %v357
      %v460 = vsel %vm450, 0, %v364
      %v461 = vsel %vm450, 0, %v371
      %v462 = vsel %vm450, 0, %v378
      %v463 = vsel %vm450, 0, %v385
      %v464 = vsel %vm450, 0, %v392
      %v465 = vsel %vm450, 0, %v399
      %v466 = vsel %vm450, 0, %v406
      %v467 = vsel %vm450, 0, %v413
      %v468 = vsel %vm450, %v298, 0
      %v469 = vsel %vm450, %v305, 0
      %v470 = vsel %vm450, %v312, 0
      %v471 = vsel %vm450, %v319, 0
      %v472 = vsel %vm450, %v326, 0
      %v473 = vsel %vm450, %v333, 0
      %v474 = vsel %vm450, %v340, 0
      %v475 = vsel %vm450, %v347, 0
      %v476 = vsel %vm450, %v354, 0
      %v477 = vsel %vm450, %v361, 0
      %v478 = vsel %vm450, %v368, 0
      %v479 = vsel %vm450, %v375, 0
      %v480 = vsel %vm450, %v382, 0
      %v481 = vsel %vm450, %v389, 0
      %v482 = vsel %vm450, %v396, 0
      %v483 = vsel %vm450, %v403, 0
      %v484 = vsel %vm450, %v410, 0
      %vm485 = vsmask.f32 7424
      %v487 = vshrl.u32 %v451, 16
      %v489 = vshll.u32 %v451, 16
      %v491 = vrot.slane %v489, 1
      %v492 = vor.u32 %v487, %v491
      %v494 = vshll.u32 %v468, 16
      %v496 = vrot.slane %v494, 1
      %v497 = vsel %vm485, %v492, %v496
      %v499 = vshrl.u32 %v452, 16
      %v501 = vshll.u32 %v452, 16
      %v503 = vrot.slane %v501, 1
      %v504 = vor.u32 %v499, %v503
      %v506 = vshll.u32 %v469, 16
      %v508 = vrot.slane %v506, 1
      %v509 = vsel %vm485, %v504, %v508
      %v511 = vshrl.u32 %v453, 16
      %v513 = vshll.u32 %v453, 16
      %v515 = vrot.slane %v513, 1
      %v516 = vor.u32 %v511, %v515
      %v518 = vshll.u32 %v470, 16
      %v520 = vrot.slane %v518, 1
      %v521 = vsel %vm485, %v516, %v520
      %v523 = vshrl.u32 %v454, 16
      %v525 = vshll.u32 %v454, 16
      %v527 = vrot.slane %v525, 1
      %v528 = vor.u32 %v523, %v527
      %v530 = vshll.u32 %v471, 16
      %v532 = vrot.slane %v530, 1
      %v533 = vsel %vm485, %v528, %v532
      %v535 = vshrl.u32 %v455, 16
      %v537 = vshll.u32 %v455, 16
      %v539 = vrot.slane %v537, 1
      %v540 = vor.u32 %v535, %v539
      %v542 = vshll.u32 %v472, 16
      %v544 = vrot.slane %v542, 1
      %v545 = vsel %vm485, %v540, %v544
      %v547 = vshrl.u32 %v456, 16
      %v549 = vshll.u32 %v456, 16
      %v551 = vrot.slane %v549, 1
      %v552 = vor.u32 %v547, %v551
      %v554 = vshll.u32 %v473, 16
      %v556 = vrot.slane %v554, 1
      %v557 = vsel %vm485, %v552, %v556
      %v559 = vshrl.u32 %v457, 16
      %v561 = vshll.u32 %v457, 16
      %v563 = vrot.slane %v561, 1
      %v564 = vor.u32 %v559, %v563
      %v566 = vshll.u32 %v474, 16
      %v568 = vrot.slane %v566, 1
      %v569 = vsel %vm485, %v564, %v568
      %v571 = vshrl.u32 %v458, 16
      %v573 = vshll.u32 %v458, 16
      %v575 = vrot.slane %v573, 1
      %v576 = vor.u32 %v571, %v575
      %v578 = vshll.u32 %v475, 16
      %v580 = vrot.slane %v578, 1
      %v581 = vsel %vm485, %v576, %v580
      %v583 = vshrl.u32 %v459, 16
      %v585 = vshll.u32 %v459, 16
      %v587 = vrot.slane %v585, 1
      %v588 = vor.u32 %v583, %v587
      %v590 = vshll.u32 %v476, 16
      %v592 = vrot.slane %v590, 1
      %v593 = vsel %vm485, %v588, %v592
      %v595 = vshrl.u32 %v460, 16
      %v597 = vshll.u32 %v460, 16
      %v599 = vrot.slane %v597, 1
      %v600 = vor.u32 %v595, %v599
      %v602 = vshll.u32 %v477, 16
      %v604 = vrot.slane %v602, 1
      %v605 = vsel %vm485, %v600, %v604
      %v607 = vshrl.u32 %v461, 16
      %v609 = vshll.u32 %v461, 16
      %v611 = vrot.slane %v609, 1
      %v612 = vor.u32 %v607, %v611
      %v614 = vshll.u32 %v478, 16
      %v616 = vrot.slane %v614, 1
      %v617 = vsel %vm485, %v612, %v616
      %v619 = vshrl.u32 %v462, 16
      %v621 = vshll.u32 %v462, 16
      %v623 = vrot.slane %v621, 1
      %v624 = vor.u32 %v619, %v623
      %v626 = vshll.u32 %v479, 16
      %v628 = vrot.slane %v626, 1
      %v629 = vsel %vm485, %v624, %v628
      %v631 = vshrl.u32 %v463, 16
      %v633 = vshll.u32 %v463, 16
      %v635 = vrot.slane %v633, 1
      %v636 = vor.u32 %v631, %v635
      %v638 = vshll.u32 %v480, 16
      %v640 = vrot.slane %v638, 1
      %v641 = vsel %vm485, %v636, %v640
      %v643 = vshrl.u32 %v464, 16
      %v645 = vshll.u32 %v464, 16
      %v647 = vrot.slane %v645, 1
      %v648 = vor.u32 %v643, %v647
      %v650 = vshll.u32 %v481, 16
      %v652 = vrot.slane %v650, 1
      %v653 = vsel %vm485, %v648, %v652
      %v655 = vshrl.u32 %v465, 16
      %v657 = vshll.u32 %v465, 16
      %v659 = vrot.slane %v657, 1
      %v660 = vor.u32 %v655, %v659
      %v662 = vshll.u32 %v482, 16
      %v664 = vrot.slane %v662, 1
      %v665 = vsel %vm485, %v660, %v664
      %v667 = vshrl.u32 %v466, 16
      %v669 = vshll.u32 %v466, 16
      %v671 = vrot.slane %v669, 1
      %v672 = vor.u32 %v667, %v671
      %v674 = vshll.u32 %v483, 16
      %v676 = vrot.slane %v674, 1
      %v677 = vsel %vm485, %v672, %v676
      %vm710 = vcmask 1046528
      %v711 = vrot.slane %v451, 1
      %v712 = vrot.slane %v468, 1
      %v713 = vsel %vm710, %v711, %v712
      %v714 = vrot.slane %v452, 1
      %v715 = vrot.slane %v469, 1
      %v716 = vsel %vm710, %v714, %v715
      %v717 = vrot.slane %v453, 1
      %v718 = vrot.slane %v470, 1
      %v719 = vsel %vm710, %v717, %v718
      %v720 = vrot.slane %v454, 1
      %v721 = vrot.slane %v471, 1
      %v722 = vsel %vm710, %v720, %v721
      %v723 = vrot.slane %v455, 1
      %v724 = vrot.slane %v472, 1
      %v725 = vsel %vm710, %v723, %v724
      %v726 = vrot.slane %v456, 1
      %v727 = vrot.slane %v473, 1
      %v728 = vsel %vm710, %v726, %v727
      %v729 = vrot.slane %v457, 1
      %v730 = vrot.slane %v474, 1
      %v731 = vsel %vm710, %v729, %v730
      %v732 = vrot.slane %v458, 1
      %v733 = vrot.slane %v475, 1
      %v734 = vsel %vm710, %v732, %v733
      %v735 = vrot.slane %v459, 1
      %v736 = vrot.slane %v476, 1
      %v737 = vsel %vm710, %v735, %v736
      %v738 = vrot.slane %v460, 1
      %v739 = vrot.slane %v477, 1
      %v740 = vsel %vm710, %v738, %v739
      %v741 = vrot.slane %v461, 1
      %v742 = vrot.slane %v478, 1
      %v743 = vsel %vm710, %v741, %v742
      %v744 = vrot.slane %v462, 1
      %v745 = vrot.slane %v479, 1
      %v746 = vsel %vm710, %v744, %v745
      %v747 = vrot.slane %v463, 1
      %v748 = vrot.slane %v480, 1
      %v749 = vsel %vm710, %v747, %v748
      %v750 = vrot.slane %v464, 1
      %v751 = vrot.slane %v481, 1
      %v752 = vsel %vm710, %v750, %v751
      %v753 = vrot.slane %v465, 1
      %v754 = vrot.slane %v482, 1
      %v755 = vsel %vm710, %v753, %v754
      %v756 = vrot.slane %v466, 1
      %v757 = vrot.slane %v483, 1
      %v758 = vsel %vm710, %v756, %v757
      %v760 = vshrl.u32 %v467, 16
      %v762 = vshll.u32 %v467, 16
      %v764 = vrot.slane %v762, 1
      %v765 = vor.u32 %v760, %v764
      %v767 = vshll.u32 %v484, 16
      %v769 = vrot.slane %v767, 1
      %v770 = vsel %vm485, %v765, %v769
      %v773 = vrot.slane %v467, 1
      %v774 = vrot.slane %v484, 1
      %v775 = vsel %vm710, %v773, %v774
      %776 = vrot.lane.b32.xlu0 %v497, 4
      %v777 = vpop.permute.xlu0 %776
      %778 = vrot.lane.b32.xlu0 %v509, 4
      %v779 = vpop.permute.xlu0 %778
      %780 = vrot.lane.b32.xlu0 %v521, 4
      %v781 = vpop.permute.xlu0 %780
      %782 = vrot.lane.b32.xlu0 %v533, 4
      %v783 = vpop.permute.xlu0 %782
      %784 = vrot.lane.b32.xlu0 %v545, 4
      %v785 = vpop.permute.xlu0 %784
      %786 = vrot.lane.b32.xlu0 %v557, 4
      %v787 = vpop.permute.xlu0 %786
      %788 = vrot.lane.b32.xlu0 %v569, 4
      %v789 = vpop.permute.xlu0 %788
      %790 = vrot.lane.b32.xlu0 %v581, 4
      %v791 = vpop.permute.xlu0 %790
      %792 = vrot.lane.b32.xlu0 %v593, 4
      %v793 = vpop.permute.xlu0 %792
      %794 = vrot.lane.b32.xlu0 %v605, 4
      %v795 = vpop.permute.xlu0 %794
      %796 = vrot.lane.b32.xlu0 %v617, 4
      %v797 = vpop.permute.xlu0 %796
      %798 = vrot.lane.b32.xlu0 %v629, 4
      %v799 = vpop.permute.xlu0 %798
      %800 = vrot.lane.b32.xlu0 %v641, 4
      %v801 = vpop.permute.xlu0 %800
      %802 = vrot.lane.b32.xlu0 %v653, 4
      %v803 = vpop.permute.xlu0 %802
      %804 = vrot.lane.b32.xlu0 %v665, 4
      %v805 = vpop.permute.xlu0 %804
      %806 = vrot.lane.b32.xlu0 %v677, 4
      %v807 = vpop.permute.xlu0 %806
      %808 = vrot.lane.b32.xlu0 %v713, 8
      %v809 = vpop.permute.xlu0 %808
      %810 = vrot.lane.b32.xlu0 %v716, 8
      %v811 = vpop.permute.xlu0 %810
      %812 = vrot.lane.b32.xlu0 %v719, 8
      %v813 = vpop.permute.xlu0 %812
      %814 = vrot.lane.b32.xlu0 %v722, 8
      %v815 = vpop.permute.xlu0 %814
      %816 = vrot.lane.b32.xlu0 %v725, 8
      %v817 = vpop.permute.xlu0 %816
      %818 = vrot.lane.b32.xlu0 %v728, 8
      %v819 = vpop.permute.xlu0 %818
      %820 = vrot.lane.b32.xlu0 %v731, 8
      %v821 = vpop.permute.xlu0 %820
      %822 = vrot.lane.b32.xlu0 %v734, 8
      %v823 = vpop.permute.xlu0 %822
      %824 = vrot.lane.b32.xlu0 %v737, 8
      %v825 = vpop.permute.xlu0 %824
      %826 = vrot.lane.b32.xlu0 %v740, 8
      %v827 = vpop.permute.xlu0 %826
      %828 = vrot.lane.b32.xlu0 %v743, 8
      %v829 = vpop.permute.xlu0 %828
      %830 = vrot.lane.b32.xlu0 %v746, 8
      %v831 = vpop.permute.xlu0 %830
      %832 = vrot.lane.b32.xlu0 %v749, 8
      %v833 = vpop.permute.xlu0 %832
      %834 = vrot.lane.b32.xlu0 %v752, 8
      %v835 = vpop.permute.xlu0 %834
      %836 = vrot.lane.b32.xlu0 %v755, 8
      %v837 = vpop.permute.xlu0 %836
      %838 = vrot.lane.b32.xlu0 %v758, 8
      %v839 = vpop.permute.xlu0 %838
      %840 = vrot.lane.b32.xlu0 %v452, 12
      %v841 = vpop.permute.xlu0 %840
      %842 = vrot.lane.b32.xlu0 %v453, 12
      %v843 = vpop.permute.xlu0 %842
      %844 = vrot.lane.b32.xlu0 %v454, 12
      %v845 = vpop.permute.xlu0 %844
      %846 = vrot.lane.b32.xlu0 %v455, 12
      %v847 = vpop.permute.xlu0 %846
      %848 = vrot.lane.b32.xlu0 %v456, 12
      %v849 = vpop.permute.xlu0 %848
      %850 = vrot.lane.b32.xlu0 %v457, 12
      %v851 = vpop.permute.xlu0 %850
      %852 = vrot.lane.b32.xlu0 %v458, 12
      %v853 = vpop.permute.xlu0 %852
      %854 = vrot.lane.b32.xlu0 %v459, 12
      %v855 = vpop.permute.xlu0 %854
      %856 = vrot.lane.b32.xlu0 %v460, 12
      %v857 = vpop.permute.xlu0 %856
      %858 = vrot.lane.b32.xlu0 %v461, 12
      %v859 = vpop.permute.xlu0 %858
      %860 = vrot.lane.b32.xlu0 %v462, 12
      %v861 = vpop.permute.xlu0 %860
      %862 = vrot.lane.b32.xlu0 %v463, 12
      %v863 = vpop.permute.xlu0 %862
      %864 = vrot.lane.b32.xlu0 %v464, 12
      %v865 = vpop.permute.xlu0 %864
      %866 = vrot.lane.b32.xlu0 %v465, 12
      %v867 = vpop.permute.xlu0 %866
      %868 = vrot.lane.b32.xlu0 %v466, 12
      %v869 = vpop.permute.xlu0 %868
      %870 = vrot.lane.b32.xlu0 %v467, 12
      %v871 = vpop.permute.xlu0 %870
      %872 = vrot.lane.b32.xlu0 %v509, 16
      %v873 = vpop.permute.xlu0 %872
      %874 = vrot.lane.b32.xlu0 %v521, 16
      %v875 = vpop.permute.xlu0 %874
      %876 = vrot.lane.b32.xlu0 %v533, 16
      %v877 = vpop.permute.xlu0 %876
      %878 = vrot.lane.b32.xlu0 %v545, 16
      %v879 = vpop.permute.xlu0 %878
      %880 = vrot.lane.b32.xlu0 %v557, 16
      %v881 = vpop.permute.xlu0 %880
      %882 = vrot.lane.b32.xlu0 %v569, 16
      %v883 = vpop.permute.xlu0 %882
      %884 = vrot.lane.b32.xlu0 %v581, 16
      %v885 = vpop.permute.xlu0 %884
      %886 = vrot.lane.b32.xlu0 %v593, 16
      %v887 = vpop.permute.xlu0 %886
      %888 = vrot.lane.b32.xlu0 %v605, 16
      %v889 = vpop.permute.xlu0 %888
      %890 = vrot.lane.b32.xlu0 %v617, 16
      %v891 = vpop.permute.xlu0 %890
      %892 = vrot.lane.b32.xlu0 %v629, 16
      %v893 = vpop.permute.xlu0 %892
      %894 = vrot.lane.b32.xlu0 %v641, 16
      %v895 = vpop.permute.xlu0 %894
      %896 = vrot.lane.b32.xlu0 %v653, 16
      %v897 = vpop.permute.xlu0 %896
      %898 = vrot.lane.b32.xlu0 %v665, 16
      %v899 = vpop.permute.xlu0 %898
      %900 = vrot.lane.b32.xlu0 %v677, 16
      %v901 = vpop.permute.xlu0 %900
      %902 = vrot.lane.b32.xlu0 %v770, 16
      %v903 = vpop.permute.xlu0 %902
      %904 = vrot.lane.b32.xlu0 %v716, 20
      %v905 = vpop.permute.xlu0 %904
      %906 = vrot.lane.b32.xlu0 %v719, 20
      %v907 = vpop.permute.xlu0 %906
      %908 = vrot.lane.b32.xlu0 %v722, 20
      %v909 = vpop.permute.xlu0 %908
      %910 = vrot.lane.b32.xlu0 %v725, 20
      %v911 = vpop.permute.xlu0 %910
      %912 = vrot.lane.b32.xlu0 %v728, 20
      %v913 = vpop.permute.xlu0 %912
      %914 = vrot.lane.b32.xlu0 %v731, 20
      %v915 = vpop.permute.xlu0 %914
      %916 = vrot.lane.b32.xlu0 %v734, 20
      %v917 = vpop.permute.xlu0 %916
      %918 = vrot.lane.b32.xlu0 %v737, 20
      %v919 = vpop.permute.xlu0 %918
      %920 = vrot.lane.b32.xlu0 %v740, 20
      %v921 = vpop.permute.xlu0 %920
      %922 = vrot.lane.b32.xlu0 %v743, 20
      %v923 = vpop.permute.xlu0 %922
      %924 = vrot.lane.b32.xlu0 %v746, 20
      %v925 = vpop.permute.xlu0 %924
      %926 = vrot.lane.b32.xlu0 %v749, 20
      %v927 = vpop.permute.xlu0 %926
      %928 = vrot.lane.b32.xlu0 %v752, 20
      %v929 = vpop.permute.xlu0 %928
      %930 = vrot.lane.b32.xlu0 %v755, 20
      %v931 = vpop.permute.xlu0 %930
      %932 = vrot.lane.b32.xlu0 %v758, 20
      %v933 = vpop.permute.xlu0 %932
      %934 = vrot.lane.b32.xlu0 %v775, 20
      %v935 = vpop.permute.xlu0 %934
      %936 = vrot.lane.b32.xlu0 %v453, 24
      %v937 = vpop.permute.xlu0 %936
      %938 = vrot.lane.b32.xlu0 %v454, 24
      %v939 = vpop.permute.xlu0 %938
      %940 = vrot.lane.b32.xlu0 %v455, 24
      %v941 = vpop.permute.xlu0 %940
      %942 = vrot.lane.b32.xlu0 %v456, 24
      %v943 = vpop.permute.xlu0 %942
      %944 = vrot.lane.b32.xlu0 %v457, 24
      %v945 = vpop.permute.xlu0 %944
      %946 = vrot.lane.b32.xlu0 %v458, 24
      %v947 = vpop.permute.xlu0 %946
      %948 = vrot.lane.b32.xlu0 %v459, 24
      %v949 = vpop.permute.xlu0 %948
      %950 = vrot.lane.b32.xlu0 %v460, 24
      %v951 = vpop.permute.xlu0 %950
      %952 = vrot.lane.b32.xlu0 %v461, 24
      %v953 = vpop.permute.xlu0 %952
      %954 = vrot.lane.b32.xlu0 %v462, 24
      %v955 = vpop.permute.xlu0 %954
      %956 = vrot.lane.b32.xlu0 %v463, 24
      %v957 = vpop.permute.xlu0 %956
      %958 = vrot.lane.b32.xlu0 %v464, 24
      %v959 = vpop.permute.xlu0 %958
      %960 = vrot.lane.b32.xlu0 %v465, 24
      %v961 = vpop.permute.xlu0 %960
      %962 = vrot.lane.b32.xlu0 %v466, 24
      %v963 = vpop.permute.xlu0 %962
      %964 = vrot.lane.b32.xlu0 %v467, 24
      %v965 = vpop.permute.xlu0 %964
      %966 = vrot.lane.b32.xlu0 %v451, 24
      %v967 = vpop.permute.xlu0 %966
      %968 = vrot.lane.b32.xlu0 %v521, 28
      %v969 = vpop.permute.xlu0 %968
      %970 = vrot.lane.b32.xlu0 %v533, 28
      %v971 = vpop.permute.xlu0 %970
      %972 = vrot.lane.b32.xlu0 %v545, 28
      %v973 = vpop.permute.xlu0 %972
      %974 = vrot.lane.b32.xlu0 %v557, 28
      %v975 = vpop.permute.xlu0 %974
      %976 = vrot.lane.b32.xlu0 %v569, 28
      %v977 = vpop.permute.xlu0 %976
      %978 = vrot.lane.b32.xlu0 %v581, 28
      %v979 = vpop.permute.xlu0 %978
      %980 = vrot.lane.b32.xlu0 %v593, 28
      %v981 = vpop.permute.xlu0 %980
      %982 = vrot.lane.b32.xlu0 %v605, 28
      %v983 = vpop.permute.xlu0 %982
      %984 = vrot.lane.b32.xlu0 %v617, 28
      %v985 = vpop.permute.xlu0 %984
      %986 = vrot.lane.b32.xlu0 %v629, 28
      %v987 = vpop.permute.xlu0 %986
      %988 = vrot.lane.b32.xlu0 %v641, 28
      %v989 = vpop.permute.xlu0 %988
      %990 = vrot.lane.b32.xlu0 %v653, 28
      %v991 = vpop.permute.xlu0 %990
      %992 = vrot.lane.b32.xlu0 %v665, 28
      %v993 = vpop.permute.xlu0 %992
      %994 = vrot.lane.b32.xlu0 %v677, 28
      %v995 = vpop.permute.xlu0 %994
      %996 = vrot.lane.b32.xlu0 %v770, 28
      %v997 = vpop.permute.xlu0 %996
      %998 = vrot.lane.b32.xlu0 %v497, 28
      %v999 = vpop.permute.xlu0 %998
      %1000 = vrot.lane.b32.xlu0 %v719, 32
      %v1001 = vpop.permute.xlu0 %1000
      %1002 = vrot.lane.b32.xlu0 %v722, 32
      %v1003 = vpop.permute.xlu0 %1002
      %1004 = vrot.lane.b32.xlu0 %v725, 32
      %v1005 = vpop.permute.xlu0 %1004
      %1006 = vrot.lane.b32.xlu0 %v728, 32
      %v1007 = vpop.permute.xlu0 %1006
      %1008 = vrot.lane.b32.xlu0 %v731, 32
      %v1009 = vpop.permute.xlu0 %1008
      %1010 = vrot.lane.b32.xlu0 %v734, 32
      %v1011 = vpop.permute.xlu0 %1010
      %1012 = vrot.lane.b32.xlu0 %v737, 32
      %v1013 = vpop.permute.xlu0 %1012
      %1014 = vrot.lane.b32.xlu0 %v740, 32
      %v1015 = vpop.permute.xlu0 %1014
      %1016 = vrot.lane.b32.xlu0 %v743, 32
      %v1017 = vpop.permute.xlu0 %1016
      %1018 = vrot.lane.b32.xlu0 %v746, 32
      %v1019 = vpop.permute.xlu0 %1018
      %1020 = vrot.lane.b32.xlu0 %v749, 32
      %v1021 = vpop.permute.xlu0 %1020
      %1022 = vrot.lane.b32.xlu0 %v752, 32
      %v1023 = vpop.permute.xlu0 %1022
      %1024 = vrot.lane.b32.xlu0 %v755, 32
      %v1025 = vpop.permute.xlu0 %1024
      %1026 = vrot.lane.b32.xlu0 %v758, 32
      %v1027 = vpop.permute.xlu0 %1026
      %1028 = vrot.lane.b32.xlu0 %v775, 32
      %v1029 = vpop.permute.xlu0 %1028
      %1030 = vrot.lane.b32.xlu0 %v713, 32
      %v1031 = vpop.permute.xlu0 %1030
      %vm1032 = vcmask 31744
      %v1034 = vsel %vm1032, %v451, %v777
      %v1036 = vsel %vm1032, %v452, %v779
      %v1038 = vsel %vm1032, %v453, %v781
      %v1040 = vsel %vm1032, %v454, %v783
      %v1042 = vsel %vm1032, %v455, %v785
      %v1044 = vsel %vm1032, %v456, %v787
      %v1046 = vsel %vm1032, %v457, %v789
      %v1048 = vsel %vm1032, %v458, %v791
      %v1050 = vsel %vm1032, %v459, %v793
      %v1052 = vsel %vm1032, %v460, %v795
      %v1054 = vsel %vm1032, %v461, %v797
      %v1056 = vsel %vm1032, %v462, %v799
      %v1058 = vsel %vm1032, %v463, %v801
      %v1060 = vsel %vm1032, %v464, %v803
      %v1062 = vsel %vm1032, %v465, %v805
      %v1064 = vsel %vm1032, %v466, %v807
      %vm1065 = vcmask 64512
      %v1067 = vsel %vm1065, %v1034, %v809
      %v1069 = vsel %vm1065, %v1036, %v811
      %v1071 = vsel %vm1065, %v1038, %v813
      %v1073 = vsel %vm1065, %v1040, %v815
      %v1075 = vsel %vm1065, %v1042, %v817
      %v1077 = vsel %vm1065, %v1044, %v819
      %v1079 = vsel %vm1065, %v1046, %v821
      %v1081 = vsel %vm1065, %v1048, %v823
      %v1083 = vsel %vm1065, %v1050, %v825
      %v1085 = vsel %vm1065, %v1052, %v827
      %v1087 = vsel %vm1065, %v1054, %v829
      %v1089 = vsel %vm1065, %v1056, %v831
      %v1091 = vsel %vm1065, %v1058, %v833
      %v1093 = vsel %vm1065, %v1060, %v835
      %v1095 = vsel %vm1065, %v1062, %v837
      %v1097 = vsel %vm1065, %v1064, %v839
      %vm1098 = vcmask 97280
      %v1100 = vsel %vm1098, %v1067, %v841
      %v1102 = vsel %vm1098, %v1069, %v843
      %v1104 = vsel %vm1098, %v1071, %v845
      %v1106 = vsel %vm1098, %v1073, %v847
      %v1108 = vsel %vm1098, %v1075, %v849
      %v1110 = vsel %vm1098, %v1077, %v851
      %v1112 = vsel %vm1098, %v1079, %v853
      %v1114 = vsel %vm1098, %v1081, %v855
      %v1116 = vsel %vm1098, %v1083, %v857
      %v1118 = vsel %vm1098, %v1085, %v859
      %v1120 = vsel %vm1098, %v1087, %v861
      %v1122 = vsel %vm1098, %v1089, %v863
      %v1124 = vsel %vm1098, %v1091, %v865
      %v1126 = vsel %vm1098, %v1093, %v867
      %v1128 = vsel %vm1098, %v1095, %v869
      %v1130 = vsel %vm1098, %v1097, %v871
      %vm1131 = vcmask 130048
      %v1133 = vsel %vm1131, %v1100, %v873
      %v1135 = vsel %vm1131, %v1102, %v875
      %v1137 = vsel %vm1131, %v1104, %v877
      %v1139 = vsel %vm1131, %v1106, %v879
      %v1141 = vsel %vm1131, %v1108, %v881
      %v1143 = vsel %vm1131, %v1110, %v883
      %v1145 = vsel %vm1131, %v1112, %v885
      %v1147 = vsel %vm1131, %v1114, %v887
      %v1149 = vsel %vm1131, %v1116, %v889
      %v1151 = vsel %vm1131, %v1118, %v891
      %v1153 = vsel %vm1131, %v1120, %v893
      %v1155 = vsel %vm1131, %v1122, %v895
      %v1157 = vsel %vm1131, %v1124, %v897
      %v1159 = vsel %vm1131, %v1126, %v899
      %v1161 = vsel %vm1131, %v1128, %v901
      %v1163 = vsel %vm1131, %v1130, %v903
      %vm1164 = vcmask 162816
      %v1166 = vsel %vm1164, %v1133, %v905
      %v1168 = vsel %vm1164, %v1135, %v907
      %v1170 = vsel %vm1164, %v1137, %v909
      %v1172 = vsel %vm1164, %v1139, %v911
      %v1174 = vsel %vm1164, %v1141, %v913
      %v1176 = vsel %vm1164, %v1143, %v915
      %v1178 = vsel %vm1164, %v1145, %v917
      %v1180 = vsel %vm1164, %v1147, %v919
      %v1182 = vsel %vm1164, %v1149, %v921
      %v1184 = vsel %vm1164, %v1151, %v923
      %v1186 = vsel %vm1164, %v1153, %v925
      %v1188 = vsel %vm1164, %v1155, %v927
      %v1190 = vsel %vm1164, %v1157, %v929
      %v1192 = vsel %vm1164, %v1159, %v931
      %v1194 = vsel %vm1164, %v1161, %v933
      %v1196 = vsel %vm1164, %v1163, %v935
      %vm1197 = vcmask 195584
      %v1199 = vsel %vm1197, %v1166, %v937
      %v1201 = vsel %vm1197, %v1168, %v939
      %v1203 = vsel %vm1197, %v1170, %v941
      %v1205 = vsel %vm1197, %v1172, %v943
      %v1207 = vsel %vm1197, %v1174, %v945
      %v1209 = vsel %vm1197, %v1176, %v947
      %v1211 = vsel %vm1197, %v1178, %v949
      %v1213 = vsel %vm1197, %v1180, %v951
      %v1215 = vsel %vm1197, %v1182, %v953
      %v1217 = vsel %vm1197, %v1184, %v955
      %v1219 = vsel %vm1197, %v1186, %v957
      %v1221 = vsel %vm1197, %v1188, %v959
      %v1223 = vsel %vm1197, %v1190, %v961
      %v1225 = vsel %vm1197, %v1192, %v963
      %v1227 = vsel %vm1197, %v1194, %v965
      %v1229 = vsel %vm1197, %v1196, %v967
      %vm1230 = vcmask 228352
      %v1232 = vsel %vm1230, %v1199, %v969
      %v1234 = vsel %vm1230, %v1201, %v971
      %v1236 = vsel %vm1230, %v1203, %v973
      %v1238 = vsel %vm1230, %v1205, %v975
      %v1240 = vsel %vm1230, %v1207, %v977
      %v1242 = vsel %vm1230, %v1209, %v979
      %v1244 = vsel %vm1230, %v1211, %v981
      %v1246 = vsel %vm1230, %v1213, %v983
      %v1248 = vsel %vm1230, %v1215, %v985
      %v1250 = vsel %vm1230, %v1217, %v987
      %v1252 = vsel %vm1230, %v1219, %v989
      %v1254 = vsel %vm1230, %v1221, %v991
      %v1256 = vsel %vm1230, %v1223, %v993
      %v1258 = vsel %vm1230, %v1225, %v995
      %v1260 = vsel %vm1230, %v1227, %v997
      %v1262 = vsel %vm1230, %v1229, %v999
      %vm1263 = vcmask 261120
      %v1265 = vsel %vm1263, %v1232, %v1001
      %v1267 = vsel %vm1263, %v1234, %v1003
      %v1269 = vsel %vm1263, %v1236, %v1005
      %v1271 = vsel %vm1263, %v1238, %v1007
      %v1273 = vsel %vm1263, %v1240, %v1009
      %v1275 = vsel %vm1263, %v1242, %v1011
      %v1277 = vsel %vm1263, %v1244, %v1013
      %v1279 = vsel %vm1263, %v1246, %v1015
      %v1281 = vsel %vm1263, %v1248, %v1017
      %v1283 = vsel %vm1263, %v1250, %v1019
      %v1285 = vsel %vm1263, %v1252, %v1021
      %v1287 = vsel %vm1263, %v1254, %v1023
      %v1289 = vsel %vm1263, %v1256, %v1025
      %v1291 = vsel %vm1263, %v1258, %v1027
      %v1293 = vsel %vm1263, %v1260, %v1029
      %v1295 = vsel %vm1263, %v1262, %v1031
      %vm1296 = vcmask 293888
      %v1297 = vsel %vm1296, %v1265, 0
      %v1299 = vsel %vm1296, %v1267, 0
      %v1301 = vsel %vm1296, %v1269, 0
      %v1303 = vsel %vm1296, %v1271, 0
      %v1305 = vsel %vm1296, %v1273, 0
      %v1307 = vsel %vm1296, %v1275, 0
      %v1309 = vsel %vm1296, %v1277, 0
      %v1311 = vsel %vm1296, %v1279, 0
      %v1313 = vsel %vm1296, %v1281, 0
      %v1315 = vsel %vm1296, %v1283, 0
      %v1317 = vsel %vm1296, %v1285, 0
      %v1319 = vsel %vm1296, %v1287, 0
      %v1321 = vsel %vm1296, %v1289, 0
      %v1323 = vsel %vm1296, %v1291, 0
      %v1325 = vsel %vm1296, %v1293, 0
      %v1327 = vsel %vm1296, %v1295, 0
      %v1329 = vld [vmem:[%s1] sm:$0xf]
      %v1330 = vld [vmem:[%s1 + $0x4] sm:$0xf]
      %v1331 = vld [vmem:[%s1 + $0x8] sm:$0xf]
      %v1332 = vld [vmem:[%s1 + $0xc] sm:$0xf]
      %v1333 = vld [vmem:[%s1 + $0x10] sm:$0xf]
      %v1334 = vld [vmem:[%s1 + $0x14] sm:$0xf]
      %v1335 = vld [vmem:[%s1 + $0x18] sm:$0xf]
      %v1336 = vld [vmem:[%s1 + $0x1c] sm:$0xf]
      %v1337 = vld [vmem:[%s1 + $0x20] sm:$0xf]
      %v1338 = vld [vmem:[%s1 + $0x24] sm:$0xf]
      %v1339 = vld [vmem:[%s1 + $0x28] sm:$0xf]
      %v1340 = vld [vmem:[%s1 + $0x2c] sm:$0xf]
      %v1341 = vld [vmem:[%s1 + $0x30] sm:$0xf]
      %v1342 = vld [vmem:[%s1 + $0x34] sm:$0xf]
      %v1343 = vld [vmem:[%s1 + $0x38] sm:$0xf]
      %v1344 = vld [vmem:[%s1 + $0x3c] sm:$0xf]
      %v1361 = vunpack.c.l.b16 %v1329
      %v1362 = vunpack.c.l.b16 %v1330
      %v1363 = vunpack.c.l.b16 %v1331
      %v1364 = vunpack.c.l.b16 %v1332
      %v1365 = vunpack.c.l.b16 %v1333
      %v1366 = vunpack.c.l.b16 %v1334
      %v1367 = vunpack.c.l.b16 %v1335
      %v1368 = vunpack.c.l.b16 %v1336
      %v1369 = vunpack.c.l.b16 %v1337
      %v1370 = vunpack.c.l.b16 %v1338
      %v1371 = vunpack.c.l.b16 %v1339
      %v1372 = vunpack.c.l.b16 %v1340
      %v1373 = vunpack.c.l.b16 %v1341
      %v1374 = vunpack.c.l.b16 %v1342
      %v1375 = vunpack.c.l.b16 %v1343
      %v1376 = vunpack.c.l.b16 %v1344
      %v1377 = vpack.c.b16 %v1362, %v1361
      %v1378 = vpack.c.b16 %v1364, %v1363
      %v1379 = vpack.c.b16 %v1366, %v1365
      %v1380 = vpack.c.b16 %v1368, %v1367
      %v1381 = vpack.c.b16 %v1370, %v1369
      %v1382 = vpack.c.b16 %v1372, %v1371
      %v1383 = vpack.c.b16 %v1374, %v1373
      %v1384 = vpack.c.b16 %v1376, %v1375
      %1393 = vmatprep.subr.bf16.mxu0 0
      %1394 = vmatpush1.bf16.msra.mxu0 %v1377
      %1395 = vmatprep.subr.bf16.mxu0 0
      %1396 = vmatpush1.bf16.msra.mxu0 %v1378
      %1397 = vmatprep.subr.bf16.mxu0 0
      %1398 = vmatpush1.bf16.msra.mxu0 %v1379
      %1399 = vmatprep.subr.bf16.mxu0 0
      %1400 = vmatpush1.bf16.msra.mxu0 %v1380
      %1401 = vmatprep.subr.bf16.mxu0 0
      %1402 = vmatpush1.bf16.msra.mxu0 %v1381
      %1403 = vmatprep.subr.bf16.mxu0 0
      %1404 = vmatpush1.bf16.msra.mxu0 %v1382
      %1405 = vmatprep.subr.bf16.mxu0 0
      %1406 = vmatpush1.bf16.msra.mxu0 %v1383
      %1407 = vmatprep.subr.bf16.mxu0 0
      %1408 = vmatpush1.bf16.msra.mxu0 %v1384
      %1409 = vmatprep.subr.bf16.mxu0 0
      %1410 = vmatpush1.bf16.msra.mxu0 0
      %1411 = vmatprep.subr.bf16.mxu0 0
      %1412 = vmatpush1.bf16.msra.mxu0 0
      %1413 = vmatprep.subr.bf16.mxu0 0
      %1414 = vmatpush1.bf16.msra.mxu0 0
      %1415 = vmatprep.subr.bf16.mxu0 0
      %1416 = vmatpush1.bf16.msra.mxu0 0
      %1417 = vmatprep.subr.bf16.mxu0 0
      %1418 = vmatpush1.bf16.msra.mxu0 0
      %1419 = vmatprep.subr.bf16.mxu0 0
      %1420 = vmatpush1.bf16.msra.mxu0 0
      %1421 = vmatprep.subr.bf16.mxu0 0
      %1422 = vmatpush1.bf16.msra.mxu0 0
      %1423 = vmatprep.subr.bf16.mxu0 0
      %1424 = vmatpush1.bf16.msra.mxu0 0
      %1425 = vmatprep.mubr.bf16.mxu0 0
      %1426 = vmatmul.mubr.bf16.gmra.mrb[0].mxu0 %v1297
      %v1427 = vpop.f32.mrb[0].mxu0
      %v1428 = vadd.f32 0.0, %v1427
      %v1429 = vpop.f32.mrb[0].mxu0
      %v1430 = vpop.f32.mrb[0].mxu0
      %v1431 = vadd.f32 0.0, %v1430
      %v1432 = vpop.f32.mrb[0].mxu0
      %1433 = vmatprep.mubr.bf16.mxu0 0
      %1434 = vmatmul.mubr.bf16.gmra.mrb[0].mxu0 %v1299
      %v1435 = vpop.f32.mrb[0].mxu0
      %v1436 = vadd.f32 0.0, %v1435
      %v1437 = vpop.f32.mrb[0].mxu0
      %v1438 = vpop.f32.mrb[0].mxu0
      %v1439 = vadd.f32 0.0, %v1438
      %v1440 = vpop.f32.mrb[0].mxu0
      %1441 = vmatprep.mubr.bf16.mxu0 0
      %1442 = vmatmul.mubr.bf16.gmra.mrb[0].mxu0 %v1301
      %v1443 = vpop.f32.mrb[0].mxu0
      %v1444 = vadd.f32 0.0, %v1443
      %v1445 = vpop.f32.mrb[0].mxu0
      %v1446 = vpop.f32.mrb[0].mxu0
      %v1447 = vadd.f32 0.0, %v1446
      %v1448 = vpop.f32.mrb[0].mxu0
      %1449 = vmatprep.mubr.bf16.mxu0 0
      %1450 = vmatmul.mubr.bf16.gmra.mrb[0].mxu0 %v1303
      %v1451 = vpop.f32.mrb[0].mxu0
      %v1452 = vadd.f32 0.0, %v1451
      %v1453 = vpop.f32.mrb[0].mxu0
      %v1454 = vpop.f32.mrb[0].mxu0
      %v1455 = vadd.f32 0.0, %v1454
      %v1456 = vpop.f32.mrb[0].mxu0
      %1457 = vmatprep.mubr.bf16.mxu0 0
      %1458 = vmatmul.mubr.bf16.gmra.mrb[0].mxu0 %v1305
      %v1459 = vpop.f32.mrb[0].mxu0
      %v1460 = vadd.f32 0.0, %v1459
      %v1461 = vpop.f32.mrb[0].mxu0
      %v1462 = vpop.f32.mrb[0].mxu0
      %v1463 = vadd.f32 0.0, %v1462
      %v1464 = vpop.f32.mrb[0].mxu0
      %1465 = vmatprep.mubr.bf16.mxu0 0
      %1466 = vmatmul.mubr.bf16.gmra.mrb[0].mxu0 %v1307
      %v1467 = vpop.f32.mrb[0].mxu0
      %v1468 = vadd.f32 0.0, %v1467
      %v1469 = vpop.f32.mrb[0].mxu0
      %v1470 = vpop.f32.mrb[0].mxu0
      %v1471 = vadd.f32 0.0, %v1470
      %v1472 = vpop.f32.mrb[0].mxu0
      %1473 = vmatprep.mubr.bf16.mxu0 0
      %1474 = vmatmul.mubr.bf16.gmra.mrb[0].mxu0 %v1309
      %v1475 = vpop.f32.mrb[0].mxu0
      %v1476 = vadd.f32 0.0, %v1475
      %v1477 = vpop.f32.mrb[0].mxu0
      %v1478 = vpop.f32.mrb[0].mxu0
      %v1479 = vadd.f32 0.0, %v1478
      %v1480 = vpop.f32.mrb[0].mxu0
      %1481 = vmatprep.mubr.bf16.mxu0 0
      %1482 = vmatmul.mubr.bf16.gmra.mrb[0].mxu0 %v1311
      %v1483 = vpop.f32.mrb[0].mxu0
      %v1484 = vadd.f32 0.0, %v1483
      %v1485 = vpop.f32.mrb[0].mxu0
      %v1486 = vpop.f32.mrb[0].mxu0
      %v1487 = vadd.f32 0.0, %v1486
      %v1488 = vpop.f32.mrb[0].mxu0
      %1489 = vmatprep.mubr.bf16.mxu0 0
      %1490 = vmatmul.mubr.bf16.gmra.mrb[0].mxu0 %v1313
      %v1491 = vpop.f32.mrb[0].mxu0
      %v1492 = vadd.f32 0.0, %v1491
      %v1493 = vpop.f32.mrb[0].mxu0
      %v1494 = vpop.f32.mrb[0].mxu0
      %v1495 = vadd.f32 0.0, %v1494
      %v1496 = vpop.f32.mrb[0].mxu0
      %1497 = vmatprep.mubr.bf16.mxu0 0
      %1498 = vmatmul.mubr.bf16.gmra.mrb[0].mxu0 %v1315
      %v1499 = vpop.f32.mrb[0].mxu0
      %v1500 = vadd.f32 0.0, %v1499
      %v1501 = vpop.f32.mrb[0].mxu0
      %v1502 = vpop.f32.mrb[0].mxu0
      %v1503 = vadd.f32 0.0, %v1502
      %v1504 = vpop.f32.mrb[0].mxu0
      %1505 = vmatprep.mubr.bf16.mxu0 0
      %1506 = vmatmul.mubr.bf16.gmra.mrb[0].mxu0 %v1317
      %v1507 = vpop.f32.mrb[0].mxu0
      %v1508 = vadd.f32 0.0, %v1507
      %v1509 = vpop.f32.mrb[0].mxu0
      %v1510 = vpop.f32.mrb[0].mxu0
      %v1511 = vadd.f32 0.0, %v1510
      %v1512 = vpop.f32.mrb[0].mxu0
      %1513 = vmatprep.mubr.bf16.mxu0 0
      %1514 = vmatmul.mubr.bf16.gmra.mrb[0].mxu0 %v1319
      %v1515 = vpop.f32.mrb[0].mxu0
      %v1516 = vadd.f32 0.0, %v1515
      %v1517 = vpop.f32.mrb[0].mxu0
      %v1518 = vpop.f32.mrb[0].mxu0
      %v1519 = vadd.f32 0.0, %v1518
      %v1520 = vpop.f32.mrb[0].mxu0
      %1521 = vmatprep.mubr.bf16.mxu0 0
      %1522 = vmatmul.mubr.bf16.gmra.mrb[0].mxu0 %v1321
      %v1523 = vpop.f32.mrb[0].mxu0
      %v1524 = vadd.f32 0.0, %v1523
      %v1525 = vpop.f32.mrb[0].mxu0
      %v1526 = vpop.f32.mrb[0].mxu0
      %v1527 = vadd.f32 0.0, %v1526
      %v1528 = vpop.f32.mrb[0].mxu0
      %1529 = vmatprep.mubr.bf16.mxu0 0
      %1530 = vmatmul.mubr.bf16.gmra.mrb[0].mxu0 %v1323
      %v1531 = vpop.f32.mrb[0].mxu0
      %v1532 = vadd.f32 0.0, %v1531
      %v1533 = vpop.f32.mrb[0].mxu0
      %v1534 = vpop.f32.mrb[0].mxu0
      %v1535 = vadd.f32 0.0, %v1534
      %v1536 = vpop.f32.mrb[0].mxu0
      %1537 = vmatprep.mubr.bf16.mxu0 0
      %1538 = vmatmul.mubr.bf16.gmra.mrb[0].mxu0 %v1325
      %v1539 = vpop.f32.mrb[0].mxu0
      %v1540 = vadd.f32 0.0, %v1539
      %v1541 = vpop.f32.mrb[0].mxu0
      %v1542 = vpop.f32.mrb[0].mxu0
      %v1543 = vadd.f32 0.0, %v1542
      %v1544 = vpop.f32.mrb[0].mxu0
      %1545 = vmatprep.mubr.bf16.mxu0 0
      %1546 = vmatmul.mubr.bf16.gmra.mrb[0].mxu0 %v1327
      %v1547 = vpop.f32.mrb[0].mxu0
      %v1548 = vadd.f32 0.0, %v1547
      %v1549 = vpop.f32.mrb[0].mxu0
      %v1550 = vpop.f32.mrb[0].mxu0
      %v1551 = vadd.f32 0.0, %v1550
      %v1552 = vpop.f32.mrb[0].mxu0
      %1553 = vdwg.mxu0
      %v1554 = vpack.c.bf16 %v1431, %v1428
      %v1555 = vpack.c.bf16 %v1439, %v1436
      %v1556 = vpack.c.bf16 %v1447, %v1444
      %v1557 = vpack.c.bf16 %v1455, %v1452
      %v1558 = vpack.c.bf16 %v1463, %v1460
      %v1559 = vpack.c.bf16 %v1471, %v1468
      %v1560 = vpack.c.bf16 %v1479, %v1476
      %v1561 = vpack.c.bf16 %v1487, %v1484
      %v1562 = vpack.c.bf16 %v1495, %v1492
      %v1563 = vpack.c.bf16 %v1503, %v1500
      %v1564 = vpack.c.bf16 %v1511, %v1508
      %v1565 = vpack.c.bf16 %v1519, %v1516
      %v1566 = vpack.c.bf16 %v1527, %v1524
      %v1567 = vpack.c.bf16 %v1535, %v1532
      %v1568 = vpack.c.bf16 %v1543, %v1540
      %v1569 = vpack.c.bf16 %v1551, %v1548
      %v1586 = vunpack.c.l.b16 %v1554
      %v1587 = vunpack.c.h.b16 %v1554
      %v1588 = vunpack.c.l.b16 %v1555
      %v1589 = vunpack.c.h.b16 %v1555
      %v1590 = vunpack.c.l.b16 %v1556
      %v1591 = vunpack.c.h.b16 %v1556
      %v1592 = vunpack.c.l.b16 %v1557
      %v1593 = vunpack.c.h.b16 %v1557
      %v1594 = vunpack.c.l.b16 %v1558
      %v1595 = vunpack.c.h.b16 %v1558
      %v1596 = vunpack.c.l.b16 %v1559
      %v1597 = vunpack.c.h.b16 %v1559
      %v1598 = vunpack.c.l.b16 %v1560
      %v1599 = vunpack.c.h.b16 %v1560
      %v1600 = vunpack.c.l.b16 %v1561
      %v1601 = vunpack.c.h.b16 %v1561
      %v1602 = vunpack.c.l.b16 %v1562
      %v1603 = vunpack.c.h.b16 %v1562
      %v1604 = vunpack.c.l.b16 %v1563
      %v1605 = vunpack.c.h.b16 %v1563
      %v1606 = vunpack.c.l.b16 %v1564
      %v1607 = vunpack.c.h.b16 %v1564
      %v1608 = vunpack.c.l.b16 %v1565
      %v1609 = vunpack.c.h.b16 %v1565
      %v1610 = vunpack.c.l.b16 %v1566
      %v1611 = vunpack.c.h.b16 %v1566
      %v1612 = vunpack.c.l.b16 %v1567
      %v1613 = vunpack.c.h.b16 %v1567
      %v1614 = vunpack.c.l.b16 %v1568
      %v1615 = vunpack.c.h.b16 %v1568
      %v1616 = vunpack.c.l.b16 %v1569
      %v1617 = vunpack.c.h.b16 %v1569
      %v1618 = vpack.c.b16 %v1586, %v1586
      %v1619 = vpack.c.b16 %v1587, %v1587
      %v1620 = vpack.c.b16 %v1588, %v1588
      %v1621 = vpack.c.b16 %v1589, %v1589
      %v1622 = vpack.c.b16 %v1590, %v1590
      %v1623 = vpack.c.b16 %v1591, %v1591
      %v1624 = vpack.c.b16 %v1592, %v1592
      %v1625 = vpack.c.b16 %v1593, %v1593
      %v1626 = vpack.c.b16 %v1594, %v1594
      %v1627 = vpack.c.b16 %v1595, %v1595
      %v1628 = vpack.c.b16 %v1596, %v1596
      %v1629 = vpack.c.b16 %v1597, %v1597
      %v1630 = vpack.c.b16 %v1598, %v1598
      %v1631 = vpack.c.b16 %v1599, %v1599
      %v1632 = vpack.c.b16 %v1600, %v1600
      %v1633 = vpack.c.b16 %v1601, %v1601
      %v1634 = vpack.c.b16 %v1602, %v1602
      %v1635 = vpack.c.b16 %v1603, %v1603
      %v1636 = vpack.c.b16 %v1604, %v1604
      %v1637 = vpack.c.b16 %v1605, %v1605
      %v1638 = vpack.c.b16 %v1606, %v1606
      %v1639 = vpack.c.b16 %v1607, %v1607
      %v1640 = vpack.c.b16 %v1608, %v1608
      %v1641 = vpack.c.b16 %v1609, %v1609
      %v1642 = vpack.c.b16 %v1610, %v1610
      %v1643 = vpack.c.b16 %v1611, %v1611
      %v1644 = vpack.c.b16 %v1612, %v1612
      %v1645 = vpack.c.b16 %v1613, %v1613
      %v1646 = vpack.c.b16 %v1614, %v1614
      %v1647 = vpack.c.b16 %v1615, %v1615
      %v1648 = vpack.c.b16 %v1616, %v1616
      %v1649 = vpack.c.b16 %v1617, %v1617
      %1682 = vst [vmem:[%s177] sm:$0xf] %v1618
      %1683 = vst [vmem:[%s177 + $0x4] sm:$0xf] %v1619
      %1684 = vst [vmem:[%s177 + $0x8] sm:$0xf] %v1620
      %1685 = vst [vmem:[%s177 + $0xc] sm:$0xf] %v1621
      %1686 = vst [vmem:[%s177 + $0x10] sm:$0xf] %v1622
      %1687 = vst [vmem:[%s177 + $0x14] sm:$0xf] %v1623
      %1688 = vst [vmem:[%s177 + $0x18] sm:$0xf] %v1624
      %1689 = vst [vmem:[%s177 + $0x1c] sm:$0xf] %v1625
      %1690 = vst [vmem:[%s177 + $0x20] sm:$0xf] %v1626
      %1691 = vst [vmem:[%s177 + $0x24] sm:$0xf] %v1627
      %1692 = vst [vmem:[%s177 + $0x28] sm:$0xf] %v1628
      %1693 = vst [vmem:[%s177 + $0x2c] sm:$0xf] %v1629
      %1694 = vst [vmem:[%s177 + $0x30] sm:$0xf] %v1630
      %1695 = vst [vmem:[%s177 + $0x34] sm:$0xf] %v1631
      %1696 = vst [vmem:[%s177 + $0x38] sm:$0xf] %v1632
      %1697 = vst [vmem:[%s177 + $0x3c] sm:$0xf] %v1633
      %1698 = vst [vmem:[%s177 + $0x40] sm:$0xf] %v1634
      %1699 = vst [vmem:[%s177 + $0x44] sm:$0xf] %v1635
      %1700 = vst [vmem:[%s177 + $0x48] sm:$0xf] %v1636
      %1701 = vst [vmem:[%s177 + $0x4c] sm:$0xf] %v1637
      %1702 = vst [vmem:[%s177 + $0x50] sm:$0xf] %v1638
      %1703 = vst [vmem:[%s177 + $0x54] sm:$0xf] %v1639
      %1704 = vst [vmem:[%s177 + $0x58] sm:$0xf] %v1640
      %1705 = vst [vmem:[%s177 + $0x5c] sm:$0xf] %v1641
      %1706 = vst [vmem:[%s177 + $0x60] sm:$0xf] %v1642
      %1707 = vst [vmem:[%s177 + $0x64] sm:$0xf] %v1643
      %1708 = vst [vmem:[%s177 + $0x68] sm:$0xf] %v1644
      %1709 = vst [vmem:[%s177 + $0x6c] sm:$0xf] %v1645
      %1710 = vst [vmem:[%s177 + $0x70] sm:$0xf] %v1646
      %1711 = vst [vmem:[%s177 + $0x74] sm:$0xf] %v1647
      %1712 = vst [vmem:[%s177 + $0x78] sm:$0xf] %v1648
      %1713 = vst [vmem:[%s177 + $0x7c] sm:$0xf] %v1649
      %v1714 = vadd.f32 %v1428, %v1431
      %v1715 = vadd.f32 %v1714, %v1436
      %v1716 = vadd.f32 %v1715, %v1439
      %v1717 = vadd.f32 %v1716, %v1444
      %v1718 = vadd.f32 %v1717, %v1447
      %v1719 = vadd.f32 %v1718, %v1452
      %v1720 = vadd.f32 %v1719, %v1455
      %v1721 = vadd.f32 %v1720, %v1460
      %v1722 = vadd.f32 %v1721, %v1463
      %v1723 = vadd.f32 %v1722, %v1468
      %v1724 = vadd.f32 %v1723, %v1471
      %v1725 = vadd.f32 %v1724, %v1476
      %v1726 = vadd.f32 %v1725, %v1479
      %v1727 = vadd.f32 %v1726, %v1484
      %v1728 = vadd.f32 %v1727, %v1487
      %v1729 = vadd.f32 %v1728, %v1492
      %v1730 = vadd.f32 %v1729, %v1495
      %v1731 = vadd.f32 %v1730, %v1500
      %v1732 = vadd.f32 %v1731, %v1503
      %v1733 = vadd.f32 %v1732, %v1508
      %v1734 = vadd.f32 %v1733, %v1511
      %v1735 = vadd.f32 %v1734, %v1516
      %v1736 = vadd.f32 %v1735, %v1519
      %v1737 = vadd.f32 %v1736, %v1524
      %v1738 = vadd.f32 %v1737, %v1527
      %v1739 = vadd.f32 %v1738, %v1532
      %v1740 = vadd.f32 %v1739, %v1535
      %v1741 = vadd.f32 %v1740, %v1540
      %v1742 = vadd.f32 %v1741, %v1543
      %v1743 = vadd.f32 %v1742, %v1548
      %v1744 = vadd.f32 %v1743, %v1551
      %v1745 = vrot.slane %v1744, 4
      %v1746 = vadd.f32 %v1744, %v1745
      %v1747 = vrot.slane %v1746, 2
      %v1748 = vadd.f32 %v1746, %v1747
      %v1749 = vrot.slane %v1748, 1
      %v1750 = vadd.f32 %v1748, %v1749
      %v1751 = vmul.f32 %v1428, %v1428
      %v1752 = vmul.f32 %v1431, %v1431
      %v1753 = vmul.f32 %v1436, %v1436
      %v1754 = vmul.f32 %v1439, %v1439
      %v1755 = vmul.f32 %v1444, %v1444
      %v1756 = vmul.f32 %v1447, %v1447
      %v1757 = vmul.f32 %v1452, %v1452
      %v1758 = vmul.f32 %v1455, %v1455
      %v1759 = vmul.f32 %v1460, %v1460
      %v1760 = vmul.f32 %v1463, %v1463
      %v1761 = vmul.f32 %v1468, %v1468
      %v1762 = vmul.f32 %v1471, %v1471
      %v1763 = vmul.f32 %v1476, %v1476
      %v1764 = vmul.f32 %v1479, %v1479
      %v1765 = vmul.f32 %v1484, %v1484
      %v1766 = vmul.f32 %v1487, %v1487
      %v1767 = vmul.f32 %v1492, %v1492
      %v1768 = vmul.f32 %v1495, %v1495
      %v1769 = vmul.f32 %v1500, %v1500
      %v1770 = vmul.f32 %v1503, %v1503
      %v1771 = vmul.f32 %v1508, %v1508
      %v1772 = vmul.f32 %v1511, %v1511
      %v1773 = vmul.f32 %v1516, %v1516
      %v1774 = vmul.f32 %v1519, %v1519
      %v1775 = vmul.f32 %v1524, %v1524
      %v1776 = vmul.f32 %v1527, %v1527
      %v1777 = vmul.f32 %v1532, %v1532
      %v1778 = vmul.f32 %v1535, %v1535
      %v1779 = vmul.f32 %v1540, %v1540
      %v1780 = vmul.f32 %v1543, %v1543
      %v1781 = vmul.f32 %v1548, %v1548
      %v1782 = vmul.f32 %v1551, %v1551
      %v1783 = vadd.f32 %v1751, %v1752
      %v1784 = vadd.f32 %v1783, %v1753
      %v1785 = vadd.f32 %v1784, %v1754
      %v1786 = vadd.f32 %v1785, %v1755
      %v1787 = vadd.f32 %v1786, %v1756
      %v1788 = vadd.f32 %v1787, %v1757
      %v1789 = vadd.f32 %v1788, %v1758
      %v1790 = vadd.f32 %v1789, %v1759
      %v1791 = vadd.f32 %v1790, %v1760
      %v1792 = vadd.f32 %v1791, %v1761
      %v1793 = vadd.f32 %v1792, %v1762
      %v1794 = vadd.f32 %v1793, %v1763
      %v1795 = vadd.f32 %v1794, %v1764
      %v1796 = vadd.f32 %v1795, %v1765
      %v1797 = vadd.f32 %v1796, %v1766
      %v1798 = vadd.f32 %v1797, %v1767
      %v1799 = vadd.f32 %v1798, %v1768
      %v1800 = vadd.f32 %v1799, %v1769
      %v1801 = vadd.f32 %v1800, %v1770
      %v1802 = vadd.f32 %v1801, %v1771
      %v1803 = vadd.f32 %v1802, %v1772
      %v1804 = vadd.f32 %v1803, %v1773
      %v1805 = vadd.f32 %v1804, %v1774
      %v1806 = vadd.f32 %v1805, %v1775
      %v1807 = vadd.f32 %v1806, %v1776
      %v1808 = vadd.f32 %v1807, %v1777
      %v1809 = vadd.f32 %v1808, %v1778
      %v1810 = vadd.f32 %v1809, %v1779
      %v1811 = vadd.f32 %v1810, %v1780
      %v1812 = vadd.f32 %v1811, %v1781
      %v1813 = vadd.f32 %v1812, %v1782
      %v1814 = vrot.slane %v1813, 4
      %v1815 = vadd.f32 %v1813, %v1814
      %v1816 = vrot.slane %v1815, 2
      %v1817 = vadd.f32 %v1815, %v1816
      %v1818 = vrot.slane %v1817, 1
      %v1819 = vadd.f32 %v1817, %v1818
      %vm1820 = vcmask 1040384
      %v1821 = vsel %vm1820, %v1750, %v1819
      %vm1822 = vcmask 1041408
      %v1823 = vsel %vm1822, %v1821, 0.0
      %1824 = vst [vmem:[%s181] sm:$0xff] %v1823
      %p1825 = scmp.lt.s32.totalorder %s15, 1
      %s1826 = scalar_select %p1825, %s15, 1
      %s1827 = smul.addr %s1826, 32
      %s1828 = smul.addr %s1827, 4
      %s1829 = scalar_lea.vmem %s2, %s1828
      %p1830 = scmp.lt.s32.totalorder %s15, 1
      %s1831 = scalar_select %p1830, %s15, 1
      %s1832 = smul.addr %s1831, 8
      %s1833 = scalar_lea.vmem %s3, %s1832
      // Predicated region
      $region29: #{double_conv.2} parent=27 // pred_check
        %p1834 = pneg %p80
      $region30: #{double_conv.2} parent=27 // pred_check_branch
        %1836 = sbr.rel (%p1834) target = $region32
      $region31: #{double_conv.2} parent=27 // pred_region
        _
      $region32: #{double_conv.2} parent=27 // pred_fallthru
        _
      // Predicated region
      $region33: #{double_conv.2} parent=27 // pred_check
        %p1837 = pneg %p106
      $region34: #{double_conv.2} parent=27 // pred_check_branch
        %1839 = sbr.rel (%p1837) target = $region36
      $region35: #{double_conv.2} parent=27 // pred_region
        _
      $region36: #{double_conv.2} parent=27 // pred_fallthru
        _
    $region28: #{double_conv.2} parent=5 // pred_fallthru
      _
    %p1840 = scmp.le.s32.totalorder 2, %s10
    // Predicated region
    $region37: #{double_conv.2} parent=5 // pred_check
      %p1841 = pneg %p1840
    $region38: #{double_conv.2} parent=5 // pred_check_branch
      %1843 = sbr.rel (%p1841) target = $region40
    $region39: #{double_conv.2} parent=5 // pred_region
      %s1844 = ssub.s32 %s10, 2
      // Predicated region
      $region41: #{double_conv.2} parent=39 // pred_check
        %p1845 = pneg %p86
      $region42: #{double_conv.2} parent=39 // pred_check_branch
        %1847 = sbr.rel (%p1845) target = $region44
      $region43: #{double_conv.2} parent=39 // pred_region
        %p1848 = scmp.lt.s32.totalorder %s16, 1
        %s1849 = scalar_select %p1848, %s16, 1
        %s1850 = smul.addr %s1849, 32
        %s1851 = smul.addr %s1850, 4
        %s1852 = scalar_lea.vmem %s2, %s1851
      $region44: #{double_conv.2} parent=39 // pred_fallthru
        _
      // Predicated region
      $region45: #{double_conv.2} parent=39 // pred_check
        %p1853 = pneg %p112
      $region46: #{double_conv.2} parent=39 // pred_check_branch
        %1855 = sbr.rel (%p1853) target = $region48
      $region47: #{double_conv.2} parent=39 // pred_region
        %p1856 = scmp.lt.s32.totalorder %s16, 1
        %s1857 = scalar_select %p1856, %s16, 1
        %s1858 = smul.addr %s1857, 8
        %s1859 = scalar_lea.vmem %s3, %s1858
      $region48: #{double_conv.2} parent=39 // pred_fallthru
        _
    $region40: #{double_conv.2} parent=5 // pred_fallthru
      _
  $region6: #{double_conv.2} parent=0 // loop_footer
    %s14 = sadd.s32 1, %s10
  $region7: #{double_conv.2} parent=0 // loop_footer_branch
    %9 = sbr.rel target = $region3
  $region8: #{double_conv.2} parent=0 // loop_exit
    _

// kernel: double_conv.3
$region0: #{double_conv.3}
  #allocation0 [shape = 'u32[]', space=smem, size = 0x4, offset = 0x4, fixed_abs, tag = 'smem constant byte address 0x4 - core index']
  #allocation1 [shape = 'u32[144,128]{1,0:T(1,128)}', space=vmem, size = 0x12000, scoped, tag = 'internal scratch']
  %s0 = inlined_call_operand.vmem [shape: bf16[2,256,128], index: 0, kind: input, shape index: {}]
  %s1 = inlined_call_operand.vmem [shape: f32[1,128], index: 1, kind: input, shape index: {}]
  %s2 = inlined_call_operand.vmem [shape: f32[1,128], index: 2, kind: input, shape index: {}]
  %s3 = inlined_call_operand.vmem [shape: bf16[128,128], index: 3, kind: input, shape index: {}]
  %s4 = inlined_call_operand.vmem [shape: bf16[2,256,128], index: 4, kind: output, shape index: {0}]
  %s5 = inlined_call_operand.vmem [shape: f32[2,8,128], index: 5, kind: output, shape index: {1}]
  %6 = xla_tuple %s4, %s5
  %s7 = sld [smem:[#allocation0]]
  $region57: #{double_conv.3} parent=0
    _
  %s9 = ssub.s32 1, %s7
  %s10 = scalar_select 0, %s9, %s7
  loop: start=0, step=1, limit=4
  $region2: #{double_conv.3} parent=0 // loop_pre_header
    _
  $region3: #{double_conv.3} parent=0 // loop_header
    %s12 = sphi 0, %s16
    %p13 = scmp.ge.s32.totalorder %s12, 4
    %s22 = sphi 0, %s24
    %s25 = sphi 0, %s22
    %s26 = sphi 0, %s25
    %s42 = sphi 0, %s26
    %s46 = sphi 0, %s46
    %s48 = sphi 0, %s46
    %s49 = sphi 0, %s48
    %s63 = sphi 0, %s49
    %s67 = sphi 0, %s67
    %s69 = sphi 0, %s67
    %s70 = sphi 0, %s69
    %s84 = sphi 0, %s70
    %s88 = sphi 0, %s88
    %s90 = sphi 0, %s88
    %s91 = sphi 0, %s90
    %s105 = sphi 0, %s91
    %s111 = sphi 0, %s113
    %s114 = sphi 0, %s111
    %s115 = sphi 0, %s114
    %s131 = sphi 0, %s115
    %s137 = sphi 0, %s139
    %s140 = sphi 0, %s137
    %s141 = sphi 0, %s140
    %s157 = sphi 0, %s141
  $region4: #{double_conv.3} parent=0 // loop_header_branch
    %15 = sbr.rel (%p13) target = $region8
  $region5: #{double_conv.3} parent=0 // loop_body
    %s17 = ssub.s32 %s12, 1
    %s18 = ssub.s32 %s12, 2
    %s19 = sadd.s32 %s12, 1
    %s20 = ssub.s32 %s12, %s19
    %p21 = scmp.eq.s32.totalorder %s20, 0
    %s23 = sadd.s32 %s22, 1
    %s24 = scalar_select %p21, %s22, %s23
    %p27 = pneg %p21
    %p28 = scmp.eq.s32.totalorder %s12, 1
    %p29 = por %p27, %p28
    %p30 = scmp.ne.s32.totalorder %s22, %s25
    %p31 = scmp.eq.s32.totalorder %s12, 0
    %p32 = por %p30, %p31
    %p33 = scmp.ne.s32.totalorder %s22, %s25
    %p34 = scmp.eq.s32.totalorder %s17, 1
    %p35 = por %p33, %p34
    %p36 = scmp.ne.s32.totalorder %s25, %s26
    %p37 = scmp.eq.s32.totalorder %s17, 0
    %p38 = por %p36, %p37
    %p39 = scmp.ne.s32.totalorder %s25, %s26
    %p40 = scmp.eq.s32.totalorder %s18, 1
    %p41 = por %p39, %p40
    %p43 = scmp.ne.s32.totalorder %s26, %s42
    %p44 = scmp.eq.s32.totalorder %s18, 0
    %p45 = por %p43, %p44
    %s47 = sadd.s32 %s46, 1
    %p50 = scmp.eq.s32.totalorder %s12, 1
    %p51 = scmp.ne.s32.totalorder %s46, %s48
    %p52 = scmp.eq.s32.totalorder %s12, 0
    %p53 = por %p51, %p52
    %p54 = scmp.ne.s32.totalorder %s46, %s48
    %p55 = scmp.eq.s32.totalorder %s17, 1
    %p56 = por %p54, %p55
    %p57 = scmp.ne.s32.totalorder %s48, %s49
    %p58 = scmp.eq.s32.totalorder %s17, 0
    %p59 = por %p57, %p58
    %p60 = scmp.ne.s32.totalorder %s48, %s49
    %p61 = scmp.eq.s32.totalorder %s18, 1
    %p62 = por %p60, %p61
    %p64 = scmp.ne.s32.totalorder %s49, %s63
    %p65 = scmp.eq.s32.totalorder %s18, 0
    %p66 = por %p64, %p65
    %s68 = sadd.s32 %s67, 1
    %p71 = scmp.eq.s32.totalorder %s12, 1
    %p72 = scmp.ne.s32.totalorder %s67, %s69
    %p73 = scmp.eq.s32.totalorder %s12, 0
    %p74 = por %p72, %p73
    %p75 = scmp.ne.s32.totalorder %s67, %s69
    %p76 = scmp.eq.s32.totalorder %s17, 1
    %p77 = por %p75, %p76
    %p78 = scmp.ne.s32.totalorder %s69, %s70
    %p79 = scmp.eq.s32.totalorder %s17, 0
    %p80 = por %p78, %p79
    %p81 = scmp.ne.s32.totalorder %s69, %s70
    %p82 = scmp.eq.s32.totalorder %s18, 1
    %p83 = por %p81, %p82
    %p85 = scmp.ne.s32.totalorder %s70, %s84
    %p86 = scmp.eq.s32.totalorder %s18, 0
    %p87 = por %p85, %p86
    %s89 = sadd.s32 %s88, 1
    %p92 = scmp.eq.s32.totalorder %s12, 1
    %p93 = scmp.ne.s32.totalorder %s88, %s90
    %p94 = scmp.eq.s32.totalorder %s12, 0
    %p95 = por %p93, %p94
    %p96 = scmp.ne.s32.totalorder %s88, %s90
    %p97 = scmp.eq.s32.totalorder %s17, 1
    %p98 = por %p96, %p97
    %p99 = scmp.ne.s32.totalorder %s90, %s91
    %p100 = scmp.eq.s32.totalorder %s17, 0
    %p101 = por %p99, %p100
    %p102 = scmp.ne.s32.totalorder %s90, %s91
    %p103 = scmp.eq.s32.totalorder %s18, 1
    %p104 = por %p102, %p103
    %p106 = scmp.ne.s32.totalorder %s91, %s105
    %p107 = scmp.eq.s32.totalorder %s18, 0
    %p108 = por %p106, %p107
    %s109 = ssub.s32 %s12, %s19
    %p110 = scmp.eq.s32.totalorder %s109, 0
    %s112 = sadd.s32 %s111, 1
    %s113 = scalar_select %p110, %s111, %s112
    %p116 = pneg %p110
    %p117 = scmp.eq.s32.totalorder %s12, 1
    %p118 = por %p116, %p117
    %p119 = scmp.ne.s32.totalorder %s111, %s114
    %p120 = scmp.eq.s32.totalorder %s12, 0
    %p121 = por %p119, %p120
    %p122 = scmp.ne.s32.totalorder %s111, %s114
    %p123 = scmp.eq.s32.totalorder %s17, 1
    %p124 = por %p122, %p123
    %p125 = scmp.ne.s32.totalorder %s114, %s115
    %p126 = scmp.eq.s32.totalorder %s17, 0
    %p127 = por %p125, %p126
    %p128 = scmp.ne.s32.totalorder %s114, %s115
    %p129 = scmp.eq.s32.totalorder %s18, 1
    %p130 = por %p128, %p129
    %p132 = scmp.ne.s32.totalorder %s115, %s131
    %p133 = scmp.eq.s32.totalorder %s18, 0
    %p134 = por %p132, %p133
    %s135 = ssub.s32 %s12, %s19
    %p136 = scmp.eq.s32.totalorder %s135, 0
    %s138 = sadd.s32 %s137, 1
    %s139 = scalar_select %p136, %s137, %s138
    %p142 = pneg %p136
    %p143 = scmp.eq.s32.totalorder %s12, 1
    %p144 = por %p142, %p143
    %p145 = scmp.ne.s32.totalorder %s137, %s140
    %p146 = scmp.eq.s32.totalorder %s12, 0
    %p147 = por %p145, %p146
    %p148 = scmp.ne.s32.totalorder %s137, %s140
    %p149 = scmp.eq.s32.totalorder %s17, 1
    %p150 = por %p148, %p149
    %p151 = scmp.ne.s32.totalorder %s140, %s141
    %p152 = scmp.eq.s32.totalorder %s17, 0
    %p153 = por %p151, %p152
    %p154 = scmp.ne.s32.totalorder %s140, %s141
    %p155 = scmp.eq.s32.totalorder %s18, 1
    %p156 = por %p154, %p155
    %p158 = scmp.ne.s32.totalorder %s141, %s157
    %p159 = scmp.eq.s32.totalorder %s18, 0
    %p160 = por %p158, %p159
    %p161 = scmp.le.s32.totalorder 1, %s12
    %p162 = scmp.lt.s32.totalorder %s12, 3
    %p163 = pnand %p161, %p162
    %p164 = pneg %p163
    // Predicated region
    $region9: #{double_conv.3} parent=5 // pred_check
      _
    $region10: #{double_conv.3} parent=5 // pred_check_branch
      %166 = sbr.rel (%p163) target = $region12
    $region11: #{double_conv.3} parent=5 // pred_region
      %s167 = ssub.s32 %s12, 1
      // Predicated region
      $region13: #{double_conv.3} parent=11 // pred_check
        %p168 = pneg %p59
      $region14: #{double_conv.3} parent=11 // pred_check_branch
        %170 = sbr.rel (%p168) target = $region16
      $region15: #{double_conv.3} parent=11 // pred_region
        _
      $region16: #{double_conv.3} parent=11 // pred_fallthru
        _
      // Predicated region
      $region17: #{double_conv.3} parent=11 // pred_check
        %p171 = pneg %p80
      $region18: #{double_conv.3} parent=11 // pred_check_branch
        %173 = sbr.rel (%p171) target = $region20
      $region19: #{double_conv.3} parent=11 // pred_region
        _
      $region20: #{double_conv.3} parent=11 // pred_fallthru
        _
      // Predicated region
      $region21: #{double_conv.3} parent=11 // pred_check
        %p174 = pneg %p101
      $region22: #{double_conv.3} parent=11 // pred_check_branch
        %176 = sbr.rel (%p174) target = $region24
      $region23: #{double_conv.3} parent=11 // pred_region
        _
      $region24: #{double_conv.3} parent=11 // pred_fallthru
        _
    $region12: #{double_conv.3} parent=5 // pred_fallthru
      _
    %p177 = scmp.lt.s32.totalorder %s12, 2
    // Predicated region
    $region25: #{double_conv.3} parent=5 // pred_check
      %p178 = pneg %p177
    $region26: #{double_conv.3} parent=5 // pred_check_branch
      %180 = sbr.rel (%p178) target = $region28
    $region27: #{double_conv.3} parent=5 // pred_region
      // Predicated region
      $region29: #{double_conv.3} parent=27 // pred_check
        %p181 = pneg %p32
      $region30: #{double_conv.3} parent=27 // pred_check_branch
        %183 = sbr.rel (%p181) target = $region32
      $region31: #{double_conv.3} parent=27 // pred_region
        %p184 = scmp.lt.s32.totalorder %s12, 1
        %s185 = scalar_select %p184, %s12, 1
        %s186 = smul.addr %s185, 32
        %s187 = smul.addr %s186, 4
        %s188 = scalar_lea.vmem %s0, %s187
      $region32: #{double_conv.3} parent=27 // pred_fallthru
        _
    $region28: #{double_conv.3} parent=5 // pred_fallthru
      _
    %p189 = scmp.le.s32.totalorder 1, %s12
    %p190 = scmp.lt.s32.totalorder %s12, 3
    %p191 = pnand %p189, %p190
    %p192 = pneg %p191
    // Predicated region
    $region33: #{double_conv.3} parent=5 // pred_check
      _
    $region34: #{double_conv.3} parent=5 // pred_check_branch
      %194 = sbr.rel (%p191) target = $region36
    $region35: #{double_conv.3} parent=5 // pred_region
      %s195 = ssub.s32 %s12, 1
      %p196 = scmp.lt.s32.totalorder %s17, 1
      %s197 = scalar_select %p196, %s17, 1
      %s198 = smul.addr %s197, 32
      %s199 = smul.addr %s198, 4
      %s200 = scalar_lea.vmem %s0, %s199
      %p201 = pneg %p38
      %p202 = pneg %p35
      %p203 = pneg %p59
      %p204 = pneg %p56
      %p205 = pneg %p80
      %p206 = pneg %p77
      %p207 = pneg %p101
      %p208 = pneg %p98
      %p209 = pneg %p127
      %p210 = pneg %p124
      %p211 = scmp.lt.s32.totalorder %s17, 1
      %s212 = scalar_select %p211, %s17, 1
      %s213 = smul.addr %s212, 32
      %s214 = smul.addr %s213, 4
      %s215 = scalar_lea.vmem %s4, %s214
      %p216 = pneg %p153
      %p217 = pneg %p150
      %p218 = scmp.lt.s32.totalorder %s17, 1
      %s219 = scalar_select %p218, %s17, 1
      %s220 = smul.addr %s219, 8
      %s221 = scalar_lea.vmem %s5, %s220
      %p222 = scmp.lt.s32.totalorder %s17, 1
      %s223 = scalar_select %p222, %s17, 1
      %s224 = smul.addr %s223, 32
      %s225 = smul.addr %s224, 4
      %s226 = scalar_lea.vmem %s0, %s225
      %p227 = scmp.lt.s32.totalorder %s17, 1
      %s228 = scalar_select %p227, %s17, 1
      %s229 = smul.addr %s228, 32
      %s230 = smul.addr %s229, 4
      %s231 = scalar_lea.vmem %s4, %s230
      %p232 = scmp.lt.s32.totalorder %s17, 1
      %s233 = scalar_select %p232, %s17, 1
      %s234 = smul.addr %s233, 8
      %s235 = scalar_lea.vmem %s5, %s234
      %v237 = vld [vmem:[%s226] sm:$0xf]
      %v238 = vld [vmem:[%s226 + $0x4] sm:$0xf]
      %v239 = vld [vmem:[%s226 + $0x8] sm:$0xf]
      %v240 = vld [vmem:[%s226 + $0xc] sm:$0xf]
      %v241 = vld [vmem:[%s226 + $0x10] sm:$0xf]
      %v242 = vld [vmem:[%s226 + $0x14] sm:$0xf]
      %v243 = vld [vmem:[%s226 + $0x18] sm:$0xf]
      %v244 = vld [vmem:[%s226 + $0x1c] sm:$0xf]
      %v245 = vld [vmem:[%s226 + $0x20] sm:$0xf]
      %v246 = vld [vmem:[%s226 + $0x24] sm:$0xf]
      %v247 = vld [vmem:[%s226 + $0x28] sm:$0xf]
      %v248 = vld [vmem:[%s226 + $0x2c] sm:$0xf]
      %v249 = vld [vmem:[%s226 + $0x30] sm:$0xf]
      %v250 = vld [vmem:[%s226 + $0x34] sm:$0xf]
      %v251 = vld [vmem:[%s226 + $0x38] sm:$0xf]
      %v252 = vld [vmem:[%s226 + $0x3c] sm:$0xf]
      %v253 = vld [vmem:[%s226 + $0x40] sm:$0xf]
      %v254 = vld [vmem:[%s226 + $0x44] sm:$0xf]
      %v255 = vld [vmem:[%s226 + $0x48] sm:$0xf]
      %v256 = vld [vmem:[%s226 + $0x4c] sm:$0xf]
      %v257 = vld [vmem:[%s226 + $0x50] sm:$0xf]
      %v258 = vld [vmem:[%s226 + $0x54] sm:$0xf]
      %v259 = vld [vmem:[%s226 + $0x58] sm:$0xf]
      %v260 = vld [vmem:[%s226 + $0x5c] sm:$0xf]
      %v261 = vld [vmem:[%s226 + $0x60] sm:$0xf]
      %v262 = vld [vmem:[%s226 + $0x64] sm:$0xf]
      %v263 = vld [vmem:[%s226 + $0x68] sm:$0xf]
      %v264 = vld [vmem:[%s226 + $0x6c] sm:$0xf]
      %v265 = vld [vmem:[%s226 + $0x70] sm:$0xf]
      %v266 = vld [vmem:[%s226 + $0x74] sm:$0xf]
      %v267 = vld [vmem:[%s226 + $0x78] sm:$0xf]
      %v268 = vld [vmem:[%s226 + $0x7c] sm:$0xf]
      %v269 = vunpack.c.l.bf16 %v237
      %v270 = vunpack.c.l.bf16 %v238
      %v271 = vunpack.c.l.bf16 %v239
      %v272 = vunpack.c.l.bf16 %v240
      %v273 = vunpack.c.l.bf16 %v241
      %v274 = vunpack.c.l.bf16 %v242
      %v275 = vunpack.c.l.bf16 %v243
      %v276 = vunpack.c.l.bf16 %v244
      %v277 = vunpack.c.l.bf16 %v245
      %v278 = vunpack.c.l.bf16 %v246
      %v279 = vunpack.c.l.bf16 %v247
      %v280 = vunpack.c.l.bf16 %v248
      %v281 = vunpack.c.l.bf16 %v249
      %v282 = vunpack.c.l.bf16 %v250
      %v283 = vunpack.c.l.bf16 %v251
      %v284 = vunpack.c.l.bf16 %v252
      %v285 = vunpack.c.l.bf16 %v253
      %v286 = vunpack.c.l.bf16 %v254
      %v287 = vunpack.c.l.bf16 %v255
      %v288 = vunpack.c.l.bf16 %v256
      %v289 = vunpack.c.l.bf16 %v257
      %v290 = vunpack.c.l.bf16 %v258
      %v291 = vunpack.c.l.bf16 %v259
      %v292 = vunpack.c.l.bf16 %v260
      %v293 = vunpack.c.l.bf16 %v261
      %v294 = vunpack.c.l.bf16 %v262
      %v295 = vunpack.c.l.bf16 %v263
      %v296 = vunpack.c.l.bf16 %v264
      %v297 = vunpack.c.l.bf16 %v265
      %v298 = vunpack.c.l.bf16 %v266
      %v299 = vunpack.c.l.bf16 %v267
      %v300 = vunpack.c.l.bf16 %v268
      %v301 = vld [vmem:[%s1] sm:$0x1]
      %v303 = vlaneseq
      %v304 = vshrl.u32 %v303, 7
      %v305 = vsub.s32 0, %v304
      %v306 = vrot.slane %v301, %v305
      %v308 = vmul.f32 %v269, %v306
      %v309 = vmul.f32 %v270, %v306
      %v310 = vmul.f32 %v271, %v306
      %v311 = vmul.f32 %v272, %v306
      %v312 = vmul.f32 %v273, %v306
      %v313 = vmul.f32 %v274, %v306
      %v314 = vmul.f32 %v275, %v306
      %v315 = vmul.f32 %v276, %v306
      %v316 = vmul.f32 %v277, %v306
      %v317 = vmul.f32 %v278, %v306
      %v318 = vmul.f32 %v279, %v306
      %v319 = vmul.f32 %v280, %v306
      %v320 = vmul.f32 %v281, %v306
      %v321 = vmul.f32 %v282, %v306
      %v322 = vmul.f32 %v283, %v306
      %v323 = vmul.f32 %v284, %v306
      %v324 = vmul.f32 %v285, %v306
      %v325 = vmul.f32 %v286, %v306
      %v326 = vmul.f32 %v287, %v306
      %v327 = vmul.f32 %v288, %v306
      %v328 = vmul.f32 %v289, %v306
      %v329 = vmul.f32 %v290, %v306
      %v330 = vmul.f32 %v291, %v306
      %v331 = vmul.f32 %v292, %v306
      %v332 = vmul.f32 %v293, %v306
      %v333 = vmul.f32 %v294, %v306
      %v334 = vmul.f32 %v295, %v306
      %v335 = vmul.f32 %v296, %v306
      %v336 = vmul.f32 %v297, %v306
      %v337 = vmul.f32 %v298, %v306
      %v338 = vmul.f32 %v299, %v306
      %v339 = vmul.f32 %v300, %v306
      %v340 = vld [vmem:[%s2] sm:$0x1]
      %v342 = vlaneseq
      %v343 = vshrl.u32 %v342, 7
      %v344 = vsub.s32 0, %v343
      %v345 = vrot.slane %v340, %v344
      %v347 = vadd.f32 %v308, %v345
      %v348 = vadd.f32 %v309, %v345
      %v349 = vadd.f32 %v310, %v345
      %v350 = vadd.f32 %v311, %v345
      %v351 = vadd.f32 %v312, %v345
      %v352 = vadd.f32 %v313, %v345
      %v353 = vadd.f32 %v314, %v345
      %v354 = vadd.f32 %v315, %v345
      %v355 = vadd.f32 %v316, %v345
      %v356 = vadd.f32 %v317, %v345
      %v357 = vadd.f32 %v318, %v345
      %v358 = vadd.f32 %v319, %v345
      %v359 = vadd.f32 %v320, %v345
      %v360 = vadd.f32 %v321, %v345
      %v361 = vadd.f32 %v322, %v345
      %v362 = vadd.f32 %v323, %v345
      %v363 = vadd.f32 %v324, %v345
      %v364 = vadd.f32 %v325, %v345
      %v365 = vadd.f32 %v326, %v345
      %v366 = vadd.f32 %v327, %v345
      %v367 = vadd.f32 %v328, %v345
      %v368 = vadd.f32 %v329, %v345
      %v369 = vadd.f32 %v330, %v345
      %v370 = vadd.f32 %v331, %v345
      %v371 = vadd.f32 %v332, %v345
      %v372 = vadd.f32 %v333, %v345
      %v373 = vadd.f32 %v334, %v345
      %v374 = vadd.f32 %v335, %v345
      %v375 = vadd.f32 %v336, %v345
      %v376 = vadd.f32 %v337, %v345
      %v377 = vadd.f32 %v338, %v345
      %v378 = vadd.f32 %v339, %v345
      %v379 = vmax.f32 %v347, 0.0
      %v380 = vmax.f32 %v348, 0.0
      %v381 = vmax.f32 %v349, 0.0
      %v382 = vmax.f32 %v350, 0.0
      %v383 = vmax.f32 %v351, 0.0
      %v384 = vmax.f32 %v352, 0.0
      %v385 = vmax.f32 %v353, 0.0
      %v386 = vmax.f32 %v354, 0.0
      %v387 = vmax.f32 %v355, 0.0
      %v388 = vmax.f32 %v356, 0.0
      %v389 = vmax.f32 %v357, 0.0
      %v390 = vmax.f32 %v358, 0.0
      %v391 = vmax.f32 %v359, 0.0
      %v392 = vmax.f32 %v360, 0.0
      %v393 = vmax.f32 %v361, 0.0
      %v394 = vmax.f32 %v362, 0.0
      %v395 = vmax.f32 %v363, 0.0
      %v396 = vmax.f32 %v364, 0.0
      %v397 = vmax.f32 %v365, 0.0
      %v398 = vmax.f32 %v366, 0.0
      %v399 = vmax.f32 %v367, 0.0
      %v400 = vmax.f32 %v368, 0.0
      %v401 = vmax.f32 %v369, 0.0
      %v402 = vmax.f32 %v370, 0.0
      %v403 = vmax.f32 %v371, 0.0
      %v404 = vmax.f32 %v372, 0.0
      %v405 = vmax.f32 %v373, 0.0
      %v406 = vmax.f32 %v374, 0.0
      %v407 = vmax.f32 %v375, 0.0
      %v408 = vmax.f32 %v376, 0.0
      %v409 = vmax.f32 %v377, 0.0
      %v410 = vmax.f32 %v378, 0.0
      %v411 = vpack.c.bf16 %v380, %v379
      %v412 = vpack.c.bf16 %v382, %v381
      %v413 = vpack.c.bf16 %v384, %v383
      %v414 = vpack.c.bf16 %v386, %v385
      %v415 = vpack.c.bf16 %v388, %v387
      %v416 = vpack.c.bf16 %v390, %v389
      %v417 = vpack.c.bf16 %v392, %v391
      %v418 = vpack.c.bf16 %v394, %v393
      %v419 = vpack.c.bf16 %v396, %v395
      %v420 = vpack.c.bf16 %v398, %v397
      %v421 = vpack.c.bf16 %v400, %v399
      %v422 = vpack.c.bf16 %v402, %v401
      %v423 = vpack.c.bf16 %v404, %v403
      %v424 = vpack.c.bf16 %v406, %v405
      %v425 = vpack.c.bf16 %v408, %v407
      %v426 = vpack.c.bf16 %v410, %v409
      %v428 = vshrl.u32 0, 16
      %v430 = vrot.slane %v428, 7
      %v431 = vshll.u32 0, 16
      %v433 = vor.u32 %v430, %v431
      %v435 = vshrl.u32 %v411, 16
      %v437 = vrot.slane %v435, 7
      %v438 = vshll.u32 %v411, 16
      %v440 = vor.u32 %v437, %v438
      %v442 = vshrl.u32 %v412, 16
      %v444 = vrot.slane %v442, 7
      %v445 = vshll.u32 %v412, 16
      %v447 = vor.u32 %v444, %v445
      %v449 = vshrl.u32 %v413, 16
      %v451 = vrot.slane %v449, 7
      %v452 = vshll.u32 %v413, 16
      %v454 = vor.u32 %v451, %v452
      %v456 = vshrl.u32 %v414, 16
      %v458 = vrot.slane %v456, 7
      %v459 = vshll.u32 %v414, 16
      %v461 = vor.u32 %v458, %v459
      %v463 = vshrl.u32 %v415, 16
      %v465 = vrot.slane %v463, 7
      %v466 = vshll.u32 %v415, 16
      %v468 = vor.u32 %v465, %v466
      %v470 = vshrl.u32 %v416, 16
      %v472 = vrot.slane %v470, 7
      %v473 = vshll.u32 %v416, 16
      %v475 = vor.u32 %v472, %v473
      %v477 = vshrl.u32 %v417, 16
      %v479 = vrot.slane %v477, 7
      %v480 = vshll.u32 %v417, 16
      %v482 = vor.u32 %v479, %v480
      %v484 = vshrl.u32 %v418, 16
      %v486 = vrot.slane %v484, 7
      %v487 = vshll.u32 %v418, 16
      %v489 = vor.u32 %v486, %v487
      %v491 = vshrl.u32 %v419, 16
      %v493 = vrot.slane %v491, 7
      %v494 = vshll.u32 %v419, 16
      %v496 = vor.u32 %v493, %v494
      %v498 = vshrl.u32 %v420, 16
      %v500 = vrot.slane %v498, 7
      %v501 = vshll.u32 %v420, 16
      %v503 = vor.u32 %v500, %v501
      %v505 = vshrl.u32 %v421, 16
      %v507 = vrot.slane %v505, 7
      %v508 = vshll.u32 %v421, 16
      %v510 = vor.u32 %v507, %v508
      %v512 = vshrl.u32 %v422, 16
      %v514 = vrot.slane %v512, 7
      %v515 = vshll.u32 %v422, 16
      %v517 = vor.u32 %v514, %v515
      %v519 = vshrl.u32 %v423, 16
      %v521 = vrot.slane %v519, 7
      %v522 = vshll.u32 %v423, 16
      %v524 = vor.u32 %v521, %v522
      %v526 = vshrl.u32 %v424, 16
      %v528 = vrot.slane %v526, 7
      %v529 = vshll.u32 %v424, 16
      %v531 = vor.u32 %v528, %v529
      %v533 = vshrl.u32 %v425, 16
      %v535 = vrot.slane %v533, 7
      %v536 = vshll.u32 %v425, 16
      %v538 = vor.u32 %v535, %v536
      %v540 = vshrl.u32 %v426, 16
      %v542 = vrot.slane %v540, 7
      %v543 = vshll.u32 %v426, 16
      %v545 = vor.u32 %v542, %v543
      %vm580 = vcmask 1040384
      %vm581 = vsmask.f32 256
      %vm582 = vmand %vm580, %vm581
      %v583 = vsel %vm582, 0, %v433
      %v584 = vsel %vm582, 0, %v440
      %v585 = vsel %vm582, 0, %v447
      %v586 = vsel %vm582, 0, %v454
      %v587 = vsel %vm582, 0, %v461
      %v588 = vsel %vm582, 0, %v468
      %v589 = vsel %vm582, 0, %v475
      %v590 = vsel %vm582, 0, %v482
      %v591 = vsel %vm582, 0, %v489
      %v592 = vsel %vm582, 0, %v496
      %v593 = vsel %vm582, 0, %v503
      %v594 = vsel %vm582, 0, %v510
      %v595 = vsel %vm582, 0, %v517
      %v596 = vsel %vm582, 0, %v524
      %v597 = vsel %vm582, 0, %v531
      %v598 = vsel %vm582, 0, %v538
      %v599 = vsel %vm582, 0, %v545
      %v600 = vsel %vm582, %v430, 0
      %v601 = vsel %vm582, %v437, 0
      %v602 = vsel %vm582, %v444, 0
      %v603 = vsel %vm582, %v451, 0
      %v604 = vsel %vm582, %v458, 0
      %v605 = vsel %vm582, %v465, 0
      %v606 = vsel %vm582, %v472, 0
      %v607 = vsel %vm582, %v479, 0
      %v608 = vsel %vm582, %v486, 0
      %v609 = vsel %vm582, %v493, 0
      %v610 = vsel %vm582, %v500, 0
      %v611 = vsel %vm582, %v507, 0
      %v612 = vsel %vm582, %v514, 0
      %v613 = vsel %vm582, %v521, 0
      %v614 = vsel %vm582, %v528, 0
      %v615 = vsel %vm582, %v535, 0
      %v616 = vsel %vm582, %v542, 0
      %vm617 = vsmask.f32 7424
      %v619 = vshrl.u32 %v583, 16
      %v621 = vshll.u32 %v583, 16
      %v623 = vrot.slane %v621, 1
      %v624 = vor.u32 %v619, %v623
      %v626 = vshll.u32 %v600, 16
      %v628 = vrot.slane %v626, 1
      %v629 = vsel %vm617, %v624, %v628
      %v631 = vshrl.u32 %v584, 16
      %v633 = vshll.u32 %v584, 16
      %v635 = vrot.slane %v633, 1
      %v636 = vor.u32 %v631, %v635
      %v638 = vshll.u32 %v601, 16
      %v640 = vrot.slane %v638, 1
      %v641 = vsel %vm617, %v636, %v640
      %v643 = vshrl.u32 %v585, 16
      %v645 = vshll.u32 %v585, 16
      %v647 = vrot.slane %v645, 1
      %v648 = vor.u32 %v643, %v647
      %v650 = vshll.u32 %v602, 16
      %v652 = vrot.slane %v650, 1
      %v653 = vsel %vm617, %v648, %v652
      %v655 = vshrl.u32 %v586, 16
      %v657 = vshll.u32 %v586, 16
      %v659 = vrot.slane %v657, 1
      %v660 = vor.u32 %v655, %v659
      %v662 = vshll.u32 %v603, 16
      %v664 = vrot.slane %v662, 1
      %v665 = vsel %vm617, %v660, %v664
      %v667 = vshrl.u32 %v587, 16
      %v669 = vshll.u32 %v587, 16
      %v671 = vrot.slane %v669, 1
      %v672 = vor.u32 %v667, %v671
      %v674 = vshll.u32 %v604, 16
      %v676 = vrot.slane %v674, 1
      %v677 = vsel %vm617, %v672, %v676
      %v679 = vshrl.u32 %v588, 16
      %v681 = vshll.u32 %v588, 16
      %v683 = vrot.slane %v681, 1
      %v684 = vor.u32 %v679, %v683
      %v686 = vshll.u32 %v605, 16
      %v688 = vrot.slane %v686, 1
      %v689 = vsel %vm617, %v684, %v688
      %v691 = vshrl.u32 %v589, 16
      %v693 = vshll.u32 %v589, 16
      %v695 = vrot.slane %v693, 1
      %v696 = vor.u32 %v691, %v695
      %v698 = vshll.u32 %v606, 16
      %v700 = vrot.slane %v698, 1
      %v701 = vsel %vm617, %v696, %v700
      %v703 = vshrl.u32 %v590, 16
      %v705 = vshll.u32 %v590, 16
      %v707 = vrot.slane %v705, 1
      %v708 = vor.u32 %v703, %v707
      %v710 = vshll.u32 %v607, 16
      %v712 = vrot.slane %v710, 1
      %v713 = vsel %vm617, %v708, %v712
      %v715 = vshrl.u32 %v591, 16
      %v717 = vshll.u32 %v591, 16
      %v719 = vrot.slane %v717, 1
      %v720 = vor.u32 %v715, %v719
      %v722 = vshll.u32 %v608, 16
      %v724 = vrot.slane %v722, 1
      %v725 = vsel %vm617, %v720, %v724
      %v727 = vshrl.u32 %v592, 16
      %v729 = vshll.u32 %v592, 16
      %v731 = vrot.slane %v729, 1
      %v732 = vor.u32 %v727, %v731
      %v734 = vshll.u32 %v609, 16
      %v736 = vrot.slane %v734, 1
      %v737 = vsel %vm617, %v732, %v736
      %v739 = vshrl.u32 %v593, 16
      %v741 = vshll.u32 %v593, 16
      %v743 = vrot.slane %v741, 1
      %v744 = vor.u32 %v739, %v743
      %v746 = vshll.u32 %v610, 16
      %v748 = vrot.slane %v746, 1
      %v749 = vsel %vm617, %v744, %v748
      %v751 = vshrl.u32 %v594, 16
      %v753 = vshll.u32 %v594, 16
      %v755 = vrot.slane %v753, 1
      %v756 = vor.u32 %v751, %v755
      %v758 = vshll.u32 %v611, 16
      %v760 = vrot.slane %v758, 1
      %v761 = vsel %vm617, %v756, %v760
      %v763 = vshrl.u32 %v595, 16
      %v765 = vshll.u32 %v595, 16
      %v767 = vrot.slane %v765, 1
      %v768 = vor.u32 %v763, %v767
      %v770 = vshll.u32 %v612, 16
      %v772 = vrot.slane %v770, 1
      %v773 = vsel %vm617, %v768, %v772
      %v775 = vshrl.u32 %v596, 16
      %v777 = vshll.u32 %v596, 16
      %v779 = vrot.slane %v777, 1
      %v780 = vor.u32 %v775, %v779
      %v782 = vshll.u32 %v613, 16
      %v784 = vrot.slane %v782, 1
      %v785 = vsel %vm617, %v780, %v784
      %v787 = vshrl.u32 %v597, 16
      %v789 = vshll.u32 %v597, 16
      %v791 = vrot.slane %v789, 1
      %v792 = vor.u32 %v787, %v791
      %v794 = vshll.u32 %v614, 16
      %v796 = vrot.slane %v794, 1
      %v797 = vsel %vm617, %v792, %v796
      %v799 = vshrl.u32 %v598, 16
      %v801 = vshll.u32 %v598, 16
      %v803 = vrot.slane %v801, 1
      %v804 = vor.u32 %v799, %v803
      %v806 = vshll.u32 %v615, 16
      %v808 = vrot.slane %v806, 1
      %v809 = vsel %vm617, %v804, %v808
      %vm842 = vcmask 1046528
      %v843 = vrot.slane %v583, 1
      %v844 = vrot.slane %v600, 1
      %v845 = vsel %vm842, %v843, %v844
      %v846 = vrot.slane %v584, 1
      %v847 = vrot.slane %v601, 1
      %v848 = vsel %vm842, %v846, %v847
      %v849 = vrot.slane %v585, 1
      %v850 = vrot.slane %v602, 1
      %v851 = vsel %vm842, %v849, %v850
      %v852 = vrot.slane %v586, 1
      %v853 = vrot.slane %v603, 1
      %v854 = vsel %vm842, %v852, %v853
      %v855 = vrot.slane %v587, 1
      %v856 = vrot.slane %v604, 1
      %v857 = vsel %vm842, %v855, %v856
      %v858 = vrot.slane %v588, 1
      %v859 = vrot.slane %v605, 1
      %v860 = vsel %vm842, %v858, %v859
      %v861 = vrot.slane %v589, 1
      %v862 = vrot.slane %v606, 1
      %v863 = vsel %vm842, %v861, %v862
      %v864 = vrot.slane %v590, 1
      %v865 = vrot.slane %v607, 1
      %v866 = vsel %vm842, %v864, %v865
      %v867 = vrot.slane %v591, 1
      %v868 = vrot.slane %v608, 1
      %v869 = vsel %vm842, %v867, %v868
      %v870 = vrot.slane %v592, 1
      %v871 = vrot.slane %v609, 1
      %v872 = vsel %vm842, %v870, %v871
      %v873 = vrot.slane %v593, 1
      %v874 = vrot.slane %v610, 1
      %v875 = vsel %vm842, %v873, %v874
      %v876 = vrot.slane %v594, 1
      %v877 = vrot.slane %v611, 1
      %v878 = vsel %vm842, %v876, %v877
      %v879 = vrot.slane %v595, 1
      %v880 = vrot.slane %v612, 1
      %v881 = vsel %vm842, %v879, %v880
      %v882 = vrot.slane %v596, 1
      %v883 = vrot.slane %v613, 1
      %v884 = vsel %vm842, %v882, %v883
      %v885 = vrot.slane %v597, 1
      %v886 = vrot.slane %v614, 1
      %v887 = vsel %vm842, %v885, %v886
      %v888 = vrot.slane %v598, 1
      %v889 = vrot.slane %v615, 1
      %v890 = vsel %vm842, %v888, %v889
      %v892 = vshrl.u32 %v599, 16
      %v894 = vshll.u32 %v599, 16
      %v896 = vrot.slane %v894, 1
      %v897 = vor.u32 %v892, %v896
      %v899 = vshll.u32 %v616, 16
      %v901 = vrot.slane %v899, 1
      %v902 = vsel %vm617, %v897, %v901
      %v905 = vrot.slane %v599, 1
      %v906 = vrot.slane %v616, 1
      %v907 = vsel %vm842, %v905, %v906
      %908 = vrot.lane.b32.xlu0 %v629, 8
      %v909 = vpop.permute.xlu0 %908
      %910 = vrot.lane.b32.xlu0 %v641, 8
      %v911 = vpop.permute.xlu0 %910
      %912 = vrot.lane.b32.xlu0 %v653, 8
      %v913 = vpop.permute.xlu0 %912
      %914 = vrot.lane.b32.xlu0 %v665, 8
      %v915 = vpop.permute.xlu0 %914
      %916 = vrot.lane.b32.xlu0 %v677, 8
      %v917 = vpop.permute.xlu0 %916
      %918 = vrot.lane.b32.xlu0 %v689, 8
      %v919 = vpop.permute.xlu0 %918
      %920 = vrot.lane.b32.xlu0 %v701, 8
      %v921 = vpop.permute.xlu0 %920
      %922 = vrot.lane.b32.xlu0 %v713, 8
      %v923 = vpop.permute.xlu0 %922
      %924 = vrot.lane.b32.xlu0 %v725, 8
      %v925 = vpop.permute.xlu0 %924
      %926 = vrot.lane.b32.xlu0 %v737, 8
      %v927 = vpop.permute.xlu0 %926
      %928 = vrot.lane.b32.xlu0 %v749, 8
      %v929 = vpop.permute.xlu0 %928
      %930 = vrot.lane.b32.xlu0 %v761, 8
      %v931 = vpop.permute.xlu0 %930
      %932 = vrot.lane.b32.xlu0 %v773, 8
      %v933 = vpop.permute.xlu0 %932
      %934 = vrot.lane.b32.xlu0 %v785, 8
      %v935 = vpop.permute.xlu0 %934
      %936 = vrot.lane.b32.xlu0 %v797, 8
      %v937 = vpop.permute.xlu0 %936
      %938 = vrot.lane.b32.xlu0 %v809, 8
      %v939 = vpop.permute.xlu0 %938
      %940 = vrot.lane.b32.xlu0 %v845, 16
      %v941 = vpop.permute.xlu0 %940
      %942 = vrot.lane.b32.xlu0 %v848, 16
      %v943 = vpop.permute.xlu0 %942
      %944 = vrot.lane.b32.xlu0 %v851, 16
      %v945 = vpop.permute.xlu0 %944
      %946 = vrot.lane.b32.xlu0 %v854, 16
      %v947 = vpop.permute.xlu0 %946
      %948 = vrot.lane.b32.xlu0 %v857, 16
      %v949 = vpop.permute.xlu0 %948
      %950 = vrot.lane.b32.xlu0 %v860, 16
      %v951 = vpop.permute.xlu0 %950
      %952 = vrot.lane.b32.xlu0 %v863, 16
      %v953 = vpop.permute.xlu0 %952
      %954 = vrot.lane.b32.xlu0 %v866, 16
      %v955 = vpop.permute.xlu0 %954
      %956 = vrot.lane.b32.xlu0 %v869, 16
      %v957 = vpop.permute.xlu0 %956
      %958 = vrot.lane.b32.xlu0 %v872, 16
      %v959 = vpop.permute.xlu0 %958
      %960 = vrot.lane.b32.xlu0 %v875, 16
      %v961 = vpop.permute.xlu0 %960
      %962 = vrot.lane.b32.xlu0 %v878, 16
      %v963 = vpop.permute.xlu0 %962
      %964 = vrot.lane.b32.xlu0 %v881, 16
      %v965 = vpop.permute.xlu0 %964
      %966 = vrot.lane.b32.xlu0 %v884, 16
      %v967 = vpop.permute.xlu0 %966
      %968 = vrot.lane.b32.xlu0 %v887, 16
      %v969 = vpop.permute.xlu0 %968
      %970 = vrot.lane.b32.xlu0 %v890, 16
      %v971 = vpop.permute.xlu0 %970
      %972 = vrot.lane.b32.xlu0 %v584, 24
      %v973 = vpop.permute.xlu0 %972
      %974 = vrot.lane.b32.xlu0 %v585, 24
      %v975 = vpop.permute.xlu0 %974
      %976 = vrot.lane.b32.xlu0 %v586, 24
      %v977 = vpop.permute.xlu0 %976
      %978 = vrot.lane.b32.xlu0 %v587, 24
      %v979 = vpop.permute.xlu0 %978
      %980 = vrot.lane.b32.xlu0 %v588, 24
      %v981 = vpop.permute.xlu0 %980
      %982 = vrot.lane.b32.xlu0 %v589, 24
      %v983 = vpop.permute.xlu0 %982
      %984 = vrot.lane.b32.xlu0 %v590, 24
      %v985 = vpop.permute.xlu0 %984
      %986 = vrot.lane.b32.xlu0 %v591, 24
      %v987 = vpop.permute.xlu0 %986
      %988 = vrot.lane.b32.xlu0 %v592, 24
      %v989 = vpop.permute.xlu0 %988
      %990 = vrot.lane.b32.xlu0 %v593, 24
      %v991 = vpop.permute.xlu0 %990
      %992 = vrot.lane.b32.xlu0 %v594, 24
      %v993 = vpop.permute.xlu0 %992
      %994 = vrot.lane.b32.xlu0 %v595, 24
      %v995 = vpop.permute.xlu0 %994
      %996 = vrot.lane.b32.xlu0 %v596, 24
      %v997 = vpop.permute.xlu0 %996
      %998 = vrot.lane.b32.xlu0 %v597, 24
      %v999 = vpop.permute.xlu0 %998
      %1000 = vrot.lane.b32.xlu0 %v598, 24
      %v1001 = vpop.permute.xlu0 %1000
      %1002 = vrot.lane.b32.xlu0 %v599, 24
      %v1003 = vpop.permute.xlu0 %1002
      %1004 = vrot.lane.b32.xlu0 %v641, 32
      %v1005 = vpop.permute.xlu0 %1004
      %1006 = vrot.lane.b32.xlu0 %v653, 32
      %v1007 = vpop.permute.xlu0 %1006
      %1008 = vrot.lane.b32.xlu0 %v665, 32
      %v1009 = vpop.permute.xlu0 %1008
      %1010 = vrot.lane.b32.xlu0 %v677, 32
      %v1011 = vpop.permute.xlu0 %1010
      %1012 = vrot.lane.b32.xlu0 %v689, 32
      %v1013 = vpop.permute.xlu0 %1012
      %1014 = vrot.lane.b32.xlu0 %v701, 32
      %v1015 = vpop.permute.xlu0 %1014
      %1016 = vrot.lane.b32.xlu0 %v713, 32
      %v1017 = vpop.permute.xlu0 %1016
      %1018 = vrot.lane.b32.xlu0 %v725, 32
      %v1019 = vpop.permute.xlu0 %1018
      %1020 = vrot.lane.b32.xlu0 %v737, 32
      %v1021 = vpop.permute.xlu0 %1020
      %1022 = vrot.lane.b32.xlu0 %v749, 32
      %v1023 = vpop.permute.xlu0 %1022
      %1024 = vrot.lane.b32.xlu0 %v761, 32
      %v1025 = vpop.permute.xlu0 %1024
      %1026 = vrot.lane.b32.xlu0 %v773, 32
      %v1027 = vpop.permute.xlu0 %1026
      %1028 = vrot.lane.b32.xlu0 %v785, 32
      %v1029 = vpop.permute.xlu0 %1028
      %1030 = vrot.lane.b32.xlu0 %v797, 32
      %v1031 = vpop.permute.xlu0 %1030
      %1032 = vrot.lane.b32.xlu0 %v809, 32
      %v1033 = vpop.permute.xlu0 %1032
      %1034 = vrot.lane.b32.xlu0 %v902, 32
      %v1035 = vpop.permute.xlu0 %1034
      %1036 = vrot.lane.b32.xlu0 %v848, 40
      %v1037 = vpop.permute.xlu0 %1036
      %1038 = vrot.lane.b32.xlu0 %v851, 40
      %v1039 = vpop.permute.xlu0 %1038
      %1040 = vrot.lane.b32.xlu0 %v854, 40
      %v1041 = vpop.permute.xlu0 %1040
      %1042 = vrot.lane.b32.xlu0 %v857, 40
      %v1043 = vpop.permute.xlu0 %1042
      %1044 = vrot.lane.b32.xlu0 %v860, 40
      %v1045 = vpop.permute.xlu0 %1044
      %1046 = vrot.lane.b32.xlu0 %v863, 40
      %v1047 = vpop.permute.xlu0 %1046
      %1048 = vrot.lane.b32.xlu0 %v866, 40
      %v1049 = vpop.permute.xlu0 %1048
      %1050 = vrot.lane.b32.xlu0 %v869, 40
      %v1051 = vpop.permute.xlu0 %1050
      %1052 = vrot.lane.b32.xlu0 %v872, 40
      %v1053 = vpop.permute.xlu0 %1052
      %1054 = vrot.lane.b32.xlu0 %v875, 40
      %v1055 = vpop.permute.xlu0 %1054
      %1056 = vrot.lane.b32.xlu0 %v878, 40
      %v1057 = vpop.permute.xlu0 %1056
      %1058 = vrot.lane.b32.xlu0 %v881, 40
      %v1059 = vpop.permute.xlu0 %1058
      %1060 = vrot.lane.b32.xlu0 %v884, 40
      %v1061 = vpop.permute.xlu0 %1060
      %1062 = vrot.lane.b32.xlu0 %v887, 40
      %v1063 = vpop.permute.xlu0 %1062
      %1064 = vrot.lane.b32.xlu0 %v890, 40
      %v1065 = vpop.permute.xlu0 %1064
      %1066 = vrot.lane.b32.xlu0 %v907, 40
      %v1067 = vpop.permute.xlu0 %1066
      %1068 = vrot.lane.b32.xlu0 %v585, 48
      %v1069 = vpop.permute.xlu0 %1068
      %1070 = vrot.lane.b32.xlu0 %v586, 48
      %v1071 = vpop.permute.xlu0 %1070
      %1072 = vrot.lane.b32.xlu0 %v587, 48
      %v1073 = vpop.permute.xlu0 %1072
      %1074 = vrot.lane.b32.xlu0 %v588, 48
      %v1075 = vpop.permute.xlu0 %1074
      %1076 = vrot.lane.b32.xlu0 %v589, 48
      %v1077 = vpop.permute.xlu0 %1076
      %1078 = vrot.lane.b32.xlu0 %v590, 48
      %v1079 = vpop.permute.xlu0 %1078
      %1080 = vrot.lane.b32.xlu0 %v591, 48
      %v1081 = vpop.permute.xlu0 %1080
      %1082 = vrot.lane.b32.xlu0 %v592, 48
      %v1083 = vpop.permute.xlu0 %1082
      %1084 = vrot.lane.b32.xlu0 %v593, 48
      %v1085 = vpop.permute.xlu0 %1084
      %1086 = vrot.lane.b32.xlu0 %v594, 48
      %v1087 = vpop.permute.xlu0 %1086
      %1088 = vrot.lane.b32.xlu0 %v595, 48
      %v1089 = vpop.permute.xlu0 %1088
      %1090 = vrot.lane.b32.xlu0 %v596, 48
      %v1091 = vpop.permute.xlu0 %1090
      %1092 = vrot.lane.b32.xlu0 %v597, 48
      %v1093 = vpop.permute.xlu0 %1092
      %1094 = vrot.lane.b32.xlu0 %v598, 48
      %v1095 = vpop.permute.xlu0 %1094
      %1096 = vrot.lane.b32.xlu0 %v599, 48
      %v1097 = vpop.permute.xlu0 %1096
      %1098 = vrot.lane.b32.xlu0 %v583, 48
      %v1099 = vpop.permute.xlu0 %1098
      %1100 = vrot.lane.b32.xlu0 %v653, 56
      %v1101 = vpop.permute.xlu0 %1100
      %1102 = vrot.lane.b32.xlu0 %v665, 56
      %v1103 = vpop.permute.xlu0 %1102
      %1104 = vrot.lane.b32.xlu0 %v677, 56
      %v1105 = vpop.permute.xlu0 %1104
      %1106 = vrot.lane.b32.xlu0 %v689, 56
      %v1107 = vpop.permute.xlu0 %1106
      %1108 = vrot.lane.b32.xlu0 %v701, 56
      %v1109 = vpop.permute.xlu0 %1108
      %1110 = vrot.lane.b32.xlu0 %v713, 56
      %v1111 = vpop.permute.xlu0 %1110
      %1112 = vrot.lane.b32.xlu0 %v725, 56
      %v1113 = vpop.permute.xlu0 %1112
      %1114 = vrot.lane.b32.xlu0 %v737, 56
      %v1115 = vpop.permute.xlu0 %1114
      %1116 = vrot.lane.b32.xlu0 %v749, 56
      %v1117 = vpop.permute.xlu0 %1116
      %1118 = vrot.lane.b32.xlu0 %v761, 56
      %v1119 = vpop.permute.xlu0 %1118
      %1120 = vrot.lane.b32.xlu0 %v773, 56
      %v1121 = vpop.permute.xlu0 %1120
      %1122 = vrot.lane.b32.xlu0 %v785, 56
      %v1123 = vpop.permute.xlu0 %1122
      %1124 = vrot.lane.b32.xlu0 %v797, 56
      %v1125 = vpop.permute.xlu0 %1124
      %1126 = vrot.lane.b32.xlu0 %v809, 56
      %v1127 = vpop.permute.xlu0 %1126
      %1128 = vrot.lane.b32.xlu0 %v902, 56
      %v1129 = vpop.permute.xlu0 %1128
      %1130 = vrot.lane.b32.xlu0 %v629, 56
      %v1131 = vpop.permute.xlu0 %1130
      %1132 = vrot.lane.b32.xlu0 %v851, 64
      %v1133 = vpop.permute.xlu0 %1132
      %1134 = vrot.lane.b32.xlu0 %v854, 64
      %v1135 = vpop.permute.xlu0 %1134
      %1136 = vrot.lane.b32.xlu0 %v857, 64
      %v1137 = vpop.permute.xlu0 %1136
      %1138 = vrot.lane.b32.xlu0 %v860, 64
      %v1139 = vpop.permute.xlu0 %1138
      %1140 = vrot.lane.b32.xlu0 %v863, 64
      %v1141 = vpop.permute.xlu0 %1140
      %1142 = vrot.lane.b32.xlu0 %v866, 64
      %v1143 = vpop.permute.xlu0 %1142
      %1144 = vrot.lane.b32.xlu0 %v869, 64
      %v1145 = vpop.permute.xlu0 %1144
      %1146 = vrot.lane.b32.xlu0 %v872, 64
      %v1147 = vpop.permute.xlu0 %1146
      %1148 = vrot.lane.b32.xlu0 %v875, 64
      %v1149 = vpop.permute.xlu0 %1148
      %1150 = vrot.lane.b32.xlu0 %v878, 64
      %v1151 = vpop.permute.xlu0 %1150
      %1152 = vrot.lane.b32.xlu0 %v881, 64
      %v1153 = vpop.permute.xlu0 %1152
      %1154 = vrot.lane.b32.xlu0 %v884, 64
      %v1155 = vpop.permute.xlu0 %1154
      %1156 = vrot.lane.b32.xlu0 %v887, 64
      %v1157 = vpop.permute.xlu0 %1156
      %1158 = vrot.lane.b32.xlu0 %v890, 64
      %v1159 = vpop.permute.xlu0 %1158
      %1160 = vrot.lane.b32.xlu0 %v907, 64
      %v1161 = vpop.permute.xlu0 %1160
      %1162 = vrot.lane.b32.xlu0 %v845, 64
      %v1163 = vpop.permute.xlu0 %1162
      %vm1164 = vcmask 64512
      %v1166 = vsel %vm1164, %v583, %v909
      %v1168 = vsel %vm1164, %v584, %v911
      %v1170 = vsel %vm1164, %v585, %v913
      %v1172 = vsel %vm1164, %v586, %v915
      %v1174 = vsel %vm1164, %v587, %v917
      %v1176 = vsel %vm1164, %v588, %v919
      %v1178 = vsel %vm1164, %v589, %v921
      %v1180 = vsel %vm1164, %v590, %v923
      %v1182 = vsel %vm1164, %v591, %v925
      %v1184 = vsel %vm1164, %v592, %v927
      %v1186 = vsel %vm1164, %v593, %v929
      %v1188 = vsel %vm1164, %v594, %v931
      %v1190 = vsel %vm1164, %v595, %v933
      %v1192 = vsel %vm1164, %v596, %v935
      %v1194 = vsel %vm1164, %v597, %v937
      %v1196 = vsel %vm1164, %v598, %v939
      %vm1197 = vcmask 130048
      %v1199 = vsel %vm1197, %v1166, %v941
      %v1201 = vsel %vm1197, %v1168, %v943
      %v1203 = vsel %vm1197, %v1170, %v945
      %v1205 = vsel %vm1197, %v1172, %v947
      %v1207 = vsel %vm1197, %v1174, %v949
      %v1209 = vsel %vm1197, %v1176, %v951
      %v1211 = vsel %vm1197, %v1178, %v953
      %v1213 = vsel %vm1197, %v1180, %v955
      %v1215 = vsel %vm1197, %v1182, %v957
      %v1217 = vsel %vm1197, %v1184, %v959
      %v1219 = vsel %vm1197, %v1186, %v961
      %v1221 = vsel %vm1197, %v1188, %v963
      %v1223 = vsel %vm1197, %v1190, %v965
      %v1225 = vsel %vm1197, %v1192, %v967
      %v1227 = vsel %vm1197, %v1194, %v969
      %v1229 = vsel %vm1197, %v1196, %v971
      %vm1230 = vcmask 195584
      %v1232 = vsel %vm1230, %v1199, %v973
      %v1234 = vsel %vm1230, %v1201, %v975
      %v1236 = vsel %vm1230, %v1203, %v977
      %v1238 = vsel %vm1230, %v1205, %v979
      %v1240 = vsel %vm1230, %v1207, %v981
      %v1242 = vsel %vm1230, %v1209, %v983
      %v1244 = vsel %vm1230, %v1211, %v985
      %v1246 = vsel %vm1230, %v1213, %v987
      %v1248 = vsel %vm1230, %v1215, %v989
      %v1250 = vsel %vm1230, %v1217, %v991
      %v1252 = vsel %vm1230, %v1219, %v993
      %v1254 = vsel %vm1230, %v1221, %v995
      %v1256 = vsel %vm1230, %v1223, %v997
      %v1258 = vsel %vm1230, %v1225, %v999
      %v1260 = vsel %vm1230, %v1227, %v1001
      %v1262 = vsel %vm1230, %v1229, %v1003
      %vm1263 = vcmask 261120
      %v1265 = vsel %vm1263, %v1232, %v1005
      %v1267 = vsel %vm1263, %v1234, %v1007
      %v1269 = vsel %vm1263, %v1236, %v1009
      %v1271 = vsel %vm1263, %v1238, %v1011
      %v1273 = vsel %vm1263, %v1240, %v1013
      %v1275 = vsel %vm1263, %v1242, %v1015
      %v1277 = vsel %vm1263, %v1244, %v1017
      %v1279 = vsel %vm1263, %v1246, %v1019
      %v1281 = vsel %vm1263, %v1248, %v1021
      %v1283 = vsel %vm1263, %v1250, %v1023
      %v1285 = vsel %vm1263, %v1252, %v1025
      %v1287 = vsel %vm1263, %v1254, %v1027
      %v1289 = vsel %vm1263, %v1256, %v1029
      %v1291 = vsel %vm1263, %v1258, %v1031
      %v1293 = vsel %vm1263, %v1260, %v1033
      %v1295 = vsel %vm1263, %v1262, %v1035
      %vm1296 = vcmask 326656
      %v1298 = vsel %vm1296, %v1265, %v1037
      %v1300 = vsel %vm1296, %v1267, %v1039
      %v1302 = vsel %vm1296, %v1269, %v1041
      %v1304 = vsel %vm1296, %v1271, %v1043
      %v1306 = vsel %vm1296, %v1273, %v1045
      %v1308 = vsel %vm1296, %v1275, %v1047
      %v1310 = vsel %vm1296, %v1277, %v1049
      %v1312 = vsel %vm1296, %v1279, %v1051
      %v1314 = vsel %vm1296, %v1281, %v1053
      %v1316 = vsel %vm1296, %v1283, %v1055
      %v1318 = vsel %vm1296, %v1285, %v1057
      %v1320 = vsel %vm1296, %v1287, %v1059
      %v1322 = vsel %vm1296, %v1289, %v1061
      %v1324 = vsel %vm1296, %v1291, %v1063
      %v1326 = vsel %vm1296, %v1293, %v1065
      %v1328 = vsel %vm1296, %v1295, %v1067
      %vm1329 = vcmask 392192
      %v1331 = vsel %vm1329, %v1298, %v1069
      %v1333 = vsel %vm1329, %v1300, %v1071
      %v1335 = vsel %vm1329, %v1302, %v1073
      %v1337 = vsel %vm1329, %v1304, %v1075
      %v1339 = vsel %vm1329, %v1306, %v1077
      %v1341 = vsel %vm1329, %v1308, %v1079
      %v1343 = vsel %vm1329, %v1310, %v1081
      %v1345 = vsel %vm1329, %v1312, %v1083
      %v1347 = vsel %vm1329, %v1314, %v1085
      %v1349 = vsel %vm1329, %v1316, %v1087
      %v1351 = vsel %vm1329, %v1318, %v1089
      %v1353 = vsel %vm1329, %v1320, %v1091
      %v1355 = vsel %vm1329, %v1322, %v1093
      %v1357 = vsel %vm1329, %v1324, %v1095
      %v1359 = vsel %vm1329, %v1326, %v1097
      %v1361 = vsel %vm1329, %v1328, %v1099
      %vm1362 = vcmask 457728
      %v1364 = vsel %vm1362, %v1331, %v1101
      %v1366 = vsel %vm1362, %v1333, %v1103
      %v1368 = vsel %vm1362, %v1335, %v1105
      %v1370 = vsel %vm1362, %v1337, %v1107
      %v1372 = vsel %vm1362, %v1339, %v1109
      %v1374 = vsel %vm1362, %v1341, %v1111
      %v1376 = vsel %vm1362, %v1343, %v1113
      %v1378 = vsel %vm1362, %v1345, %v1115
      %v1380 = vsel %vm1362, %v1347, %v1117
      %v1382 = vsel %vm1362, %v1349, %v1119
      %v1384 = vsel %vm1362, %v1351, %v1121
      %v1386 = vsel %vm1362, %v1353, %v1123
      %v1388 = vsel %vm1362, %v1355, %v1125
      %v1390 = vsel %vm1362, %v1357, %v1127
      %v1392 = vsel %vm1362, %v1359, %v1129
      %v1394 = vsel %vm1362, %v1361, %v1131
      %vm1395 = vcmask 523264
      %v1397 = vsel %vm1395, %v1364, %v1133
      %v1399 = vsel %vm1395, %v1366, %v1135
      %v1401 = vsel %vm1395, %v1368, %v1137
      %v1403 = vsel %vm1395, %v1370, %v1139
      %v1405 = vsel %vm1395, %v1372, %v1141
      %v1407 = vsel %vm1395, %v1374, %v1143
      %v1409 = vsel %vm1395, %v1376, %v1145
      %v1411 = vsel %vm1395, %v1378, %v1147
      %v1413 = vsel %vm1395, %v1380, %v1149
      %v1415 = vsel %vm1395, %v1382, %v1151
      %v1417 = vsel %vm1395, %v1384, %v1153
      %v1419 = vsel %vm1395, %v1386, %v1155
      %v1421 = vsel %vm1395, %v1388, %v1157
      %v1423 = vsel %vm1395, %v1390, %v1159
      %v1425 = vsel %vm1395, %v1392, %v1161
      %v1427 = vsel %vm1395, %v1394, %v1163
      %vm1428 = vcmask 588800
      %v1429 = vsel %vm1428, %v1397, 0
      %v1431 = vsel %vm1428, %v1399, 0
      %v1433 = vsel %vm1428, %v1401, 0
      %v1435 = vsel %vm1428, %v1403, 0
      %v1437 = vsel %vm1428, %v1405, 0
      %v1439 = vsel %vm1428, %v1407, 0
      %v1441 = vsel %vm1428, %v1409, 0
      %v1443 = vsel %vm1428, %v1411, 0
      %v1445 = vsel %vm1428, %v1413, 0
      %v1447 = vsel %vm1428, %v1415, 0
      %v1449 = vsel %vm1428, %v1417, 0
      %v1451 = vsel %vm1428, %v1419, 0
      %v1453 = vsel %vm1428, %v1421, 0
      %v1455 = vsel %vm1428, %v1423, 0
      %v1457 = vsel %vm1428, %v1425, 0
      %v1459 = vsel %vm1428, %v1427, 0
      %v1461 = vld [vmem:[%s3] sm:$0xf]
      %v1462 = vld [vmem:[%s3 + $0x4] sm:$0xf]
      %v1463 = vld [vmem:[%s3 + $0x8] sm:$0xf]
      %v1464 = vld [vmem:[%s3 + $0xc] sm:$0xf]
      %v1465 = vld [vmem:[%s3 + $0x10] sm:$0xf]
      %v1466 = vld [vmem:[%s3 + $0x14] sm:$0xf]
      %v1467 = vld [vmem:[%s3 + $0x18] sm:$0xf]
      %v1468 = vld [vmem:[%s3 + $0x1c] sm:$0xf]
      %v1469 = vld [vmem:[%s3 + $0x20] sm:$0xf]
      %v1470 = vld [vmem:[%s3 + $0x24] sm:$0xf]
      %v1471 = vld [vmem:[%s3 + $0x28] sm:$0xf]
      %v1472 = vld [vmem:[%s3 + $0x2c] sm:$0xf]
      %v1473 = vld [vmem:[%s3 + $0x30] sm:$0xf]
      %v1474 = vld [vmem:[%s3 + $0x34] sm:$0xf]
      %v1475 = vld [vmem:[%s3 + $0x38] sm:$0xf]
      %v1476 = vld [vmem:[%s3 + $0x3c] sm:$0xf]
      %v1493 = vunpack.c.l.b16 %v1461
      %v1494 = vunpack.c.l.b16 %v1462
      %v1495 = vunpack.c.l.b16 %v1463
      %v1496 = vunpack.c.l.b16 %v1464
      %v1497 = vunpack.c.l.b16 %v1465
      %v1498 = vunpack.c.l.b16 %v1466
      %v1499 = vunpack.c.l.b16 %v1467
      %v1500 = vunpack.c.l.b16 %v1468
      %v1501 = vunpack.c.l.b16 %v1469
      %v1502 = vunpack.c.l.b16 %v1470
      %v1503 = vunpack.c.l.b16 %v1471
      %v1504 = vunpack.c.l.b16 %v1472
      %v1505 = vunpack.c.l.b16 %v1473
      %v1506 = vunpack.c.l.b16 %v1474
      %v1507 = vunpack.c.l.b16 %v1475
      %v1508 = vunpack.c.l.b16 %v1476
      %v1509 = vpack.c.b16 %v1494, %v1493
      %v1510 = vpack.c.b16 %v1496, %v1495
      %v1511 = vpack.c.b16 %v1498, %v1497
      %v1512 = vpack.c.b16 %v1500, %v1499
      %v1513 = vpack.c.b16 %v1502, %v1501
      %v1514 = vpack.c.b16 %v1504, %v1503
      %v1515 = vpack.c.b16 %v1506, %v1505
      %v1516 = vpack.c.b16 %v1508, %v1507
      %1525 = vmatprep.subr.bf16.mxu0 0
      %1526 = vmatpush1.bf16.msra.mxu0 %v1509
      %1527 = vmatprep.subr.bf16.mxu0 0
      %1528 = vmatpush1.bf16.msra.mxu0 %v1510
      %1529 = vmatprep.subr.bf16.mxu0 0
      %1530 = vmatpush1.bf16.msra.mxu0 %v1511
      %1531 = vmatprep.subr.bf16.mxu0 0
      %1532 = vmatpush1.bf16.msra.mxu0 %v1512
      %1533 = vmatprep.subr.bf16.mxu0 0
      %1534 = vmatpush1.bf16.msra.mxu0 %v1513
      %1535 = vmatprep.subr.bf16.mxu0 0
      %1536 = vmatpush1.bf16.msra.mxu0 %v1514
      %1537 = vmatprep.subr.bf16.mxu0 0
      %1538 = vmatpush1.bf16.msra.mxu0 %v1515
      %1539 = vmatprep.subr.bf16.mxu0 0
      %1540 = vmatpush1.bf16.msra.mxu0 %v1516
      %1541 = vmatprep.subr.bf16.mxu0 0
      %1542 = vmatpush1.bf16.msra.mxu0 0
      %1543 = vmatprep.subr.bf16.mxu0 0
      %1544 = vmatpush1.bf16.msra.mxu0 0
      %1545 = vmatprep.subr.bf16.mxu0 0
      %1546 = vmatpush1.bf16.msra.mxu0 0
      %1547 = vmatprep.subr.bf16.mxu0 0
      %1548 = vmatpush1.bf16.msra.mxu0 0
      %1549 = vmatprep.subr.bf16.mxu0 0
      %1550 = vmatpush1.bf16.msra.mxu0 0
      %1551 = vmatprep.subr.bf16.mxu0 0
      %1552 = vmatpush1.bf16.msra.mxu0 0
      %1553 = vmatprep.subr.bf16.mxu0 0
      %1554 = vmatpush1.bf16.msra.mxu0 0
      %1555 = vmatprep.subr.bf16.mxu0 0
      %1556 = vmatpush1.bf16.msra.mxu0 0
      %1557 = vmatprep.mubr.bf16.mxu0 0
      %1558 = vmatmul.mubr.bf16.gmra.mrb[0].mxu0 %v1429
      %v1559 = vpop.f32.mrb[0].mxu0
      %v1560 = vadd.f32 0.0, %v1559
      %v1561 = vpop.f32.mrb[0].mxu0
      %v1562 = vpop.f32.mrb[0].mxu0
      %v1563 = vadd.f32 0.0, %v1562
      %v1564 = vpop.f32.mrb[0].mxu0
      %1565 = vmatprep.mubr.bf16.mxu0 0
      %1566 = vmatmul.mubr.bf16.gmra.mrb[0].mxu0 %v1431
      %v1567 = vpop.f32.mrb[0].mxu0
      %v1568 = vadd.f32 0.0, %v1567
      %v1569 = vpop.f32.mrb[0].mxu0
      %v1570 = vpop.f32.mrb[0].mxu0
      %v1571 = vadd.f32 0.0, %v1570
      %v1572 = vpop.f32.mrb[0].mxu0
      %1573 = vmatprep.mubr.bf16.mxu0 0
      %1574 = vmatmul.mubr.bf16.gmra.mrb[0].mxu0 %v1433
      %v1575 = vpop.f32.mrb[0].mxu0
      %v1576 = vadd.f32 0.0, %v1575
      %v1577 = vpop.f32.mrb[0].mxu0
      %v1578 = vpop.f32.mrb[0].mxu0
      %v1579 = vadd.f32 0.0, %v1578
      %v1580 = vpop.f32.mrb[0].mxu0
      %1581 = vmatprep.mubr.bf16.mxu0 0
      %1582 = vmatmul.mubr.bf16.gmra.mrb[0].mxu0 %v1435
      %v1583 = vpop.f32.mrb[0].mxu0
      %v1584 = vadd.f32 0.0, %v1583
      %v1585 = vpop.f32.mrb[0].mxu0
      %v1586 = vpop.f32.mrb[0].mxu0
      %v1587 = vadd.f32 0.0, %v1586
      %v1588 = vpop.f32.mrb[0].mxu0
      %1589 = vmatprep.mubr.bf16.mxu0 0
      %1590 = vmatmul.mubr.bf16.gmra.mrb[0].mxu0 %v1437
      %v1591 = vpop.f32.mrb[0].mxu0
      %v1592 = vadd.f32 0.0, %v1591
      %v1593 = vpop.f32.mrb[0].mxu0
      %v1594 = vpop.f32.mrb[0].mxu0
      %v1595 = vadd.f32 0.0, %v1594
      %v1596 = vpop.f32.mrb[0].mxu0
      %1597 = vmatprep.mubr.bf16.mxu0 0
      %1598 = vmatmul.mubr.bf16.gmra.mrb[0].mxu0 %v1439
      %v1599 = vpop.f32.mrb[0].mxu0
      %v1600 = vadd.f32 0.0, %v1599
      %v1601 = vpop.f32.mrb[0].mxu0
      %v1602 = vpop.f32.mrb[0].mxu0
      %v1603 = vadd.f32 0.0, %v1602
      %v1604 = vpop.f32.mrb[0].mxu0
      %1605 = vmatprep.mubr.bf16.mxu0 0
      %1606 = vmatmul.mubr.bf16.gmra.mrb[0].mxu0 %v1441
      %v1607 = vpop.f32.mrb[0].mxu0
      %v1608 = vadd.f32 0.0, %v1607
      %v1609 = vpop.f32.mrb[0].mxu0
      %v1610 = vpop.f32.mrb[0].mxu0
      %v1611 = vadd.f32 0.0, %v1610
      %v1612 = vpop.f32.mrb[0].mxu0
      %1613 = vmatprep.mubr.bf16.mxu0 0
      %1614 = vmatmul.mubr.bf16.gmra.mrb[0].mxu0 %v1443
      %v1615 = vpop.f32.mrb[0].mxu0
      %v1616 = vadd.f32 0.0, %v1615
      %v1617 = vpop.f32.mrb[0].mxu0
      %v1618 = vpop.f32.mrb[0].mxu0
      %v1619 = vadd.f32 0.0, %v1618
      %v1620 = vpop.f32.mrb[0].mxu0
      %1621 = vmatprep.mubr.bf16.mxu0 0
      %1622 = vmatmul.mubr.bf16.gmra.mrb[0].mxu0 %v1445
      %v1623 = vpop.f32.mrb[0].mxu0
      %v1624 = vadd.f32 0.0, %v1623
      %v1625 = vpop.f32.mrb[0].mxu0
      %v1626 = vpop.f32.mrb[0].mxu0
      %v1627 = vadd.f32 0.0, %v1626
      %v1628 = vpop.f32.mrb[0].mxu0
      %1629 = vmatprep.mubr.bf16.mxu0 0
      %1630 = vmatmul.mubr.bf16.gmra.mrb[0].mxu0 %v1447
      %v1631 = vpop.f32.mrb[0].mxu0
      %v1632 = vadd.f32 0.0, %v1631
      %v1633 = vpop.f32.mrb[0].mxu0
      %v1634 = vpop.f32.mrb[0].mxu0
      %v1635 = vadd.f32 0.0, %v1634
      %v1636 = vpop.f32.mrb[0].mxu0
      %1637 = vmatprep.mubr.bf16.mxu0 0
      %1638 = vmatmul.mubr.bf16.gmra.mrb[0].mxu0 %v1449
      %v1639 = vpop.f32.mrb[0].mxu0
      %v1640 = vadd.f32 0.0, %v1639
      %v1641 = vpop.f32.mrb[0].mxu0
      %v1642 = vpop.f32.mrb[0].mxu0
      %v1643 = vadd.f32 0.0, %v1642
      %v1644 = vpop.f32.mrb[0].mxu0
      %1645 = vmatprep.mubr.bf16.mxu0 0
      %1646 = vmatmul.mubr.bf16.gmra.mrb[0].mxu0 %v1451
      %v1647 = vpop.f32.mrb[0].mxu0
      %v1648 = vadd.f32 0.0, %v1647
      %v1649 = vpop.f32.mrb[0].mxu0
      %v1650 = vpop.f32.mrb[0].mxu0
      %v1651 = vadd.f32 0.0, %v1650
      %v1652 = vpop.f32.mrb[0].mxu0
      %1653 = vmatprep.mubr.bf16.mxu0 0
      %1654 = vmatmul.mubr.bf16.gmra.mrb[0].mxu0 %v1453
      %v1655 = vpop.f32.mrb[0].mxu0
      %v1656 = vadd.f32 0.0, %v1655
      %v1657 = vpop.f32.mrb[0].mxu0
      %v1658 = vpop.f32.mrb[0].mxu0
      %v1659 = vadd.f32 0.0, %v1658
      %v1660 = vpop.f32.mrb[0].mxu0
      %1661 = vmatprep.mubr.bf16.mxu0 0
      %1662 = vmatmul.mubr.bf16.gmra.mrb[0].mxu0 %v1455
      %v1663 = vpop.f32.mrb[0].mxu0
      %v1664 = vadd.f32 0.0, %v1663
      %v1665 = vpop.f32.mrb[0].mxu0
      %v1666 = vpop.f32.mrb[0].mxu0
      %v1667 = vadd.f32 0.0, %v1666
      %v1668 = vpop.f32.mrb[0].mxu0
      %1669 = vmatprep.mubr.bf16.mxu0 0
      %1670 = vmatmul.mubr.bf16.gmra.mrb[0].mxu0 %v1457
      %v1671 = vpop.f32.mrb[0].mxu0
      %v1672 = vadd.f32 0.0, %v1671
      %v1673 = vpop.f32.mrb[0].mxu0
      %v1674 = vpop.f32.mrb[0].mxu0
      %v1675 = vadd.f32 0.0, %v1674
      %v1676 = vpop.f32.mrb[0].mxu0
      %1677 = vmatprep.mubr.bf16.mxu0 0
      %1678 = vmatmul.mubr.bf16.gmra.mrb[0].mxu0 %v1459
      %v1679 = vpop.f32.mrb[0].mxu0
      %v1680 = vadd.f32 0.0, %v1679
      %v1681 = vpop.f32.mrb[0].mxu0
      %v1682 = vpop.f32.mrb[0].mxu0
      %v1683 = vadd.f32 0.0, %v1682
      %v1684 = vpop.f32.mrb[0].mxu0
      %1685 = vdwg.mxu0
      %v1686 = vpack.c.bf16 %v1563, %v1560
      %v1687 = vpack.c.bf16 %v1571, %v1568
      %v1688 = vpack.c.bf16 %v1579, %v1576
      %v1689 = vpack.c.bf16 %v1587, %v1584
      %v1690 = vpack.c.bf16 %v1595, %v1592
      %v1691 = vpack.c.bf16 %v1603, %v1600
      %v1692 = vpack.c.bf16 %v1611, %v1608
      %v1693 = vpack.c.bf16 %v1619, %v1616
      %v1694 = vpack.c.bf16 %v1627, %v1624
      %v1695 = vpack.c.bf16 %v1635, %v1632
      %v1696 = vpack.c.bf16 %v1643, %v1640
      %v1697 = vpack.c.bf16 %v1651, %v1648
      %v1698 = vpack.c.bf16 %v1659, %v1656
      %v1699 = vpack.c.bf16 %v1667, %v1664
      %v1700 = vpack.c.bf16 %v1675, %v1672
      %v1701 = vpack.c.bf16 %v1683, %v1680
      %v1718 = vunpack.c.l.b16 %v1686
      %v1719 = vunpack.c.h.b16 %v1686
      %v1720 = vunpack.c.l.b16 %v1687
      %v1721 = vunpack.c.h.b16 %v1687
      %v1722 = vunpack.c.l.b16 %v1688
      %v1723 = vunpack.c.h.b16 %v1688
      %v1724 = vunpack.c.l.b16 %v1689
      %v1725 = vunpack.c.h.b16 %v1689
      %v1726 = vunpack.c.l.b16 %v1690
      %v1727 = vunpack.c.h.b16 %v1690
      %v1728 = vunpack.c.l.b16 %v1691
      %v1729 = vunpack.c.h.b16 %v1691
      %v1730 = vunpack.c.l.b16 %v1692
      %v1731 = vunpack.c.h.b16 %v1692
      %v1732 = vunpack.c.l.b16 %v1693
      %v1733 = vunpack.c.h.b16 %v1693
      %v1734 = vunpack.c.l.b16 %v1694
      %v1735 = vunpack.c.h.b16 %v1694
      %v1736 = vunpack.c.l.b16 %v1695
      %v1737 = vunpack.c.h.b16 %v1695
      %v1738 = vunpack.c.l.b16 %v1696
      %v1739 = vunpack.c.h.b16 %v1696
      %v1740 = vunpack.c.l.b16 %v1697
      %v1741 = vunpack.c.h.b16 %v1697
      %v1742 = vunpack.c.l.b16 %v1698
      %v1743 = vunpack.c.h.b16 %v1698
      %v1744 = vunpack.c.l.b16 %v1699
      %v1745 = vunpack.c.h.b16 %v1699
      %v1746 = vunpack.c.l.b16 %v1700
      %v1747 = vunpack.c.h.b16 %v1700
      %v1748 = vunpack.c.l.b16 %v1701
      %v1749 = vunpack.c.h.b16 %v1701
      %v1750 = vpack.c.b16 %v1718, %v1718
      %v1751 = vpack.c.b16 %v1719, %v1719
      %v1752 = vpack.c.b16 %v1720, %v1720
      %v1753 = vpack.c.b16 %v1721, %v1721
      %v1754 = vpack.c.b16 %v1722, %v1722
      %v1755 = vpack.c.b16 %v1723, %v1723
      %v1756 = vpack.c.b16 %v1724, %v1724
      %v1757 = vpack.c.b16 %v1725, %v1725
      %v1758 = vpack.c.b16 %v1726, %v1726
      %v1759 = vpack.c.b16 %v1727, %v1727
      %v1760 = vpack.c.b16 %v1728, %v1728
      %v1761 = vpack.c.b16 %v1729, %v1729
      %v1762 = vpack.c.b16 %v1730, %v1730
      %v1763 = vpack.c.b16 %v1731, %v1731
      %v1764 = vpack.c.b16 %v1732, %v1732
      %v1765 = vpack.c.b16 %v1733, %v1733
      %v1766 = vpack.c.b16 %v1734, %v1734
      %v1767 = vpack.c.b16 %v1735, %v1735
      %v1768 = vpack.c.b16 %v1736, %v1736
      %v1769 = vpack.c.b16 %v1737, %v1737
      %v1770 = vpack.c.b16 %v1738, %v1738
      %v1771 = vpack.c.b16 %v1739, %v1739
      %v1772 = vpack.c.b16 %v1740, %v1740
      %v1773 = vpack.c.b16 %v1741, %v1741
      %v1774 = vpack.c.b16 %v1742, %v1742
      %v1775 = vpack.c.b16 %v1743, %v1743
      %v1776 = vpack.c.b16 %v1744, %v1744
      %v1777 = vpack.c.b16 %v1745, %v1745
      %v1778 = vpack.c.b16 %v1746, %v1746
      %v1779 = vpack.c.b16 %v1747, %v1747
      %v1780 = vpack.c.b16 %v1748, %v1748
      %v1781 = vpack.c.b16 %v1749, %v1749
      %1814 = vst [vmem:[%s231] sm:$0xf] %v1750
      %1815 = vst [vmem:[%s231 + $0x4] sm:$0xf] %v1751
      %1816 = vst [vmem:[%s231 + $0x8] sm:$0xf] %v1752
      %1817 = vst [vmem:[%s231 + $0xc] sm:$0xf] %v1753
      %1818 = vst [vmem:[%s231 + $0x10] sm:$0xf] %v1754
      %1819 = vst [vmem:[%s231 + $0x14] sm:$0xf] %v1755
      %1820 = vst [vmem:[%s231 + $0x18] sm:$0xf] %v1756
      %1821 = vst [vmem:[%s231 + $0x1c] sm:$0xf] %v1757
      %1822 = vst [vmem:[%s231 + $0x20] sm:$0xf] %v1758
      %1823 = vst [vmem:[%s231 + $0x24] sm:$0xf] %v1759
      %1824 = vst [vmem:[%s231 + $0x28] sm:$0xf] %v1760
      %1825 = vst [vmem:[%s231 + $0x2c] sm:$0xf] %v1761
      %1826 = vst [vmem:[%s231 + $0x30] sm:$0xf] %v1762
      %1827 = vst [vmem:[%s231 + $0x34] sm:$0xf] %v1763
      %1828 = vst [vmem:[%s231 + $0x38] sm:$0xf] %v1764
      %1829 = vst [vmem:[%s231 + $0x3c] sm:$0xf] %v1765
      %1830 = vst [vmem:[%s231 + $0x40] sm:$0xf] %v1766
      %1831 = vst [vmem:[%s231 + $0x44] sm:$0xf] %v1767
      %1832 = vst [vmem:[%s231 + $0x48] sm:$0xf] %v1768
      %1833 = vst [vmem:[%s231 + $0x4c] sm:$0xf] %v1769
      %1834 = vst [vmem:[%s231 + $0x50] sm:$0xf] %v1770
      %1835 = vst [vmem:[%s231 + $0x54] sm:$0xf] %v1771
      %1836 = vst [vmem:[%s231 + $0x58] sm:$0xf] %v1772
      %1837 = vst [vmem:[%s231 + $0x5c] sm:$0xf] %v1773
      %1838 = vst [vmem:[%s231 + $0x60] sm:$0xf] %v1774
      %1839 = vst [vmem:[%s231 + $0x64] sm:$0xf] %v1775
      %1840 = vst [vmem:[%s231 + $0x68] sm:$0xf] %v1776
      %1841 = vst [vmem:[%s231 + $0x6c] sm:$0xf] %v1777
      %1842 = vst [vmem:[%s231 + $0x70] sm:$0xf] %v1778
      %1843 = vst [vmem:[%s231 + $0x74] sm:$0xf] %v1779
      %1844 = vst [vmem:[%s231 + $0x78] sm:$0xf] %v1780
      %1845 = vst [vmem:[%s231 + $0x7c] sm:$0xf] %v1781
      %v1846 = vadd.f32 %v1560, %v1563
      %v1847 = vadd.f32 %v1846, %v1568
      %v1848 = vadd.f32 %v1847, %v1571
      %v1849 = vadd.f32 %v1848, %v1576
      %v1850 = vadd.f32 %v1849, %v1579
      %v1851 = vadd.f32 %v1850, %v1584
      %v1852 = vadd.f32 %v1851, %v1587
      %v1853 = vadd.f32 %v1852, %v1592
      %v1854 = vadd.f32 %v1853, %v1595
      %v1855 = vadd.f32 %v1854, %v1600
      %v1856 = vadd.f32 %v1855, %v1603
      %v1857 = vadd.f32 %v1856, %v1608
      %v1858 = vadd.f32 %v1857, %v1611
      %v1859 = vadd.f32 %v1858, %v1616
      %v1860 = vadd.f32 %v1859, %v1619
      %v1861 = vadd.f32 %v1860, %v1624
      %v1862 = vadd.f32 %v1861, %v1627
      %v1863 = vadd.f32 %v1862, %v1632
      %v1864 = vadd.f32 %v1863, %v1635
      %v1865 = vadd.f32 %v1864, %v1640
      %v1866 = vadd.f32 %v1865, %v1643
      %v1867 = vadd.f32 %v1866, %v1648
      %v1868 = vadd.f32 %v1867, %v1651
      %v1869 = vadd.f32 %v1868, %v1656
      %v1870 = vadd.f32 %v1869, %v1659
      %v1871 = vadd.f32 %v1870, %v1664
      %v1872 = vadd.f32 %v1871, %v1667
      %v1873 = vadd.f32 %v1872, %v1672
      %v1874 = vadd.f32 %v1873, %v1675
      %v1875 = vadd.f32 %v1874, %v1680
      %v1876 = vadd.f32 %v1875, %v1683
      %v1877 = vrot.slane %v1876, 4
      %v1878 = vadd.f32 %v1876, %v1877
      %v1879 = vrot.slane %v1878, 2
      %v1880 = vadd.f32 %v1878, %v1879
      %v1881 = vrot.slane %v1880, 1
      %v1882 = vadd.f32 %v1880, %v1881
      %v1883 = vmul.f32 %v1560, %v1560
      %v1884 = vmul.f32 %v1563, %v1563
      %v1885 = vmul.f32 %v1568, %v1568
      %v1886 = vmul.f32 %v1571, %v1571
      %v1887 = vmul.f32 %v1576, %v1576
      %v1888 = vmul.f32 %v1579, %v1579
      %v1889 = vmul.f32 %v1584, %v1584
      %v1890 = vmul.f32 %v1587, %v1587
      %v1891 = vmul.f32 %v1592, %v1592
      %v1892 = vmul.f32 %v1595, %v1595
      %v1893 = vmul.f32 %v1600, %v1600
      %v1894 = vmul.f32 %v1603, %v1603
      %v1895 = vmul.f32 %v1608, %v1608
      %v1896 = vmul.f32 %v1611, %v1611
      %v1897 = vmul.f32 %v1616, %v1616
      %v1898 = vmul.f32 %v1619, %v1619
      %v1899 = vmul.f32 %v1624, %v1624
      %v1900 = vmul.f32 %v1627, %v1627
      %v1901 = vmul.f32 %v1632, %v1632
      %v1902 = vmul.f32 %v1635, %v1635
      %v1903 = vmul.f32 %v1640, %v1640
      %v1904 = vmul.f32 %v1643, %v1643
      %v1905 = vmul.f32 %v1648, %v1648
      %v1906 = vmul.f32 %v1651, %v1651
      %v1907 = vmul.f32 %v1656, %v1656
      %v1908 = vmul.f32 %v1659, %v1659
      %v1909 = vmul.f32 %v1664, %v1664
      %v1910 = vmul.f32 %v1667, %v1667
      %v1911 = vmul.f32 %v1672, %v1672
      %v1912 = vmul.f32 %v1675, %v1675
      %v1913 = vmul.f32 %v1680, %v1680
      %v1914 = vmul.f32 %v1683, %v1683
      %v1915 = vadd.f32 %v1883, %v1884
      %v1916 = vadd.f32 %v1915, %v1885
      %v1917 = vadd.f32 %v1916, %v1886
      %v1918 = vadd.f32 %v1917, %v1887
      %v1919 = vadd.f32 %v1918, %v1888
      %v1920 = vadd.f32 %v1919, %v1889
      %v1921 = vadd.f32 %v1920, %v1890
      %v1922 = vadd.f32 %v1921, %v1891
      %v1923 = vadd.f32 %v1922, %v1892
      %v1924 = vadd.f32 %v1923, %v1893
      %v1925 = vadd.f32 %v1924, %v1894
      %v1926 = vadd.f32 %v1925, %v1895
      %v1927 = vadd.f32 %v1926, %v1896
      %v1928 = vadd.f32 %v1927, %v1897
      %v1929 = vadd.f32 %v1928, %v1898
      %v1930 = vadd.f32 %v1929, %v1899
      %v1931 = vadd.f32 %v1930, %v1900
      %v1932 = vadd.f32 %v1931, %v1901
      %v1933 = vadd.f32 %v1932, %v1902
      %v1934 = vadd.f32 %v1933, %v1903
      %v1935 = vadd.f32 %v1934, %v1904
      %v1936 = vadd.f32 %v1935, %v1905
      %v1937 = vadd.f32 %v1936, %v1906
      %v1938 = vadd.f32 %v1937, %v1907
      %v1939 = vadd.f32 %v1938, %v1908
      %v1940 = vadd.f32 %v1939, %v1909
      %v1941 = vadd.f32 %v1940, %v1910
      %v1942 = vadd.f32 %v1941, %v1911
      %v1943 = vadd.f32 %v1942, %v1912
      %v1944 = vadd.f32 %v1943, %v1913
      %v1945 = vadd.f32 %v1944, %v1914
      %v1946 = vrot.slane %v1945, 4
      %v1947 = vadd.f32 %v1945, %v1946
      %v1948 = vrot.slane %v1947, 2
      %v1949 = vadd.f32 %v1947, %v1948
      %v1950 = vrot.slane %v1949, 1
      %v1951 = vadd.f32 %v1949, %v1950
      %vm1952 = vcmask 1040384
      %v1953 = vsel %vm1952, %v1882, %v1951
      %vm1954 = vcmask 1041408
      %v1955 = vsel %vm1954, %v1953, 0.0
      %1956 = vst [vmem:[%s235] sm:$0xff] %v1955
      %p1957 = scmp.lt.s32.totalorder %s17, 1
      %s1958 = scalar_select %p1957, %s17, 1
      %s1959 = smul.addr %s1958, 32
      %s1960 = smul.addr %s1959, 4
      %s1961 = scalar_lea.vmem %s4, %s1960
      %p1962 = scmp.lt.s32.totalorder %s17, 1
      %s1963 = scalar_select %p1962, %s17, 1
      %s1964 = smul.addr %s1963, 8
      %s1965 = scalar_lea.vmem %s5, %s1964
      // Predicated region
      $region37: #{double_conv.3} parent=35 // pred_check
        %p1966 = pneg %p124
      $region38: #{double_conv.3} parent=35 // pred_check_branch
        %1968 = sbr.rel (%p1966) target = $region40
      $region39: #{double_conv.3} parent=35 // pred_region
        _
      $region40: #{double_conv.3} parent=35 // pred_fallthru
        _
      // Predicated region
      $region41: #{double_conv.3} parent=35 // pred_check
        %p1969 = pneg %p150
      $region42: #{double_conv.3} parent=35 // pred_check_branch
        %1971 = sbr.rel (%p1969) target = $region44
      $region43: #{double_conv.3} parent=35 // pred_region
        _
      $region44: #{double_conv.3} parent=35 // pred_fallthru
        _
    $region36: #{double_conv.3} parent=5 // pred_fallthru
      _
    %p1972 = scmp.le.s32.totalorder 2, %s12
    // Predicated region
    $region45: #{double_conv.3} parent=5 // pred_check
      %p1973 = pneg %p1972
    $region46: #{double_conv.3} parent=5 // pred_check_branch
      %1975 = sbr.rel (%p1973) target = $region48
    $region47: #{double_conv.3} parent=5 // pred_region
      %s1976 = ssub.s32 %s12, 2
      // Predicated region
      $region49: #{double_conv.3} parent=47 // pred_check
        %p1977 = pneg %p130
      $region50: #{double_conv.3} parent=47 // pred_check_branch
        %1979 = sbr.rel (%p1977) target = $region52
      $region51: #{double_conv.3} parent=47 // pred_region
        %p1980 = scmp.lt.s32.totalorder %s18, 1
        %s1981 = scalar_select %p1980, %s18, 1
        %s1982 = smul.addr %s1981, 32
        %s1983 = smul.addr %s1982, 4
        %s1984 = scalar_lea.vmem %s4, %s1983
      $region52: #{double_conv.3} parent=47 // pred_fallthru
        _
      // Predicated region
      $region53: #{double_conv.3} parent=47 // pred_check
        %p1985 = pneg %p156
      $region54: #{double_conv.3} parent=47 // pred_check_branch
        %1987 = sbr.rel (%p1985) target = $region56
      $region55: #{double_conv.3} parent=47 // pred_region
        %p1988 = scmp.lt.s32.totalorder %s18, 1
        %s1989 = scalar_select %p1988, %s18, 1
        %s1990 = smul.addr %s1989, 8
        %s1991 = scalar_lea.vmem %s5, %s1990
      $region56: #{double_conv.3} parent=47 // pred_fallthru
        _
    $region48: #{double_conv.3} parent=5 // pred_fallthru
      _
  $region6: #{double_conv.3} parent=0 // loop_footer
    %s16 = sadd.s32 1, %s12
  $region7: #{double_conv.3} parent=0 // loop_footer_branch
    %11 = sbr.rel target = $region3
  $region8: #{double_conv.3} parent=0 // loop_exit
    _

</llo_original>
